<compile_context>
chip_gen: v7x
topology: tpu7x:2x2x1
jax: 0.10.0
libtpu: 0.0.40
codegen_flags: <defaults>
</compile_context>

<pallas_src>
import functools

import numpy as np
import jax
import jax.numpy as jnp
from jax.experimental import pallas as pl
from jax.experimental.pallas import tpu as pltpu


# ----------------------------- Pallas kernel --------------------------------

def _pointer_decoder_kernel(
    # VMEM-resident constants (single copy, not pipelined)
    enc_states_ref,   # [n_enc, B, Kc, D2]  compute dtype
    enc_proj_ref,     # [n_enc, B, Kc, D2]  compute dtype  (= Wh(enc_states))
    neg_mask_ref,     # [n_enc, B, Kc]      f32 (0 / -1e30 additive mask)
    article_ref,      # [n_enc, B, Kc]      i32 (-1 on padding)
    # time-tiled inputs (pipelined over grid axis 0)
    hidden_ref,       # [1, B, Tt, H]  f32
    embed_ref,        # [1, B, Tt, E]  f32
    target_ref,       # [1, B, Tt]     i32
    dmask_ref,        # [1, B, Tt]     f32
    # small VMEM-resident weights
    Ws_w_ref, Ws_b_ref, v_w_ref, v_b_ref,
    wh_w_ref, ws_w_ref, wx_w_ref, sw_base_ref,
    # vocab-tiled generator weights (pipelined over grid axis 1)
    Vh_w_ref,         # [H, Vc]   compute dtype
    Vc_w_ref,         # [D2, Vc]  compute dtype
    Vb_ref,           # [1, Vc]   f32 (-1e30 on padded columns)
    # output
    loss_ref,         # [1, 1, B] f32
    # scratch (persists across the vocab axis)
    ctx_sc, pgen_sc, pcopy_sc, m_sc, s_sc, tl_sc,
    *, nprons, unk_id, vocab_size):
  j = pl.program_id(1)
  num_vocab_tiles = pl.num_programs(1)

  n_enc_chunks = enc_states_ref.shape[0]
  _, B, Tt, H = hidden_ref.shape
  D2 = enc_states_ref.shape[3]
  E = embed_ref.shape[3]
  Vc = Vb_ref.shape[1]
  M = B * Tt
  cdt = enc_states_ref.dtype

  h_flat = hidden_ref[0].reshape(M, H)          # [M, H] f32 (Tt % 8 == 0 -> free)
  tgt = target_ref[0]                           # [B, Tt] i32

  # ---- phase 1 (first vocab tile only): flash-blocked attention + switch ----
  @pl.when(j == 0)
  def _attention_and_switch():
    x_flat = embed_ref[0].reshape(M, E)
    dec_proj = (jnp.dot(h_flat, Ws_w_ref[...],
                        preferred_element_type=jnp.float32)
                + Ws_b_ref[...]).reshape(B, Tt, D2).astype(cdt)

    def enc_chunk_step(c, carry):
      m_att, s_att, ctx_acc, copy_acc = carry
      encp = enc_proj_ref[c]                    # [B, Kc, D2] cdt
      encs = enc_states_ref[c]                  # [B, Kc, D2] cdt
      nm = neg_mask_ref[c]                      # [B, Kc] f32
      art = article_ref[c]                      # [B, Kc] i32
      # e[b,t,k] = v . tanh(Wh(enc)[b,k] + Ws(h)[b,t]) + v_b   (-1e30 on pads)
      # (tanh/add run in compute dtype; the v-dot accumulates in f32.)
      act = jnp.tanh(encp[:, None, :, :] + dec_proj[:, :, None, :])
      e = jnp.sum(act * v_w_ref[...], axis=-1) + v_b_ref[...] + nm[:, None, :]
      m_new = jnp.maximum(m_att, jnp.max(e, axis=-1))
      alpha = jnp.exp(m_att - m_new)
      p = jnp.exp(e - m_new[:, :, None])                       # unnormalized attn
      s_new = alpha * s_att + jnp.sum(p, axis=-1)
      ctx_new = alpha[:, :, None] * ctx_acc + jnp.einsum(
          'btk,bkd->btd', p.astype(cdt), encs,
          preferred_element_type=jnp.float32)
      copy_new = alpha * copy_acc + jnp.sum(
          jnp.where(art[:, None, :] == tgt[:, :, None], p, 0.0), axis=-1)
      return m_new, s_new, ctx_new, copy_new

    init = (jnp.full((B, Tt), -1e30, jnp.float32),
            jnp.zeros((B, Tt), jnp.float32),
            jnp.zeros((B, Tt, D2), jnp.float32),
            jnp.zeros((B, Tt), jnp.float32))
    _, s_att, ctx_acc, copy_acc = jax.lax.fori_loop(
        0, n_enc_chunks, enc_chunk_step, init)

    inv_s = 1.0 / s_att                          # exact: feeds the loss
    context = ctx_acc * inv_s[:, :, None]        # [B, Tt, D2] f32
    ctx_sc[...] = context
    copy_sum = copy_acc * inv_s                  # sum of attn where article == tgt

    # switch: softmax(w_h(ctx) + w_s(h) + w_x(x) + w_c(enc_h_n) + b), 3 classes
    ctx_flat = context.reshape(M, D2)
    sw = (jnp.dot(ctx_flat, wh_w_ref[...], preferred_element_type=jnp.float32)
          + jnp.dot(h_flat, ws_w_ref[...], preferred_element_type=jnp.float32)
          + jnp.dot(x_flat, wx_w_ref[...], preferred_element_type=jnp.float32)
          ).reshape(B, Tt, 3) + sw_base_ref[...][:, None, :]
    sw = sw - jnp.max(sw, axis=-1, keepdims=True)
    sw_exp = jnp.exp(sw)
    p_sw = sw_exp / jnp.sum(sw_exp, axis=-1, keepdims=True)
    pgen_sc[...] = jnp.where(tgt < (vocab_size - nprons),
                             p_sw[:, :, 0], p_sw[:, :, 1])
    pcopy_sc[...] = p_sw[:, :, 2] * copy_sum

    # init running log-sum-exp accumulators for the generator softmax
    m_sc[...] = jnp.full((B, Tt), -1e30, jnp.float32)
    s_sc[...] = jnp.zeros((B, Tt), jnp.float32)
    tl_sc[...] = jnp.full((B, Tt), -1e30, jnp.float32)

  # ---- phase 2 (every vocab tile): one chunk of the generator softmax -------
  ctx_flat = ctx_sc[...].reshape(M, D2)
  logits = (jnp.dot(h_flat.astype(cdt), Vh_w_ref[...],
                    preferred_element_type=jnp.float32)
            + jnp.dot(ctx_flat.astype(cdt), Vc_w_ref[...],
                      preferred_element_type=jnp.float32)
            + Vb_ref[...]).reshape(B, Tt, Vc)
  col = j * Vc + jax.lax.broadcasted_iota(jnp.int32, (B, Tt, Vc), 2)
  m_old = m_sc[...]
  m_new = jnp.maximum(m_old, jnp.max(logits, axis=-1))
  s_sc[...] = (jnp.exp(m_old - m_new) * s_sc[...]
               + jnp.sum(jnp.exp(logits - m_new[:, :, None]), axis=-1))
  m_sc[...] = m_new
  tgt_hit = jnp.max(
      jnp.where((col == tgt[:, :, None]) & (col < vocab_size), logits, -1e30),
      axis=-1)
  tl_sc[...] = jnp.maximum(tl_sc[...], tgt_hit)

  # ---- phase 3 (last vocab tile): combine generator + copy mass, write loss --
  @pl.when(j == num_vocab_tiles - 1)
  def _finalize():
    dm = dmask_ref[0]
    log_z = m_sc[...] + jnp.log(s_sc[...])
    gen = pgen_sc[...] * jnp.exp(tl_sc[...] - log_z)   # p_gen(tgt) * p_vocab(tgt)
    out = gen + pcopy_sc[...]
    out = jnp.where(tgt == unk_id, 1.0, out)
    loss_ref[...] = jnp.sum(-jnp.log(out) * dm, axis=-1).reshape(1, 1, B)


# ------------------------------ JAX glue -------------------------------------

def _round_up(x, m):
  return (x + m - 1) // m * m


def _lstm(x, h0, c0, W_ih, W_hh, b_ih, b_hh):
  """PyTorch-semantics single-layer LSTM (batch_first). Returns [T, B, H]."""
  x_proj = jnp.einsum('bte,ge->btg', x, W_ih) + b_ih               # [B, T, 4H]

  def step(carry, xp_t):
    h, c = carry
    gates = xp_t + h @ W_hh.T + b_hh
    i, f, g, o = jnp.split(gates, 4, axis=-1)
    c_new = jax.nn.sigmoid(f) * c + jax.nn.sigmoid(i) * jnp.tanh(g)
    h_new = jax.nn.sigmoid(o) * jnp.tanh(c_new)
    return (h_new, c_new), h_new

  (_, _), hs = jax.lax.scan(step, (h0, c0), jnp.swapaxes(x_proj, 0, 1))
  return hs                                                         # [T, B, H]


def _block_axis1(a, n_blocks, size, pad_value):
  """[B, T, ...] -> [n_blocks, B, size, ...]; T is padded to n_blocks*size."""
  B, T = a.shape[0], a.shape[1]
  pad = n_blocks * size - T
  if pad:
    padding = jnp.full((B, pad) + a.shape[2:], pad_value, a.dtype)
    a = jnp.concatenate([a, padding], axis=1)
  a = a.reshape(B, n_blocks, size, *a.shape[2:])
  return jnp.moveaxis(a, 1, 0)


def pointer_decoder_loss(params, enc_states, enc_final_h, enc_final_c, enc_mask,
                         article_inds, dec_input, targets, dec_lens, dec_mask,
                         *, nprons, unk_id, time_tile=None, enc_chunk=None,
                         vocab_tile=None, compute_dtype=jnp.bfloat16):
  f32 = jnp.float32
  B, T_enc, D2 = enc_states.shape
  T_dec = dec_input.shape[1]
  H = D2 // 2
  E = params['emb'].shape[1]
  V = params['V_b'].shape[1]

  # ---- tile sizes (MXU-friendly defaults, overridable) ----
  if time_tile is None:            # target M = B*Tt >= 256, Tt % 8 == 0
    time_tile = min(_round_up(T_dec, 8), max(8, _round_up(pl.cdiv(256, B), 8)))
  if enc_chunk is None:
    enc_chunk = min(_round_up(T_enc, 8), 256)
  if vocab_tile is None:
    vocab_tile = min(_round_up(V, 128), 4096)
  assert time_tile % 8 == 0 and enc_chunk % 8 == 0 and vocab_tile % 128 == 0

  num_t = pl.cdiv(T_dec, time_tile)
  n_enc = pl.cdiv(T_enc, enc_chunk)
  num_v = pl.cdiv(V, vocab_tile)
  V_pad = num_v * vocab_tile

  # --- glue: embedding lookup + LSTM recurrence ---
  embed = params['emb'][dec_input]                                  # [B, T_dec, E]
  hidden = jnp.swapaxes(
      _lstm(embed, enc_final_h, enc_final_c,
            params['lstm_Wih'], params['lstm_Whh'],
            params['lstm_bih'], params['lstm_bhh']), 0, 1)          # [B, T_dec, H]

  # --- one-time projections / fusions ---
  cdt = compute_dtype
  enc_proj = (jnp.einsum('bkd,de->bke', enc_states.astype(f32), params['Wh_w'])
              + params['Wh_b'])                                     # [B, T_enc, D2]
  neg_mask = jnp.where(enc_mask > 0.5, f32(-1e30), f32(0.0))
  sw_base = enc_final_h.astype(f32) @ params['wc_w'] + params['sw_b']   # [B, 3]

  # --- chunk encoder-side tensors along T_enc (chunk axis leading) ---
  enc_states_ch = _block_axis1(enc_states.astype(cdt), n_enc, enc_chunk, 0)
  enc_proj_ch = _block_axis1(enc_proj.astype(cdt), n_enc, enc_chunk, 0)
  neg_mask_ch = _block_axis1(neg_mask, n_enc, enc_chunk, -1e30)
  article_ch = _block_axis1(article_inds.astype(jnp.int32), n_enc, enc_chunk, -1)

  # --- pad the generator weights along V to a multiple of the vocab tile ---
  def pad_vocab(w, value):
    pad = V_pad - V
    if pad:
      w = jnp.concatenate(
          [w, jnp.full(w.shape[:-1] + (pad,), value, w.dtype)], axis=-1)
    return w
  Vh_w = pad_vocab(params['Vh_w'], 0.0).astype(cdt)                 # [H, V_pad]
  Vc_w = pad_vocab(params['Vc_w'], 0.0).astype(cdt)                 # [D2, V_pad]
  V_b = pad_vocab(params['V_b'], -1e30).astype(f32)                 # [1, V_pad]

  # --- tile per-step tensors along decoder time ---
  hidden_t = _block_axis1(hidden.astype(f32), num_t, time_tile, 0.0)
  embed_t = _block_axis1(embed.astype(f32), num_t, time_tile, 0.0)
  targets_t = _block_axis1(targets.astype(jnp.int32), num_t, time_tile, unk_id)
  dmask_t = _block_axis1(dec_mask.astype(f32), num_t, time_tile, 0.0)

  args = (enc_states_ch, enc_proj_ch, neg_mask_ch, article_ch,
          hidden_t, embed_t, targets_t, dmask_t,
          params['Ws_w'], params['Ws_b'], params['v_w'], params['v_b'],
          params['wh_w'], params['ws_w'], params['wx_w'], sw_base,
          Vh_w, Vc_w, V_b)

  # whole-array VMEM residents: single copy, no double-buffered pipeline
  vmem_const = pl.BlockSpec(memory_space=pltpu.MemorySpace.VMEM)

  def time_spec(a):
    nz = a.ndim - 1
    return pl.BlockSpec((1,) + a.shape[1:],
                        lambda i, j, nz=nz: (i,) + (0,) * nz)

  in_specs = (
      [vmem_const] * 4
      + [time_spec(a) for a in (hidden_t, embed_t, targets_t, dmask_t)]
      + [vmem_const] * 8
      + [pl.BlockSpec((H, vocab_tile), lambda i, j: (0, j)),
         pl.BlockSpec((D2, vocab_tile), lambda i, j: (0, j)),
         pl.BlockSpec((1, vocab_tile), lambda i, j: (0, j))])
  out_spec = pl.BlockSpec((1, 1, B), lambda i, j: (i, 0, 0))
  scratch_shapes = ([pltpu.VMEM((B, time_tile, D2), f32)]
                    + [pltpu.VMEM((B, time_tile), f32)] * 5)

  # --- scoped-VMEM budget: residents + double-buffered tiles + f32 temps ---
  def nbytes(a):
    return int(np.prod(a.shape)) * jnp.dtype(a.dtype).itemsize
  resident = sum(nbytes(a) for a in args[:4]) + sum(nbytes(a) for a in args[8:16])
  per_time_block = sum(nbytes(a) // num_t for a in args[4:8])
  per_vocab_block = sum(nbytes(a) // num_v for a in args[16:19])
  scratch_b = 4 * B * time_tile * (D2 + 5)
  cbytes = jnp.dtype(cdt).itemsize
  temp = (B * time_tile * enc_chunk * (D2 * (cbytes + 4) + 16)      # flash temps
          + 3 * B * time_tile * vocab_tile * 4                      # logits/exp/iota
          + 4 * B * time_tile * (3 * D2 + 16))                      # dec_proj, ctx
  est = (resident + 2 * (per_time_block + per_vocab_block)
         + scratch_b + temp + (4 << 20))
  try:
    cap = int(pltpu.get_tpu_info().vmem_capacity_bytes)
  except Exception:
    cap = 128 << 20
  vmem_limit = int(max(32 << 20, min(est, cap - (16 << 20))))

  kernel = functools.partial(_pointer_decoder_kernel, nprons=nprons,
                             unk_id=unk_id, vocab_size=V)
  loss_tiles = pl.pallas_call(
      kernel,
      out_shape=jax.ShapeDtypeStruct((num_t, 1, B), f32),
      grid=(num_t, num_v),
      in_specs=in_specs,
      out_specs=out_spec,
      scratch_shapes=scratch_shapes,
      compiler_params=pltpu.CompilerParams(
          dimension_semantics=("parallel", "arbitrary"),
          vmem_limit_bytes=vmem_limit),
  )(*args)

  return jnp.sum(loss_tiles[:, 0, :], axis=0) / dec_lens.astype(f32)


# -------------------------- pure-JAX reference --------------------------------

def reference_forward(params, enc_states, enc_h, enc_c, enc_mask, article_inds,
                      dec_input, targets, dec_lens, dec_mask,
                      *, nprons, unk_id, max_article_oov):
  B, T_enc, D2 = enc_states.shape
  T_dec = dec_input.shape[1]
  V = params['V_b'].shape[1]
  emb = params['emb'][dec_input]
  hs = _lstm(emb, enc_h, enc_c, params['lstm_Wih'], params['lstm_Whh'],
             params['lstm_bih'], params['lstm_bhh'])
  enc_proj = (enc_states.reshape(B * T_enc, D2) @ params['Wh_w']
              + params['Wh_b']).reshape(B, T_enc, D2)
  losses = []
  for t in range(T_dec):
    h_t = hs[t]
    dec_proj = h_t @ params['Ws_w'] + params['Ws_b']
    e = jnp.sum(jnp.tanh(enc_proj + dec_proj[:, None, :]) * params['v_w'][None],
                -1) + params['v_b']
    e = jnp.where(enc_mask > 0.5, -jnp.inf, e)
    attn = jax.nn.softmax(e, axis=-1)
    context = jnp.einsum('bt,btd->bd', attn, enc_states)
    logits = h_t @ params['Vh_w'] + context @ params['Vc_w'] + params['V_b']
    p_vocab = jax.nn.softmax(logits, -1)
    sw = (context @ params['wh_w'] + h_t @ params['ws_w']
          + emb[:, t] @ params['wx_w'] + enc_h @ params['wc_w'] + params['sw_b'])
    p_switch = jax.nn.softmax(sw, -1)
    p_gen = jnp.concatenate(
        [jnp.broadcast_to(p_switch[:, 0:1], (B, V - nprons)),
         jnp.broadcast_to(p_switch[:, 1:2], (B, nprons))], axis=1)
    weighted_pvocab = p_gen * p_vocab
    weighted_attn = p_switch[:, 2:3] * attn
    combined = jnp.concatenate(
        [weighted_pvocab, jnp.zeros((B, max_article_oov), jnp.float32)], 1)
    combined = combined.at[jnp.arange(B)[:, None], article_inds].add(weighted_attn)
    tgt = targets[:, t]
    out = combined[jnp.arange(B), tgt]
    out = jnp.where(tgt == unk_id, 1.0, out)
    losses.append(-jnp.log(out) * dec_mask[:, t])
  return jnp.stack(losses, 1).sum(1) / dec_lens


# --------------------------------- setup --------------------------------------

def init_params(key, input_size, hidden_size, vocab_size):
  H, E, V = hidden_size, input_size, vocab_size
  D2 = 2 * H
  keys = jax.random.split(key, 19)
  w = lambda k, s: 0.1 * jax.random.normal(k, s, jnp.float32)
  return dict(
      emb=w(keys[0], (V, E)),
      lstm_Wih=w(keys[1], (4 * H, E)), lstm_Whh=w(keys[2], (4 * H, H)),
      lstm_bih=w(keys[3], (4 * H,)), lstm_bhh=w(keys[4], (4 * H,)),
      Wh_w=w(keys[5], (D2, D2)), Wh_b=w(keys[6], (1, D2)),
      Ws_w=w(keys[7], (H, D2)), Ws_b=w(keys[8], (1, D2)),
      v_w=w(keys[9], (1, D2)), v_b=w(keys[10], (1, 1)),
      Vh_w=w(keys[11], (H, V)), Vc_w=w(keys[12], (D2, V)), V_b=w(keys[13], (1, V)),
      wh_w=w(keys[14], (D2, 3)), ws_w=w(keys[15], (H, 3)),
      wx_w=w(keys[16], (E, 3)), wc_w=w(keys[17], (H, 3)),
      sw_b=w(keys[18], (1, 3)),  # sum of w_h/w_s/w_x/w_c biases
  )


if __name__ == "__main__":
  B, T_enc, T_dec = 2, 10, 10
  H, E, VOCAB, NPRONS = 16, 8, 192, 4
  UNK_ID, MAX_OOV = 1, 4

  key = jax.random.PRNGKey(0)
  kp, kd = jax.random.split(key)
  params = init_params(kp, E, H, VOCAB)

  ks = jax.random.split(kd, 8)
  enc_states = jax.random.normal(ks[0], (B, T_enc, 2 * H), jnp.float32)
  enc_h = jax.random.normal(ks[1], (B, H), jnp.float32)
  enc_c = jax.random.normal(ks[2], (B, H), jnp.float32)
  enc_mask = jnp.zeros((B, T_enc), jnp.float32).at[0, -2:].set(1.0).at[1, -1:].set(1.0)
  article_inds = jax.random.randint(ks[3], (B, T_enc), 0, VOCAB + MAX_OOV, jnp.int32)
  article_inds = article_inds.at[1, 0].set(VOCAB + 2)   # give the OOV target copy mass
  dec_input = jax.random.randint(ks[4], (B, T_dec), 0, VOCAB, jnp.int32)
  targets = jax.random.randint(ks[5], (B, T_dec), 0, VOCAB, jnp.int32)
  targets = targets.at[0, 2].set(UNK_ID)                # exercise unk-mask path
  targets = targets.at[1, 3].set(VOCAB + 2)             # exercise pure copy (OOV) path
  dec_mask = jnp.ones((B, T_dec), jnp.float32).at[1, -2:].set(0.0)
  dec_lens = jnp.array([float(T_dec), float(T_dec - 2)], jnp.float32)

  ref = reference_forward(params, enc_states, enc_h, enc_c, enc_mask, article_inds,
                          dec_input, targets, dec_lens, dec_mask,
                          nprons=NPRONS, unk_id=UNK_ID, max_article_oov=MAX_OOV)

  # small tiles chosen so the test exercises time padding (2 time tiles),
  # multiple encoder chunks (T_enc 10 -> 2 chunks of 8) and multiple vocab
  # chunks (V 192 -> 2 chunks of 128, with padded columns in the last chunk).
  for cdt, tol in ((jnp.float32, 2e-2), (jnp.bfloat16, 6e-2)):
    loss = pointer_decoder_loss(params, enc_states, enc_h, enc_c, enc_mask,
                                article_inds, dec_input, targets, dec_lens, dec_mask,
                                nprons=NPRONS, unk_id=UNK_ID,
                                time_tile=8, enc_chunk=8, vocab_tile=128,
                                compute_dtype=cdt)
    loss = jax.block_until_ready(loss)
    assert np.allclose(np.asarray(loss), np.asarray(ref), rtol=tol, atol=tol), \
        (cdt, loss, ref)

  print("KERNEL_OK")
</pallas_src>

<mosaic_0001>
module attributes {stable_mosaic.version = 11 : i64} {
  func.func @_pointer_decoder_kernel(%arg0: i32, %arg1: i32, %arg2: memref<2x2x8x32xf32, #tpu.memory_space<vmem>>, %arg3: memref<2x2x8x32xf32, #tpu.memory_space<vmem>>, %arg4: memref<2x2x8xf32, #tpu.memory_space<vmem>>, %arg5: memref<2x2x8xi32, #tpu.memory_space<vmem>>, %arg6: memref<1x2x8x16xf32, #tpu.memory_space<vmem>>, %arg7: memref<1x2x8x8xf32, #tpu.memory_space<vmem>>, %arg8: memref<1x2x8xi32, #tpu.memory_space<vmem>>, %arg9: memref<1x2x8xf32, #tpu.memory_space<vmem>>, %arg10: memref<16x32xf32, #tpu.memory_space<vmem>>, %arg11: memref<1x32xf32, #tpu.memory_space<vmem>>, %arg12: memref<1x32xf32, #tpu.memory_space<vmem>>, %arg13: memref<1x1xf32, #tpu.memory_space<vmem>>, %arg14: memref<32x3xf32, #tpu.memory_space<vmem>>, %arg15: memref<16x3xf32, #tpu.memory_space<vmem>>, %arg16: memref<8x3xf32, #tpu.memory_space<vmem>>, %arg17: memref<2x3xf32, #tpu.memory_space<vmem>>, %arg18: memref<16x128xf32, #tpu.memory_space<vmem>>, %arg19: memref<32x128xf32, #tpu.memory_space<vmem>>, %arg20: memref<1x128xf32, #tpu.memory_space<vmem>>, %arg21: memref<1x1x2xf32, #tpu.memory_space<vmem>>, %arg22: memref<2x8x32xf32, #tpu.memory_space<vmem>>, %arg23: memref<2x8xf32, #tpu.memory_space<vmem>>, %arg24: memref<2x8xf32, #tpu.memory_space<vmem>>, %arg25: memref<2x8xf32, #tpu.memory_space<vmem>>, %arg26: memref<2x8xf32, #tpu.memory_space<vmem>>, %arg27: memref<2x8xf32, #tpu.memory_space<vmem>>) attributes {dimension_semantics = [#tpu.dimension_semantics<parallel>, #tpu.dimension_semantics<arbitrary>], iteration_bounds = array<i64: 2, 2>, scalar_prefetch = 0 : i64, scratch_operands = 6 : i64, tpu.core_type = #tpu.core_type<tc>, window_params = [{pipeline_mode = #tpu.pipeline_mode<synchronous>, transform_indices = @transform_0, window_bounds = array<i64: 2, 2, 8, 32>}, {pipeline_mode = #tpu.pipeline_mode<synchronous>, transform_indices = @transform_1, window_bounds = array<i64: 2, 2, 8, 32>}, {pipeline_mode = #tpu.pipeline_mode<synchronous>, transform_indices = @transform_2, window_bounds = array<i64: 2, 2, 8>}, {pipeline_mode = #tpu.pipeline_mode<synchronous>, transform_indices = @transform_3, window_bounds = array<i64: 2, 2, 8>}, {transform_indices = @transform_4, window_bounds = array<i64: 1, 2, 8, 16>}, {transform_indices = @transform_5, window_bounds = array<i64: 1, 2, 8, 8>}, {transform_indices = @transform_6, window_bounds = array<i64: 1, 2, 8>}, {transform_indices = @transform_7, window_bounds = array<i64: 1, 2, 8>}, {pipeline_mode = #tpu.pipeline_mode<synchronous>, transform_indices = @transform_8, window_bounds = array<i64: 16, 32>}, {pipeline_mode = #tpu.pipeline_mode<synchronous>, transform_indices = @transform_9, window_bounds = array<i64: 1, 32>}, {pipeline_mode = #tpu.pipeline_mode<synchronous>, transform_indices = @transform_10, window_bounds = array<i64: 1, 32>}, {pipeline_mode = #tpu.pipeline_mode<synchronous>, transform_indices = @transform_11, window_bounds = array<i64: 1, 1>}, {pipeline_mode = #tpu.pipeline_mode<synchronous>, transform_indices = @transform_12, window_bounds = array<i64: 32, 3>}, {pipeline_mode = #tpu.pipeline_mode<synchronous>, transform_indices = @transform_13, window_bounds = array<i64: 16, 3>}, {pipeline_mode = #tpu.pipeline_mode<synchronous>, transform_indices = @transform_14, window_bounds = array<i64: 8, 3>}, {pipeline_mode = #tpu.pipeline_mode<synchronous>, transform_indices = @transform_15, window_bounds = array<i64: 2, 3>}, {transform_indices = @transform_16, window_bounds = array<i64: 16, 128>}, {transform_indices = @transform_17, window_bounds = array<i64: 32, 128>}, {transform_indices = @transform_18, window_bounds = array<i64: 1, 128>}, {transform_indices = @transform_19, window_bounds = array<i64: 1, 1, 2>}]} {
    %c0 = arith.constant 0 : index
    %c0_0 = arith.constant 0 : index
    %c0_1 = arith.constant 0 : index
    %c0_2 = arith.constant 0 : index
    %0 = vector.load %arg6[%c0, %c0_0, %c0_1, %c0_2] : memref<1x2x8x16xf32, #tpu.memory_space<vmem>>, vector<1x2x8x16xf32>
    %1 = vector.shape_cast %0 : vector<1x2x8x16xf32> to vector<2x8x16xf32>
    %2 = vector.shape_cast %1 : vector<2x8x16xf32> to vector<16x16xf32>
    %c0_3 = arith.constant 0 : index
    %c0_4 = arith.constant 0 : index
    %c0_5 = arith.constant 0 : index
    %3 = vector.load %arg8[%c0_3, %c0_4, %c0_5] : memref<1x2x8xi32, #tpu.memory_space<vmem>>, vector<1x2x8xi32>
    %4 = vector.shape_cast %3 : vector<1x2x8xi32> to vector<2x8xi32>
    %c0_i32 = arith.constant 0 : i32
    %5 = arith.cmpi eq, %arg1, %c0_i32 : i32
    %6 = arith.extui %5 : i1 to i32
    %c0_i32_6 = arith.constant 0 : i32
    %7 = arith.cmpi ne, %6, %c0_i32_6 : i32
    scf.if %7 {
      %c0_34 = arith.constant 0 : index
      %c0_35 = arith.constant 0 : index
      %c0_36 = arith.constant 0 : index
      %c0_37 = arith.constant 0 : index
      %53 = vector.load %arg7[%c0_34, %c0_35, %c0_36, %c0_37] : memref<1x2x8x8xf32, #tpu.memory_space<vmem>>, vector<1x2x8x8xf32>
      %54 = vector.shape_cast %53 : vector<1x2x8x8xf32> to vector<2x8x8xf32>
      %55 = vector.shape_cast %54 : vector<2x8x8xf32> to vector<16x8xf32>
      %c0_38 = arith.constant 0 : index
      %c0_39 = arith.constant 0 : index
      %56 = vector.load %arg10[%c0_38, %c0_39] : memref<16x32xf32, #tpu.memory_space<vmem>>, vector<16x32xf32>
      %cst_40 = arith.constant dense<0.000000e+00> : vector<16x32xf32>
      %57 = tpu.matmul %2, %56, %cst_40 {dimension_numbers = #tpu.dot_dimension_numbers<[1], [0], [0], [1], [0, 0, 1, 1], [], []>} : vector<16x16xf32>, vector<16x32xf32>, vector<16x32xf32> -> vector<16x32xf32>
      %c0_41 = arith.constant 0 : index
      %c0_42 = arith.constant 0 : index
      %58 = vector.load %arg11[%c0_41, %c0_42] : memref<1x32xf32, #tpu.memory_space<vmem>>, vector<1x32xf32>
      %59 = vector.broadcast %58 : vector<1x32xf32> to vector<16x32xf32>
      %60 = arith.addf %57, %59 : vector<16x32xf32>
      %61 = vector.shape_cast %60 : vector<16x32xf32> to vector<2x8x32xf32>
      %cst_43 = arith.constant -1.000000e+30 : f32
      %62 = vector.broadcast %cst_43 : f32 to vector<2x8xf32>
      %cst_44 = arith.constant 0.000000e+00 : f32
      %63 = vector.broadcast %cst_44 : f32 to vector<2x8xf32>
      %cst_45 = arith.constant 0.000000e+00 : f32
      %64 = vector.broadcast %cst_45 : f32 to vector<2x8x32xf32>
      %cst_46 = arith.constant 0.000000e+00 : f32
      %65 = vector.broadcast %cst_46 : f32 to vector<2x8xf32>
      %c0_i32_47 = arith.constant 0 : i32
      %c2_i32 = arith.constant 2 : i32
      %66 = arith.addi %c0_i32_47, %c2_i32 : i32
      %c1_i32_48 = arith.constant 1 : i32
      %67:4 = scf.for %arg28 = %c0_i32_47 to %66 step %c1_i32_48 iter_args(%arg29 = %62, %arg30 = %63, %arg31 = %64, %arg32 = %65) -> (vector<2x8xf32>, vector<2x8xf32>, vector<2x8x32xf32>, vector<2x8xf32>)  : i32 {
        %116 = arith.index_cast %arg28 : i32 to index
        %c0_80 = arith.constant 0 : index
        %c0_81 = arith.constant 0 : index
        %c0_82 = arith.constant 0 : index
        %117 = vector.load %arg3[%116, %c0_80, %c0_81, %c0_82] : memref<2x2x8x32xf32, #tpu.memory_space<vmem>>, vector<1x2x8x32xf32>
        %118 = vector.shape_cast %117 : vector<1x2x8x32xf32> to vector<2x8x32xf32>
        %119 = arith.index_cast %arg28 : i32 to index
        %c0_83 = arith.constant 0 : index
        %c0_84 = arith.constant 0 : index
        %c0_85 = arith.constant 0 : index
        %120 = vector.load %arg2[%119, %c0_83, %c0_84, %c0_85] : memref<2x2x8x32xf32, #tpu.memory_space<vmem>>, vector<1x2x8x32xf32>
        %121 = vector.shape_cast %120 : vector<1x2x8x32xf32> to vector<2x8x32xf32>
        %122 = arith.index_cast %arg28 : i32 to index
        %c0_86 = arith.constant 0 : index
        %c0_87 = arith.constant 0 : index
        %123 = vector.load %arg4[%122, %c0_86, %c0_87] : memref<2x2x8xf32, #tpu.memory_space<vmem>>, vector<1x2x8xf32>
        %124 = vector.shape_cast %123 : vector<1x2x8xf32> to vector<2x8xf32>
        %125 = arith.index_cast %arg28 : i32 to index
        %c0_88 = arith.constant 0 : index
        %c0_89 = arith.constant 0 : index
        %126 = vector.load %arg5[%125, %c0_88, %c0_89] : memref<2x2x8xi32, #tpu.memory_space<vmem>>, vector<1x2x8xi32>
        %127 = vector.shape_cast %126 : vector<1x2x8xi32> to vector<2x8xi32>
        %128 = vector.shape_cast %118 : vector<2x8x32xf32> to vector<2x1x8x32xf32>
        %129 = vector.shape_cast %61 : vector<2x8x32xf32> to vector<2x8x1x32xf32>
        %130 = vector.broadcast %128 : vector<2x1x8x32xf32> to vector<2x8x8x32xf32>
        %131 = vector.broadcast %129 : vector<2x8x1x32xf32> to vector<2x8x8x32xf32>
        %132 = arith.addf %130, %131 : vector<2x8x8x32xf32>
        %133 = math.tanh %132 : vector<2x8x8x32xf32>
        %c0_90 = arith.constant 0 : index
        %c0_91 = arith.constant 0 : index
        %134 = vector.load %arg12[%c0_90, %c0_91] : memref<1x32xf32, #tpu.memory_space<vmem>>, vector<1x32xf32>
        %135 = vector.shape_cast %134 : vector<1x32xf32> to vector<1x1x1x32xf32>
        %136 = vector.broadcast %135 : vector<1x1x1x32xf32> to vector<2x8x8x32xf32>
        %137 = arith.mulf %133, %136 : vector<2x8x8x32xf32>
        %cst_92 = arith.constant dense<0.000000e+00> : vector<2x8x8xf32>
        %138 = vector.multi_reduction <add>, %137, %cst_92 [3] : vector<2x8x8x32xf32> to vector<2x8x8xf32>
        %c0_93 = arith.constant 0 : index
        %c0_94 = arith.constant 0 : index
        %139 = vector.load %arg13[%c0_93, %c0_94] : memref<1x1xf32, #tpu.memory_space<vmem>>, vector<1x1xf32>
        %140 = vector.shape_cast %139 : vector<1x1xf32> to vector<1x1x1xf32>
        %141 = vector.broadcast %140 : vector<1x1x1xf32> to vector<2x8x8xf32>
        %142 = arith.addf %138, %141 : vector<2x8x8xf32>
        %143 = vector.shape_cast %124 : vector<2x8xf32> to vector<2x1x8xf32>
        %144 = vector.broadcast %143 : vector<2x1x8xf32> to vector<2x8x8xf32>
        %145 = arith.addf %142, %144 : vector<2x8x8xf32>
        %cst_95 = arith.constant dense<0xFF800000> : vector<2x8xf32>
        %146 = vector.multi_reduction <maximumf>, %145, %cst_95 [2] : vector<2x8x8xf32> to vector<2x8xf32>
        %147 = arith.maximumf %arg29, %146 : vector<2x8xf32>
        %148 = arith.subf %arg29, %147 : vector<2x8xf32>
        %149 = math.exp %148 : vector<2x8xf32>
        %150 = vector.shape_cast %147 : vector<2x8xf32> to vector<2x8x1xf32>
        %151 = vector.broadcast %150 : vector<2x8x1xf32> to vector<2x8x8xf32>
        %152 = arith.subf %145, %151 : vector<2x8x8xf32>
        %153 = math.exp %152 : vector<2x8x8xf32>
        %154 = arith.mulf %149, %arg30 : vector<2x8xf32>
        %cst_96 = arith.constant dense<0.000000e+00> : vector<2x8xf32>
        %155 = vector.multi_reduction <add>, %153, %cst_96 [2] : vector<2x8x8xf32> to vector<2x8xf32>
        %156 = arith.addf %154, %155 : vector<2x8xf32>
        %157 = vector.shape_cast %149 : vector<2x8xf32> to vector<2x8x1xf32>
        %158 = vector.broadcast %157 : vector<2x8x1xf32> to vector<2x8x32xf32>
        %159 = arith.mulf %158, %arg31 : vector<2x8x32xf32>
        "tpu.trace_start"() <{level = 10 : i32, message = "btk,bkd->btd"}> : () -> ()
        %cst_97 = arith.constant dense<0.000000e+00> : vector<2x8x32xf32>
        %160 = tpu.matmul %153, %121, %cst_97 {dimension_numbers = #tpu.dot_dimension_numbers<[2], [1], [1], [2], [0, 0, 0, 1, 1, 2], [0], [0]>} : vector<2x8x8xf32>, vector<2x8x32xf32>, vector<2x8x32xf32> -> vector<2x8x32xf32>
        "tpu.trace_stop"() : () -> ()
        %161 = arith.addf %159, %160 : vector<2x8x32xf32>
        %162 = arith.mulf %149, %arg32 : vector<2x8xf32>
        %163 = vector.shape_cast %127 : vector<2x8xi32> to vector<2x1x8xi32>
        %164 = vector.shape_cast %4 : vector<2x8xi32> to vector<2x8x1xi32>
        %165 = vector.broadcast %163 : vector<2x1x8xi32> to vector<2x8x8xi32>
        %166 = vector.broadcast %164 : vector<2x8x1xi32> to vector<2x8x8xi32>
        %167 = arith.cmpi eq, %165, %166 : vector<2x8x8xi32>
        %cst_98 = arith.constant 0.000000e+00 : f32
        %168 = vector.broadcast %cst_98 : f32 to vector<2x8x8xf32>
        %169 = arith.select %167, %153, %168 : vector<2x8x8xi1>, vector<2x8x8xf32>
        %cst_99 = arith.constant dense<0.000000e+00> : vector<2x8xf32>
        %170 = vector.multi_reduction <add>, %169, %cst_99 [2] : vector<2x8x8xf32> to vector<2x8xf32>
        %171 = arith.addf %162, %170 : vector<2x8xf32>
        scf.yield %147, %156, %161, %171 : vector<2x8xf32>, vector<2x8xf32>, vector<2x8x32xf32>, vector<2x8xf32>
      }
      %c2_i32_49 = arith.constant 2 : i32
      %cst_50 = arith.constant 1.000000e+00 : f32
      %68 = vector.broadcast %cst_50 : f32 to vector<2x8xf32>
      %69 = arith.divf %68, %67#1 : vector<2x8xf32>
      %70 = vector.shape_cast %69 : vector<2x8xf32> to vector<2x8x1xf32>
      %71 = vector.broadcast %70 : vector<2x8x1xf32> to vector<2x8x32xf32>
      %72 = arith.mulf %67#2, %71 : vector<2x8x32xf32>
      %c0_51 = arith.constant 0 : index
      %c0_52 = arith.constant 0 : index
      %c0_53 = arith.constant 0 : index
      %73 = vector.load %arg22[%c0_51, %c0_52, %c0_53] : memref<2x8x32xf32, #tpu.memory_space<vmem>>, vector<2x8x32xf32>
      tpu.vector_store %arg22[%c0_51, %c0_52, %c0_53], %72 {strides = array<i32>} : memref<2x8x32xf32, #tpu.memory_space<vmem>>, vector<2x8x32xf32>,
      %74 = arith.mulf %67#3, %69 : vector<2x8xf32>
      %75 = vector.shape_cast %72 : vector<2x8x32xf32> to vector<16x32xf32>
      %c0_54 = arith.constant 0 : index
      %c0_55 = arith.constant 0 : index
      %76 = vector.load %arg14[%c0_54, %c0_55] : memref<32x3xf32, #tpu.memory_space<vmem>>, vector<32x3xf32>
      %cst_56 = arith.constant dense<0.000000e+00> : vector<16x3xf32>
      %77 = tpu.matmul %75, %76, %cst_56 {dimension_numbers = #tpu.dot_dimension_numbers<[1], [0], [0], [1], [0, 0, 1, 1], [], []>} : vector<16x32xf32>, vector<32x3xf32>, vector<16x3xf32> -> vector<16x3xf32>
      %c0_57 = arith.constant 0 : index
      %c0_58 = arith.constant 0 : index
      %78 = vector.load %arg15[%c0_57, %c0_58] : memref<16x3xf32, #tpu.memory_space<vmem>>, vector<16x3xf32>
      %cst_59 = arith.constant dense<0.000000e+00> : vector<16x3xf32>
      %79 = tpu.matmul %2, %78, %cst_59 {dimension_numbers = #tpu.dot_dimension_numbers<[1], [0], [0], [1], [0, 0, 1, 1], [], []>} : vector<16x16xf32>, vector<16x3xf32>, vector<16x3xf32> -> vector<16x3xf32>
      %80 = arith.addf %77, %79 : vector<16x3xf32>
      %c0_60 = arith.constant 0 : index
      %c0_61 = arith.constant 0 : index
      %81 = vector.load %arg16[%c0_60, %c0_61] : memref<8x3xf32, #tpu.memory_space<vmem>>, vector<8x3xf32>
      %cst_62 = arith.constant dense<0.000000e+00> : vector<16x3xf32>
      %82 = tpu.matmul %55, %81, %cst_62 {dimension_numbers = #tpu.dot_dimension_numbers<[1], [0], [0], [1], [0, 0, 1, 1], [], []>} : vector<16x8xf32>, vector<8x3xf32>, vector<16x3xf32> -> vector<16x3xf32>
      %83 = arith.addf %80, %82 : vector<16x3xf32>
      %84 = vector.shape_cast %83 : vector<16x3xf32> to vector<2x8x3xf32>
      %c0_63 = arith.constant 0 : index
      %c0_64 = arith.constant 0 : index
      %85 = vector.load %arg17[%c0_63, %c0_64] : memref<2x3xf32, #tpu.memory_space<vmem>>, vector<2x3xf32>
      %86 = vector.shape_cast %85 : vector<2x3xf32> to vector<2x1x3xf32>
      %87 = vector.broadcast %86 : vector<2x1x3xf32> to vector<2x8x3xf32>
      %88 = arith.addf %84, %87 : vector<2x8x3xf32>
      %cst_65 = arith.constant dense<0xFF800000> : vector<2x8xf32>
      %89 = vector.multi_reduction <maximumf>, %88, %cst_65 [2] : vector<2x8x3xf32> to vector<2x8xf32>
      %90 = vector.shape_cast %89 : vector<2x8xf32> to vector<2x8x1xf32>
      %91 = vector.broadcast %90 : vector<2x8x1xf32> to vector<2x8x3xf32>
      %92 = arith.subf %88, %91 : vector<2x8x3xf32>
      %93 = math.exp %92 : vector<2x8x3xf32>
      %cst_66 = arith.constant dense<0.000000e+00> : vector<2x8xf32>
      %94 = vector.multi_reduction <add>, %93, %cst_66 [2] : vector<2x8x3xf32> to vector<2x8xf32>
      %95 = vector.shape_cast %94 : vector<2x8xf32> to vector<2x8x1xf32>
      %96 = vector.broadcast %95 : vector<2x8x1xf32> to vector<2x8x3xf32>
      %97 = arith.divf %93, %96 : vector<2x8x3xf32>
      %c188_i32 = arith.constant 188 : i32
      %98 = vector.broadcast %c188_i32 : i32 to vector<2x8xi32>
      %99 = arith.cmpi slt, %4, %98 : vector<2x8xi32>
      %100 = vector.extract_strided_slice %97 {offsets = [0, 0, 0], sizes = [2, 8, 1], strides = [1, 1, 1]} : vector<2x8x3xf32> to vector<2x8x1xf32>
      %101 = vector.shape_cast %100 : vector<2x8x1xf32> to vector<2x8xf32>
      %102 = vector.extract_strided_slice %97 {offsets = [0, 0, 1], sizes = [2, 8, 1], strides = [1, 1, 1]} : vector<2x8x3xf32> to vector<2x8x1xf32>
      %103 = vector.shape_cast %102 : vector<2x8x1xf32> to vector<2x8xf32>
      %104 = arith.select %99, %101, %103 : vector<2x8xi1>, vector<2x8xf32>
      %c0_67 = arith.constant 0 : index
      %c0_68 = arith.constant 0 : index
      %105 = vector.load %arg23[%c0_67, %c0_68] : memref<2x8xf32, #tpu.memory_space<vmem>>, vector<2x8xf32>
      tpu.vector_store %arg23[%c0_67, %c0_68], %104 {strides = array<i32>} : memref<2x8xf32, #tpu.memory_space<vmem>>, vector<2x8xf32>,
      %106 = vector.extract_strided_slice %97 {offsets = [0, 0, 2], sizes = [2, 8, 1], strides = [1, 1, 1]} : vector<2x8x3xf32> to vector<2x8x1xf32>
      %107 = vector.shape_cast %106 : vector<2x8x1xf32> to vector<2x8xf32>
      %108 = arith.mulf %107, %74 : vector<2x8xf32>
      %c0_69 = arith.constant 0 : index
      %c0_70 = arith.constant 0 : index
      %109 = vector.load %arg24[%c0_69, %c0_70] : memref<2x8xf32, #tpu.memory_space<vmem>>, vector<2x8xf32>
      tpu.vector_store %arg24[%c0_69, %c0_70], %108 {strides = array<i32>} : memref<2x8xf32, #tpu.memory_space<vmem>>, vector<2x8xf32>,
      %cst_71 = arith.constant -1.000000e+30 : f32
      %110 = vector.broadcast %cst_71 : f32 to vector<2x8xf32>
      %c0_72 = arith.constant 0 : index
      %c0_73 = arith.constant 0 : index
      %111 = vector.load %arg25[%c0_72, %c0_73] : memref<2x8xf32, #tpu.memory_space<vmem>>, vector<2x8xf32>
      tpu.vector_store %arg25[%c0_72, %c0_73], %110 {strides = array<i32>} : memref<2x8xf32, #tpu.memory_space<vmem>>, vector<2x8xf32>,
      %cst_74 = arith.constant 0.000000e+00 : f32
      %112 = vector.broadcast %cst_74 : f32 to vector<2x8xf32>
      %c0_75 = arith.constant 0 : index
      %c0_76 = arith.constant 0 : index
      %113 = vector.load %arg26[%c0_75, %c0_76] : memref<2x8xf32, #tpu.memory_space<vmem>>, vector<2x8xf32>
      tpu.vector_store %arg26[%c0_75, %c0_76], %112 {strides = array<i32>} : memref<2x8xf32, #tpu.memory_space<vmem>>, vector<2x8xf32>,
      %cst_77 = arith.constant -1.000000e+30 : f32
      %114 = vector.broadcast %cst_77 : f32 to vector<2x8xf32>
      %c0_78 = arith.constant 0 : index
      %c0_79 = arith.constant 0 : index
      %115 = vector.load %arg27[%c0_78, %c0_79] : memref<2x8xf32, #tpu.memory_space<vmem>>, vector<2x8xf32>
      tpu.vector_store %arg27[%c0_78, %c0_79], %114 {strides = array<i32>} : memref<2x8xf32, #tpu.memory_space<vmem>>, vector<2x8xf32>,
    } else {
    }
    %c0_7 = arith.constant 0 : index
    %c0_8 = arith.constant 0 : index
    %c0_9 = arith.constant 0 : index
    %8 = vector.load %arg22[%c0_7, %c0_8, %c0_9] : memref<2x8x32xf32, #tpu.memory_space<vmem>>, vector<2x8x32xf32>
    %9 = vector.shape_cast %8 : vector<2x8x32xf32> to vector<16x32xf32>
    %c0_10 = arith.constant 0 : index
    %c0_11 = arith.constant 0 : index
    %10 = vector.load %arg18[%c0_10, %c0_11] : memref<16x128xf32, #tpu.memory_space<vmem>>, vector<16x128xf32>
    %cst = arith.constant dense<0.000000e+00> : vector<16x128xf32>
    %11 = tpu.matmul %2, %10, %cst {dimension_numbers = #tpu.dot_dimension_numbers<[1], [0], [0], [1], [0, 0, 1, 1], [], []>} : vector<16x16xf32>, vector<16x128xf32>, vector<16x128xf32> -> vector<16x128xf32>
    %c0_12 = arith.constant 0 : index
    %c0_13 = arith.constant 0 : index
    %12 = vector.load %arg19[%c0_12, %c0_13] : memref<32x128xf32, #tpu.memory_space<vmem>>, vector<32x128xf32>
    %cst_14 = arith.constant dense<0.000000e+00> : vector<16x128xf32>
    %13 = tpu.matmul %9, %12, %cst_14 {dimension_numbers = #tpu.dot_dimension_numbers<[1], [0], [0], [1], [0, 0, 1, 1], [], []>} : vector<16x32xf32>, vector<32x128xf32>, vector<16x128xf32> -> vector<16x128xf32>
    %14 = arith.addf %11, %13 : vector<16x128xf32>
    %c0_15 = arith.constant 0 : index
    %c0_16 = arith.constant 0 : index
    %15 = vector.load %arg20[%c0_15, %c0_16] : memref<1x128xf32, #tpu.memory_space<vmem>>, vector<1x128xf32>
    %16 = vector.broadcast %15 : vector<1x128xf32> to vector<16x128xf32>
    %17 = arith.addf %14, %16 : vector<16x128xf32>
    %18 = vector.shape_cast %17 : vector<16x128xf32> to vector<2x8x128xf32>
    %c128_i32 = arith.constant 128 : i32
    %19 = arith.muli %arg1, %c128_i32 : i32
    %20 = tpu.iota {dimensions = array<i32: 2>} : vector<2x8x128xi32>
    %21 = vector.broadcast %19 : i32 to vector<2x8x128xi32>
    %22 = arith.addi %21, %20 : vector<2x8x128xi32>
    %c0_17 = arith.constant 0 : index
    %c0_18 = arith.constant 0 : index
    %23 = vector.load %arg25[%c0_17, %c0_18] : memref<2x8xf32, #tpu.memory_space<vmem>>, vector<2x8xf32>
    %cst_19 = arith.constant dense<0xFF800000> : vector<2x8xf32>
    %24 = vector.multi_reduction <maximumf>, %18, %cst_19 [2] : vector<2x8x128xf32> to vector<2x8xf32>
    %25 = arith.maximumf %23, %24 : vector<2x8xf32>
    %26 = arith.subf %23, %25 : vector<2x8xf32>
    %27 = math.exp %26 : vector<2x8xf32>
    %c0_20 = arith.constant 0 : index
    %c0_21 = arith.constant 0 : index
    %28 = vector.load %arg26[%c0_20, %c0_21] : memref<2x8xf32, #tpu.memory_space<vmem>>, vector<2x8xf32>
    %29 = arith.mulf %27, %28 : vector<2x8xf32>
    %30 = vector.shape_cast %25 : vector<2x8xf32> to vector<2x8x1xf32>
    %31 = vector.broadcast %30 : vector<2x8x1xf32> to vector<2x8x128xf32>
    %32 = arith.subf %18, %31 : vector<2x8x128xf32>
    %33 = math.exp %32 : vector<2x8x128xf32>
    %cst_22 = arith.constant dense<0.000000e+00> : vector<2x8xf32>
    %34 = vector.multi_reduction <add>, %33, %cst_22 [2] : vector<2x8x128xf32> to vector<2x8xf32>
    %35 = arith.addf %29, %34 : vector<2x8xf32>
    %c0_23 = arith.constant 0 : index
    %c0_24 = arith.constant 0 : index
    %36 = vector.load %arg26[%c0_23, %c0_24] : memref<2x8xf32, #tpu.memory_space<vmem>>, vector<2x8xf32>
    tpu.vector_store %arg26[%c0_23, %c0_24], %35 {strides = array<i32>} : memref<2x8xf32, #tpu.memory_space<vmem>>, vector<2x8xf32>,
    %c0_25 = arith.constant 0 : index
    %c0_26 = arith.constant 0 : index
    %37 = vector.load %arg25[%c0_25, %c0_26] : memref<2x8xf32, #tpu.memory_space<vmem>>, vector<2x8xf32>
    tpu.vector_store %arg25[%c0_25, %c0_26], %25 {strides = array<i32>} : memref<2x8xf32, #tpu.memory_space<vmem>>, vector<2x8xf32>,
    %38 = vector.shape_cast %4 : vector<2x8xi32> to vector<2x8x1xi32>
    %39 = vector.broadcast %38 : vector<2x8x1xi32> to vector<2x8x128xi32>
    %40 = arith.cmpi eq, %22, %39 : vector<2x8x128xi32>
    %c192_i32 = arith.constant 192 : i32
    %41 = vector.broadcast %c192_i32 : i32 to vector<2x8x128xi32>
    %42 = arith.cmpi slt, %22, %41 : vector<2x8x128xi32>
    %43 = arith.andi %40, %42 : vector<2x8x128xi1>
    %cst_27 = arith.constant -1.000000e+30 : f32
    %44 = vector.broadcast %cst_27 : f32 to vector<2x8x128xf32>
    %45 = arith.select %43, %18, %44 : vector<2x8x128xi1>, vector<2x8x128xf32>
    %cst_28 = arith.constant dense<0xFF800000> : vector<2x8xf32>
    %46 = vector.multi_reduction <maximumf>, %45, %cst_28 [2] : vector<2x8x128xf32> to vector<2x8xf32>
    %c0_29 = arith.constant 0 : index
    %c0_30 = arith.constant 0 : index
    %47 = vector.load %arg27[%c0_29, %c0_30] : memref<2x8xf32, #tpu.memory_space<vmem>>, vector<2x8xf32>
    %48 = arith.maximumf %47, %46 : vector<2x8xf32>
    %c0_31 = arith.constant 0 : index
    %c0_32 = arith.constant 0 : index
    %49 = vector.load %arg27[%c0_31, %c0_32] : memref<2x8xf32, #tpu.memory_space<vmem>>, vector<2x8xf32>
    tpu.vector_store %arg27[%c0_31, %c0_32], %48 {strides = array<i32>} : memref<2x8xf32, #tpu.memory_space<vmem>>, vector<2x8xf32>,
    %c1_i32 = arith.constant 1 : i32
    %50 = arith.cmpi eq, %arg1, %c1_i32 : i32
    %51 = arith.extui %50 : i1 to i32
    %c0_i32_33 = arith.constant 0 : i32
    %52 = arith.cmpi ne, %51, %c0_i32_33 : i32
    scf.if %52 {
      %c0_34 = arith.constant 0 : index
      %c0_35 = arith.constant 0 : index
      %c0_36 = arith.constant 0 : index
      %53 = vector.load %arg9[%c0_34, %c0_35, %c0_36] : memref<1x2x8xf32, #tpu.memory_space<vmem>>, vector<1x2x8xf32>
      %54 = vector.shape_cast %53 : vector<1x2x8xf32> to vector<2x8xf32>
      %c0_37 = arith.constant 0 : index
      %c0_38 = arith.constant 0 : index
      %55 = vector.load %arg25[%c0_37, %c0_38] : memref<2x8xf32, #tpu.memory_space<vmem>>, vector<2x8xf32>
      %c0_39 = arith.constant 0 : index
      %c0_40 = arith.constant 0 : index
      %56 = vector.load %arg26[%c0_39, %c0_40] : memref<2x8xf32, #tpu.memory_space<vmem>>, vector<2x8xf32>
      %57 = math.log %56 : vector<2x8xf32>
      %58 = arith.addf %55, %57 : vector<2x8xf32>
      %c0_41 = arith.constant 0 : index
      %c0_42 = arith.constant 0 : index
      %59 = vector.load %arg23[%c0_41, %c0_42] : memref<2x8xf32, #tpu.memory_space<vmem>>, vector<2x8xf32>
      %c0_43 = arith.constant 0 : index
      %c0_44 = arith.constant 0 : index
      %60 = vector.load %arg27[%c0_43, %c0_44] : memref<2x8xf32, #tpu.memory_space<vmem>>, vector<2x8xf32>
      %61 = arith.subf %60, %58 : vector<2x8xf32>
      %62 = math.exp %61 : vector<2x8xf32>
      %63 = arith.mulf %59, %62 : vector<2x8xf32>
      %c0_45 = arith.constant 0 : index
      %c0_46 = arith.constant 0 : index
      %64 = vector.load %arg24[%c0_45, %c0_46] : memref<2x8xf32, #tpu.memory_space<vmem>>, vector<2x8xf32>
      %65 = arith.addf %63, %64 : vector<2x8xf32>
      %c1_i32_47 = arith.constant 1 : i32
      %66 = vector.broadcast %c1_i32_47 : i32 to vector<2x8xi32>
      %67 = arith.cmpi eq, %4, %66 : vector<2x8xi32>
      %cst_48 = arith.constant 1.000000e+00 : f32
      %68 = vector.broadcast %cst_48 : f32 to vector<2x8xf32>
      %69 = arith.select %67, %68, %65 : vector<2x8xi1>, vector<2x8xf32>
      %70 = math.log %69 : vector<2x8xf32>
      %cst_49 = arith.constant 0.000000e+00 : f32
      %71 = vector.broadcast %cst_49 : f32 to vector<2x8xf32>
      %72 = arith.subf %71, %70 : vector<2x8xf32>
      %73 = arith.mulf %72, %54 : vector<2x8xf32>
      %cst_50 = arith.constant dense<0.000000e+00> : vector<2xf32>
      %74 = vector.multi_reduction <add>, %73, %cst_50 [1] : vector<2x8xf32> to vector<2xf32>
      %75 = vector.shape_cast %74 : vector<2xf32> to vector<1x1x2xf32>
      %c0_51 = arith.constant 0 : index
      %c0_52 = arith.constant 0 : index
      %c0_53 = arith.constant 0 : index
      %76 = vector.load %arg21[%c0_51, %c0_52, %c0_53] : memref<1x1x2xf32, #tpu.memory_space<vmem>>, vector<1x1x2xf32>
      tpu.vector_store %arg21[%c0_51, %c0_52, %c0_53], %75 {strides = array<i32>} : memref<1x1x2xf32, #tpu.memory_space<vmem>>, vector<1x1x2xf32>,
    } else {
    }
    return
  }
  func.func @transform_0(%arg0: i32, %arg1: i32) -> (i32, i32, i32, i32) {
    %c0_i32 = arith.constant 0 : i32
    %c0_i32_0 = arith.constant 0 : i32
    %c0_i32_1 = arith.constant 0 : i32
    %c0_i32_2 = arith.constant 0 : i32
    %c0_i32_3 = arith.constant 0 : i32
    return %c0_i32, %c0_i32_0, %c0_i32_1, %c0_i32_2 : i32, i32, i32, i32
  }
  func.func @transform_1(%arg0: i32, %arg1: i32) -> (i32, i32, i32, i32) {
    %c0_i32 = arith.constant 0 : i32
    %c0_i32_0 = arith.constant 0 : i32
    %c0_i32_1 = arith.constant 0 : i32
    %c0_i32_2 = arith.constant 0 : i32
    %c0_i32_3 = arith.constant 0 : i32
    return %c0_i32, %c0_i32_0, %c0_i32_1, %c0_i32_2 : i32, i32, i32, i32
  }
  func.func @transform_2(%arg0: i32, %arg1: i32) -> (i32, i32, i32) {
    %c0_i32 = arith.constant 0 : i32
    %c0_i32_0 = arith.constant 0 : i32
    %c0_i32_1 = arith.constant 0 : i32
    %c0_i32_2 = arith.constant 0 : i32
    return %c0_i32, %c0_i32_0, %c0_i32_1 : i32, i32, i32
  }
  func.func @transform_3(%arg0: i32, %arg1: i32) -> (i32, i32, i32) {
    %c0_i32 = arith.constant 0 : i32
    %c0_i32_0 = arith.constant 0 : i32
    %c0_i32_1 = arith.constant 0 : i32
    %c0_i32_2 = arith.constant 0 : i32
    return %c0_i32, %c0_i32_0, %c0_i32_1 : i32, i32, i32
  }
  func.func @transform_4(%arg0: i32, %arg1: i32) -> (i32, i32, i32, i32) {
    %c0_i32 = arith.constant 0 : i32
    %c0_i32_0 = arith.constant 0 : i32
    %c0_i32_1 = arith.constant 0 : i32
    %c0_i32_2 = arith.constant 0 : i32
    return %arg0, %c0_i32, %c0_i32_0, %c0_i32_1 : i32, i32, i32, i32
  }
  func.func @transform_5(%arg0: i32, %arg1: i32) -> (i32, i32, i32, i32) {
    %c0_i32 = arith.constant 0 : i32
    %c0_i32_0 = arith.constant 0 : i32
    %c0_i32_1 = arith.constant 0 : i32
    %c0_i32_2 = arith.constant 0 : i32
    return %arg0, %c0_i32, %c0_i32_0, %c0_i32_1 : i32, i32, i32, i32
  }
  func.func @transform_6(%arg0: i32, %arg1: i32) -> (i32, i32, i32) {
    %c0_i32 = arith.constant 0 : i32
    %c0_i32_0 = arith.constant 0 : i32
    %c0_i32_1 = arith.constant 0 : i32
    return %arg0, %c0_i32, %c0_i32_0 : i32, i32, i32
  }
  func.func @transform_7(%arg0: i32, %arg1: i32) -> (i32, i32, i32) {
    %c0_i32 = arith.constant 0 : i32
    %c0_i32_0 = arith.constant 0 : i32
    %c0_i32_1 = arith.constant 0 : i32
    return %arg0, %c0_i32, %c0_i32_0 : i32, i32, i32
  }
  func.func @transform_8(%arg0: i32, %arg1: i32) -> (i32, i32) {
    %c0_i32 = arith.constant 0 : i32
    %c0_i32_0 = arith.constant 0 : i32
    %c0_i32_1 = arith.constant 0 : i32
    return %c0_i32, %c0_i32_0 : i32, i32
  }
  func.func @transform_9(%arg0: i32, %arg1: i32) -> (i32, i32) {
    %c0_i32 = arith.constant 0 : i32
    %c0_i32_0 = arith.constant 0 : i32
    %c0_i32_1 = arith.constant 0 : i32
    return %c0_i32, %c0_i32_0 : i32, i32
  }
  func.func @transform_10(%arg0: i32, %arg1: i32) -> (i32, i32) {
    %c0_i32 = arith.constant 0 : i32
    %c0_i32_0 = arith.constant 0 : i32
    %c0_i32_1 = arith.constant 0 : i32
    return %c0_i32, %c0_i32_0 : i32, i32
  }
  func.func @transform_11(%arg0: i32, %arg1: i32) -> (i32, i32) {
    %c0_i32 = arith.constant 0 : i32
    %c0_i32_0 = arith.constant 0 : i32
    %c0_i32_1 = arith.constant 0 : i32
    return %c0_i32, %c0_i32_0 : i32, i32
  }
  func.func @transform_12(%arg0: i32, %arg1: i32) -> (i32, i32) {
    %c0_i32 = arith.constant 0 : i32
    %c0_i32_0 = arith.constant 0 : i32
    %c0_i32_1 = arith.constant 0 : i32
    return %c0_i32, %c0_i32_0 : i32, i32
  }
  func.func @transform_13(%arg0: i32, %arg1: i32) -> (i32, i32) {
    %c0_i32 = arith.constant 0 : i32
    %c0_i32_0 = arith.constant 0 : i32
    %c0_i32_1 = arith.constant 0 : i32
    return %c0_i32, %c0_i32_0 : i32, i32
  }
  func.func @transform_14(%arg0: i32, %arg1: i32) -> (i32, i32) {
    %c0_i32 = arith.constant 0 : i32
    %c0_i32_0 = arith.constant 0 : i32
    %c0_i32_1 = arith.constant 0 : i32
    return %c0_i32, %c0_i32_0 : i32, i32
  }
  func.func @transform_15(%arg0: i32, %arg1: i32) -> (i32, i32) {
    %c0_i32 = arith.constant 0 : i32
    %c0_i32_0 = arith.constant 0 : i32
    %c0_i32_1 = arith.constant 0 : i32
    return %c0_i32, %c0_i32_0 : i32, i32
  }
  func.func @transform_16(%arg0: i32, %arg1: i32) -> (i32, i32) {
    %c0_i32 = arith.constant 0 : i32
    %c0_i32_0 = arith.constant 0 : i32
    return %c0_i32, %arg1 : i32, i32
  }
  func.func @transform_17(%arg0: i32, %arg1: i32) -> (i32, i32) {
    %c0_i32 = arith.constant 0 : i32
    %c0_i32_0 = arith.constant 0 : i32
    return %c0_i32, %arg1 : i32, i32
  }
  func.func @transform_18(%arg0: i32, %arg1: i32) -> (i32, i32) {
    %c0_i32 = arith.constant 0 : i32
    %c0_i32_0 = arith.constant 0 : i32
    return %c0_i32, %arg1 : i32, i32
  }
  func.func @transform_19(%arg0: i32, %arg1: i32) -> (i32, i32, i32) {
    %c0_i32 = arith.constant 0 : i32
    %c0_i32_0 = arith.constant 0 : i32
    %c0_i32_1 = arith.constant 0 : i32
    return %arg0, %c0_i32, %c0_i32_0 : i32, i32, i32
  }
}

</mosaic_0001>

<llo_original>
// kernel: tpu_custom_call.1
$region0: #{tpu_custom_call.1}
  #allocation0 [shape = 'u32[]', space=smem, size = 0x4, offset = 0x4, fixed_abs, tag = 'smem constant byte address 0x4 - core index']
  #allocation1 [shape = 'u32[144,128]{1,0:T(1,128)}', space=vmem, size = 0x12000, scoped, tag = 'internal scratch']
  #allocation2 [shape = 'f32[2,8,32]{2,1,0:T(8,128)}', space=vmem, size = 0x2000, scoped, tag = 'scratch operand']
  #allocation3 [shape = 'f32[2,8]{1,0:T(2,128)}', space=vmem, size = 0x400, scoped, tag = 'scratch operand']
  #allocation4 [shape = 'f32[2,8]{1,0:T(2,128)}', space=vmem, size = 0x400, scoped, tag = 'scratch operand']
  #allocation5 [shape = 'f32[2,8]{1,0:T(2,128)}', space=vmem, size = 0x400, scoped, tag = 'scratch operand']
  #allocation6 [shape = 'f32[2,8]{1,0:T(2,128)}', space=vmem, size = 0x400, scoped, tag = 'scratch operand']
  #allocation7 [shape = 'f32[2,8]{1,0:T(2,128)}', space=vmem, size = 0x400, scoped, tag = 'scratch operand']
  #allocation8 [shape = 'f32[1,1]{1,0:T(1,128)S(1)}', space=vmem, size = 0x200, scoped, tag = 'scoped memory for tpu_custom_call.1']
  %s0 = inlined_call_operand.vmem [shape: f32[2,2,8,32], index: 0, kind: input, shape index: {}]
  %s1 = inlined_call_operand.vmem [shape: f32[2,2,8,32], index: 1, kind: input, shape index: {}]
  %s2 = inlined_call_operand.hbm [shape: f32[2,2,8], index: 2, kind: input, shape index: {}]
  %s3 = inlined_call_operand.hbm [shape: s32[2,2,8], index: 3, kind: input, shape index: {}]
  %s4 = inlined_call_operand.hbm [shape: f32[2,2,8,16], index: 4, kind: input, shape index: {}]
  %s5 = inlined_call_operand.hbm [shape: f32[2,2,8,8], index: 5, kind: input, shape index: {}]
  %s6 = inlined_call_operand.hbm [shape: s32[2,2,8], index: 6, kind: input, shape index: {}]
  %s7 = inlined_call_operand.hbm [shape: f32[2,2,8], index: 7, kind: input, shape index: {}]
  %s8 = inlined_call_operand.hbm [shape: f32[16,32], index: 8, kind: input, shape index: {}]
  %s9 = inlined_call_operand.hbm [shape: f32[1,32], index: 9, kind: input, shape index: {}]
  %s10 = inlined_call_operand.hbm [shape: f32[1,32], index: 10, kind: input, shape index: {}]
  %s11 = inlined_call_operand.<no memory space> [shape: f32[1,1], index: 11, kind: input, shape index: {}]
  %s12 = inlined_call_operand.vmem [shape: f32[32,3], index: 12, kind: input, shape index: {}]
  %s13 = inlined_call_operand.vmem [shape: f32[16,3], index: 13, kind: input, shape index: {}]
  %s14 = inlined_call_operand.vmem [shape: f32[8,3], index: 14, kind: input, shape index: {}]
  %s15 = inlined_call_operand.hbm [shape: f32[2,3], index: 15, kind: input, shape index: {}]
  %s16 = inlined_call_operand.hbm [shape: f32[16,256], index: 16, kind: input, shape index: {}]
  %s17 = inlined_call_operand.vmem [shape: f32[32,256], index: 17, kind: input, shape index: {}]
  %s18 = inlined_call_operand.vmem [shape: f32[1,256], index: 18, kind: input, shape index: {}]
  %s19 = inlined_call_operand.hbm [shape: f32[2,1,2], index: 19, kind: output, shape index: {}]
  %s20 = sld [smem:[#allocation0]]
  $region206: #{tpu_custom_call.1} parent=0
    _
  %s22 = ssub.s32 1, %s20
  %s23 = scalar_select 0, %s22, %s20
  %v24 = vstv %s11
  %25 = vst [vmem:[#allocation8] sm:$0x1] %v24
  $region1: #{tpu_custom_call.1} parent=0
    #allocation9 [shape = 'u8[2048]{0}', space=vmem, size = 0x800, scoped, tag = 'input window, operand 2, single buffered']
    #allocation10 [shape = 's32[2]{0}', space=sflag, size = 0x8, scoped, tag = 'scoped memory for tpu_custom_call.1']
    #allocation11 [shape = 's32[2]{0}', space=sflag, size = 0x8, scoped, tag = 'scoped memory for tpu_custom_call.1']
    #allocation12 [shape = 'u8[2048]{0}', space=vmem, size = 0x800, scoped, tag = 'input window, operand 3, single buffered']
    #allocation13 [shape = 's32[1]{0}', space=sflag, size = 0x4, scoped, tag = 'scoped memory for tpu_custom_call.1']
    #allocation14 [shape = 'u8[16384]{0}', space=vmem, size = 0x4000, scoped, tag = 'input window, operand 4']
    #allocation15 [shape = 'u8[16384]{0}', space=vmem, size = 0x4000, scoped, tag = 'input window, operand 5']
    #allocation16 [shape = 'u8[2048]{0}', space=vmem, size = 0x800, scoped, tag = 'input window, operand 6']
    #allocation17 [shape = 'u8[2048]{0}', space=vmem, size = 0x800, scoped, tag = 'input window, operand 7']
    #allocation18 [shape = 'u8[8192]{0}', space=vmem, size = 0x2000, scoped, tag = 'input window, operand 8, single buffered']
    #allocation19 [shape = 'u8[512]{0}', space=vmem, size = 0x400, scoped, tag = 'input window, operand 9, single buffered']
    #allocation20 [shape = 's32[1]{0}', space=sflag, size = 0x4, scoped, tag = 'scoped memory for tpu_custom_call.1']
    #allocation21 [shape = 'u8[512]{0}', space=vmem, size = 0x400, scoped, tag = 'input window, operand 10, single buffered']
    #allocation22 [shape = 'u8[1024]{0}', space=vmem, size = 0x400, scoped, tag = 'input window, operand 15, single buffered']
    #allocation23 [shape = 's32[1]{0}', space=sflag, size = 0x4, scoped, tag = 'scoped memory for tpu_custom_call.1']
    #allocation24 [shape = 'u8[16384]{0}', space=vmem, size = 0x4000, scoped, tag = 'input window, operand 16']
    #allocation25 [shape = 'u8[32768]{0}', space=vmem, size = 0x8000, scoped, tag = 'input window, operand 17']
    #allocation26 [shape = 'u8[1024]{0}', space=vmem, size = 0x400, scoped, tag = 'output window, operand 0']
    %26 = vsyncpa [#allocation10], 0
    %27 = vsyncpa [#allocation13], 0
    %28 = vsyncpa [#allocation20], 0
    %29 = vsyncpa [#allocation23], 0
    %30 = vsyncpa [#allocation11], 0
    %s31 = scalar_lea.sflag [#allocation11], 1
    %32 = vsyncpa %s31, 0
    loop: start=0, step=1, limit=6
    $region2: #{tpu_custom_call.1} parent=1 // loop_pre_header
      _
    $region3: #{tpu_custom_call.1} parent=1 // loop_header
      %s34 = sphi 0, %s38
      %p35 = scmp.ge.s32.totalorder %s34, 6
      %s41 = sphi 0, %s53
      %s42 = sphi 0, %s49
      %s43 = sphi 0, %s41
      %s44 = sphi 0, %s42
      %s45 = sphi 0, %s43
      %s46 = sphi 0, %s44
      %s54 = sphi 0, %s54
      %s56 = sphi 0, %s54
      %s57 = sphi 0, %s56
      %s71 = sphi 0, %s57
      %s75 = sphi 0, %s75
      %s77 = sphi 0, %s75
      %s78 = sphi 0, %s77
      %s92 = sphi 0, %s78
      %s96 = sphi 0, %s96
      %s98 = sphi 0, %s96
      %s99 = sphi 0, %s98
      %s113 = sphi 0, %s99
      %s117 = sphi 0, %s117
      %s119 = sphi 0, %s117
      %s120 = sphi 0, %s119
      %s134 = sphi 0, %s120
      %s140 = sphi 0, %s142
      %s143 = sphi 0, %s140
      %s144 = sphi 0, %s143
      %s160 = sphi 0, %s144
      %s166 = sphi 0, %s168
      %s169 = sphi 0, %s166
      %s170 = sphi 0, %s169
      %s186 = sphi 0, %s170
      %s192 = sphi 0, %s194
      %s195 = sphi 0, %s192
      %s196 = sphi 0, %s195
      %s212 = sphi 0, %s196
      %s218 = sphi 0, %s220
      %s221 = sphi 0, %s218
      %s222 = sphi 0, %s221
      %s238 = sphi 0, %s222
      %s242 = sphi 0, %s242
      %s244 = sphi 0, %s242
      %s245 = sphi 0, %s244
      %s259 = sphi 0, %s245
      %s263 = sphi 0, %s263
      %s265 = sphi 0, %s263
      %s266 = sphi 0, %s265
      %s280 = sphi 0, %s266
      %s284 = sphi 0, %s284
      %s286 = sphi 0, %s284
      %s287 = sphi 0, %s286
      %s301 = sphi 0, %s287
      %s305 = sphi 0, %s305
      %s307 = sphi 0, %s305
      %s308 = sphi 0, %s307
      %s322 = sphi 0, %s308
      %s326 = sphi 0, %s326
      %s328 = sphi 0, %s326
      %s329 = sphi 0, %s328
      %s343 = sphi 0, %s329
      %s347 = sphi 0, %s347
      %s349 = sphi 0, %s347
      %s350 = sphi 0, %s349
      %s364 = sphi 0, %s350
      %s368 = sphi 0, %s368
      %s370 = sphi 0, %s368
      %s371 = sphi 0, %s370
      %s385 = sphi 0, %s371
      %s389 = sphi 0, %s389
      %s391 = sphi 0, %s389
      %s392 = sphi 0, %s391
      %s406 = sphi 0, %s392
      %s412 = sphi 0, %s414
      %s415 = sphi 0, %s412
      %s416 = sphi 0, %s415
      %s432 = sphi 0, %s416
      %s438 = sphi 0, %s440
      %s441 = sphi 0, %s438
      %s442 = sphi 0, %s441
      %s458 = sphi 0, %s442
      %s464 = sphi 0, %s466
      %s467 = sphi 0, %s464
      %s468 = sphi 0, %s467
      %s484 = sphi 0, %s468
      %s490 = sphi 0, %s492
      %s493 = sphi 0, %s490
      %s494 = sphi 0, %s493
      %s510 = sphi 0, %s494
    $region4: #{tpu_custom_call.1} parent=1 // loop_header_branch
      %37 = sbr.rel (%p35) target = $region8
    $region5: #{tpu_custom_call.1} parent=1 // loop_body
      %s39 = ssub.s32 %s34, 1
      %s40 = ssub.s32 %s34, 2
      %s47 = sadd.s32 1, %s42
      %p48 = scmp.ge.s32.totalorder %s47, 2
      %s49 = scalar_select %p48, 0, %s47
      %s50 = sadd.s32 1, %s41
      %s51 = scalar_select %p48, %s50, %s41
      %p52 = scmp.ge.s32.totalorder %s51, 2
      %s53 = scalar_select %p52, 0, %s51
      %s55 = sadd.s32 %s54, 1
      %p58 = scmp.eq.s32.totalorder %s34, 3
      %p59 = scmp.ne.s32.totalorder %s54, %s56
      %p60 = scmp.eq.s32.totalorder %s34, 0
      %p61 = por %p59, %p60
      %p62 = scmp.ne.s32.totalorder %s54, %s56
      %p63 = scmp.eq.s32.totalorder %s39, 3
      %p64 = por %p62, %p63
      %p65 = scmp.ne.s32.totalorder %s56, %s57
      %p66 = scmp.eq.s32.totalorder %s39, 0
      %p67 = por %p65, %p66
      %p68 = scmp.ne.s32.totalorder %s56, %s57
      %p69 = scmp.eq.s32.totalorder %s40, 3
      %p70 = por %p68, %p69
      %p72 = scmp.ne.s32.totalorder %s57, %s71
      %p73 = scmp.eq.s32.totalorder %s40, 0
      %p74 = por %p72, %p73
      %s76 = sadd.s32 %s75, 1
      %p79 = scmp.eq.s32.totalorder %s34, 3
      %p80 = scmp.ne.s32.totalorder %s75, %s77
      %p81 = scmp.eq.s32.totalorder %s34, 0
      %p82 = por %p80, %p81
      %p83 = scmp.ne.s32.totalorder %s75, %s77
      %p84 = scmp.eq.s32.totalorder %s39, 3
      %p85 = por %p83, %p84
      %p86 = scmp.ne.s32.totalorder %s77, %s78
      %p87 = scmp.eq.s32.totalorder %s39, 0
      %p88 = por %p86, %p87
      %p89 = scmp.ne.s32.totalorder %s77, %s78
      %p90 = scmp.eq.s32.totalorder %s40, 3
      %p91 = por %p89, %p90
      %p93 = scmp.ne.s32.totalorder %s78, %s92
      %p94 = scmp.eq.s32.totalorder %s40, 0
      %p95 = por %p93, %p94
      %s97 = sadd.s32 %s96, 1
      %p100 = scmp.eq.s32.totalorder %s34, 3
      %p101 = scmp.ne.s32.totalorder %s96, %s98
      %p102 = scmp.eq.s32.totalorder %s34, 0
      %p103 = por %p101, %p102
      %p104 = scmp.ne.s32.totalorder %s96, %s98
      %p105 = scmp.eq.s32.totalorder %s39, 3
      %p106 = por %p104, %p105
      %p107 = scmp.ne.s32.totalorder %s98, %s99
      %p108 = scmp.eq.s32.totalorder %s39, 0
      %p109 = por %p107, %p108
      %p110 = scmp.ne.s32.totalorder %s98, %s99
      %p111 = scmp.eq.s32.totalorder %s40, 3
      %p112 = por %p110, %p111
      %p114 = scmp.ne.s32.totalorder %s99, %s113
      %p115 = scmp.eq.s32.totalorder %s40, 0
      %p116 = por %p114, %p115
      %s118 = sadd.s32 %s117, 1
      %p121 = scmp.eq.s32.totalorder %s34, 3
      %p122 = scmp.ne.s32.totalorder %s117, %s119
      %p123 = scmp.eq.s32.totalorder %s34, 0
      %p124 = por %p122, %p123
      %p125 = scmp.ne.s32.totalorder %s117, %s119
      %p126 = scmp.eq.s32.totalorder %s39, 3
      %p127 = por %p125, %p126
      %p128 = scmp.ne.s32.totalorder %s119, %s120
      %p129 = scmp.eq.s32.totalorder %s39, 0
      %p130 = por %p128, %p129
      %p131 = scmp.ne.s32.totalorder %s119, %s120
      %p132 = scmp.eq.s32.totalorder %s40, 3
      %p133 = por %p131, %p132
      %p135 = scmp.ne.s32.totalorder %s120, %s134
      %p136 = scmp.eq.s32.totalorder %s40, 0
      %p137 = por %p135, %p136
      %s138 = ssub.s32 %s41, %s53
      %p139 = scmp.eq.s32.totalorder %s138, 0
      %s141 = sadd.s32 %s140, 1
      %s142 = scalar_select %p139, %s140, %s141
      %p145 = pneg %p139
      %p146 = scmp.eq.s32.totalorder %s34, 3
      %p147 = por %p145, %p146
      %p148 = scmp.ne.s32.totalorder %s140, %s143
      %p149 = scmp.eq.s32.totalorder %s34, 0
      %p150 = por %p148, %p149
      %p151 = scmp.ne.s32.totalorder %s140, %s143
      %p152 = scmp.eq.s32.totalorder %s39, 3
      %p153 = por %p151, %p152
      %p154 = scmp.ne.s32.totalorder %s143, %s144
      %p155 = scmp.eq.s32.totalorder %s39, 0
      %p156 = por %p154, %p155
      %p157 = scmp.ne.s32.totalorder %s143, %s144
      %p158 = scmp.eq.s32.totalorder %s40, 3
      %p159 = por %p157, %p158
      %p161 = scmp.ne.s32.totalorder %s144, %s160
      %p162 = scmp.eq.s32.totalorder %s40, 0
      %p163 = por %p161, %p162
      %s164 = ssub.s32 %s41, %s53
      %p165 = scmp.eq.s32.totalorder %s164, 0
      %s167 = sadd.s32 %s166, 1
      %s168 = scalar_select %p165, %s166, %s167
      %p171 = pneg %p165
      %p172 = scmp.eq.s32.totalorder %s34, 3
      %p173 = por %p171, %p172
      %p174 = scmp.ne.s32.totalorder %s166, %s169
      %p175 = scmp.eq.s32.totalorder %s34, 0
      %p176 = por %p174, %p175
      %p177 = scmp.ne.s32.totalorder %s166, %s169
      %p178 = scmp.eq.s32.totalorder %s39, 3
      %p179 = por %p177, %p178
      %p180 = scmp.ne.s32.totalorder %s169, %s170
      %p181 = scmp.eq.s32.totalorder %s39, 0
      %p182 = por %p180, %p181
      %p183 = scmp.ne.s32.totalorder %s169, %s170
      %p184 = scmp.eq.s32.totalorder %s40, 3
      %p185 = por %p183, %p184
      %p187 = scmp.ne.s32.totalorder %s170, %s186
      %p188 = scmp.eq.s32.totalorder %s40, 0
      %p189 = por %p187, %p188
      %s190 = ssub.s32 %s41, %s53
      %p191 = scmp.eq.s32.totalorder %s190, 0
      %s193 = sadd.s32 %s192, 1
      %s194 = scalar_select %p191, %s192, %s193
      %p197 = pneg %p191
      %p198 = scmp.eq.s32.totalorder %s34, 3
      %p199 = por %p197, %p198
      %p200 = scmp.ne.s32.totalorder %s192, %s195
      %p201 = scmp.eq.s32.totalorder %s34, 0
      %p202 = por %p200, %p201
      %p203 = scmp.ne.s32.totalorder %s192, %s195
      %p204 = scmp.eq.s32.totalorder %s39, 3
      %p205 = por %p203, %p204
      %p206 = scmp.ne.s32.totalorder %s195, %s196
      %p207 = scmp.eq.s32.totalorder %s39, 0
      %p208 = por %p206, %p207
      %p209 = scmp.ne.s32.totalorder %s195, %s196
      %p210 = scmp.eq.s32.totalorder %s40, 3
      %p211 = por %p209, %p210
      %p213 = scmp.ne.s32.totalorder %s196, %s212
      %p214 = scmp.eq.s32.totalorder %s40, 0
      %p215 = por %p213, %p214
      %s216 = ssub.s32 %s41, %s53
      %p217 = scmp.eq.s32.totalorder %s216, 0
      %s219 = sadd.s32 %s218, 1
      %s220 = scalar_select %p217, %s218, %s219
      %p223 = pneg %p217
      %p224 = scmp.eq.s32.totalorder %s34, 3
      %p225 = por %p223, %p224
      %p226 = scmp.ne.s32.totalorder %s218, %s221
      %p227 = scmp.eq.s32.totalorder %s34, 0
      %p228 = por %p226, %p227
      %p229 = scmp.ne.s32.totalorder %s218, %s221
      %p230 = scmp.eq.s32.totalorder %s39, 3
      %p231 = por %p229, %p230
      %p232 = scmp.ne.s32.totalorder %s221, %s222
      %p233 = scmp.eq.s32.totalorder %s39, 0
      %p234 = por %p232, %p233
      %p235 = scmp.ne.s32.totalorder %s221, %s222
      %p236 = scmp.eq.s32.totalorder %s40, 3
      %p237 = por %p235, %p236
      %p239 = scmp.ne.s32.totalorder %s222, %s238
      %p240 = scmp.eq.s32.totalorder %s40, 0
      %p241 = por %p239, %p240
      %s243 = sadd.s32 %s242, 1
      %p246 = scmp.eq.s32.totalorder %s34, 3
      %p247 = scmp.ne.s32.totalorder %s242, %s244
      %p248 = scmp.eq.s32.totalorder %s34, 0
      %p249 = por %p247, %p248
      %p250 = scmp.ne.s32.totalorder %s242, %s244
      %p251 = scmp.eq.s32.totalorder %s39, 3
      %p252 = por %p250, %p251
      %p253 = scmp.ne.s32.totalorder %s244, %s245
      %p254 = scmp.eq.s32.totalorder %s39, 0
      %p255 = por %p253, %p254
      %p256 = scmp.ne.s32.totalorder %s244, %s245
      %p257 = scmp.eq.s32.totalorder %s40, 3
      %p258 = por %p256, %p257
      %p260 = scmp.ne.s32.totalorder %s245, %s259
      %p261 = scmp.eq.s32.totalorder %s40, 0
      %p262 = por %p260, %p261
      %s264 = sadd.s32 %s263, 1
      %p267 = scmp.eq.s32.totalorder %s34, 3
      %p268 = scmp.ne.s32.totalorder %s263, %s265
      %p269 = scmp.eq.s32.totalorder %s34, 0
      %p270 = por %p268, %p269
      %p271 = scmp.ne.s32.totalorder %s263, %s265
      %p272 = scmp.eq.s32.totalorder %s39, 3
      %p273 = por %p271, %p272
      %p274 = scmp.ne.s32.totalorder %s265, %s266
      %p275 = scmp.eq.s32.totalorder %s39, 0
      %p276 = por %p274, %p275
      %p277 = scmp.ne.s32.totalorder %s265, %s266
      %p278 = scmp.eq.s32.totalorder %s40, 3
      %p279 = por %p277, %p278
      %p281 = scmp.ne.s32.totalorder %s266, %s280
      %p282 = scmp.eq.s32.totalorder %s40, 0
      %p283 = por %p281, %p282
      %s285 = sadd.s32 %s284, 1
      %p288 = scmp.eq.s32.totalorder %s34, 3
      %p289 = scmp.ne.s32.totalorder %s284, %s286
      %p290 = scmp.eq.s32.totalorder %s34, 0
      %p291 = por %p289, %p290
      %p292 = scmp.ne.s32.totalorder %s284, %s286
      %p293 = scmp.eq.s32.totalorder %s39, 3
      %p294 = por %p292, %p293
      %p295 = scmp.ne.s32.totalorder %s286, %s287
      %p296 = scmp.eq.s32.totalorder %s39, 0
      %p297 = por %p295, %p296
      %p298 = scmp.ne.s32.totalorder %s286, %s287
      %p299 = scmp.eq.s32.totalorder %s40, 3
      %p300 = por %p298, %p299
      %p302 = scmp.ne.s32.totalorder %s287, %s301
      %p303 = scmp.eq.s32.totalorder %s40, 0
      %p304 = por %p302, %p303
      %s306 = sadd.s32 %s305, 1
      %p309 = scmp.eq.s32.totalorder %s34, 3
      %p310 = scmp.ne.s32.totalorder %s305, %s307
      %p311 = scmp.eq.s32.totalorder %s34, 0
      %p312 = por %p310, %p311
      %p313 = scmp.ne.s32.totalorder %s305, %s307
      %p314 = scmp.eq.s32.totalorder %s39, 3
      %p315 = por %p313, %p314
      %p316 = scmp.ne.s32.totalorder %s307, %s308
      %p317 = scmp.eq.s32.totalorder %s39, 0
      %p318 = por %p316, %p317
      %p319 = scmp.ne.s32.totalorder %s307, %s308
      %p320 = scmp.eq.s32.totalorder %s40, 3
      %p321 = por %p319, %p320
      %p323 = scmp.ne.s32.totalorder %s308, %s322
      %p324 = scmp.eq.s32.totalorder %s40, 0
      %p325 = por %p323, %p324
      %s327 = sadd.s32 %s326, 1
      %p330 = scmp.eq.s32.totalorder %s34, 3
      %p331 = scmp.ne.s32.totalorder %s326, %s328
      %p332 = scmp.eq.s32.totalorder %s34, 0
      %p333 = por %p331, %p332
      %p334 = scmp.ne.s32.totalorder %s326, %s328
      %p335 = scmp.eq.s32.totalorder %s39, 3
      %p336 = por %p334, %p335
      %p337 = scmp.ne.s32.totalorder %s328, %s329
      %p338 = scmp.eq.s32.totalorder %s39, 0
      %p339 = por %p337, %p338
      %p340 = scmp.ne.s32.totalorder %s328, %s329
      %p341 = scmp.eq.s32.totalorder %s40, 3
      %p342 = por %p340, %p341
      %p344 = scmp.ne.s32.totalorder %s329, %s343
      %p345 = scmp.eq.s32.totalorder %s40, 0
      %p346 = por %p344, %p345
      %s348 = sadd.s32 %s347, 1
      %p351 = scmp.eq.s32.totalorder %s34, 3
      %p352 = scmp.ne.s32.totalorder %s347, %s349
      %p353 = scmp.eq.s32.totalorder %s34, 0
      %p354 = por %p352, %p353
      %p355 = scmp.ne.s32.totalorder %s347, %s349
      %p356 = scmp.eq.s32.totalorder %s39, 3
      %p357 = por %p355, %p356
      %p358 = scmp.ne.s32.totalorder %s349, %s350
      %p359 = scmp.eq.s32.totalorder %s39, 0
      %p360 = por %p358, %p359
      %p361 = scmp.ne.s32.totalorder %s349, %s350
      %p362 = scmp.eq.s32.totalorder %s40, 3
      %p363 = por %p361, %p362
      %p365 = scmp.ne.s32.totalorder %s350, %s364
      %p366 = scmp.eq.s32.totalorder %s40, 0
      %p367 = por %p365, %p366
      %s369 = sadd.s32 %s368, 1
      %p372 = scmp.eq.s32.totalorder %s34, 3
      %p373 = scmp.ne.s32.totalorder %s368, %s370
      %p374 = scmp.eq.s32.totalorder %s34, 0
      %p375 = por %p373, %p374
      %p376 = scmp.ne.s32.totalorder %s368, %s370
      %p377 = scmp.eq.s32.totalorder %s39, 3
      %p378 = por %p376, %p377
      %p379 = scmp.ne.s32.totalorder %s370, %s371
      %p380 = scmp.eq.s32.totalorder %s39, 0
      %p381 = por %p379, %p380
      %p382 = scmp.ne.s32.totalorder %s370, %s371
      %p383 = scmp.eq.s32.totalorder %s40, 3
      %p384 = por %p382, %p383
      %p386 = scmp.ne.s32.totalorder %s371, %s385
      %p387 = scmp.eq.s32.totalorder %s40, 0
      %p388 = por %p386, %p387
      %s390 = sadd.s32 %s389, 1
      %p393 = scmp.eq.s32.totalorder %s34, 3
      %p394 = scmp.ne.s32.totalorder %s389, %s391
      %p395 = scmp.eq.s32.totalorder %s34, 0
      %p396 = por %p394, %p395
      %p397 = scmp.ne.s32.totalorder %s389, %s391
      %p398 = scmp.eq.s32.totalorder %s39, 3
      %p399 = por %p397, %p398
      %p400 = scmp.ne.s32.totalorder %s391, %s392
      %p401 = scmp.eq.s32.totalorder %s39, 0
      %p402 = por %p400, %p401
      %p403 = scmp.ne.s32.totalorder %s391, %s392
      %p404 = scmp.eq.s32.totalorder %s40, 3
      %p405 = por %p403, %p404
      %p407 = scmp.ne.s32.totalorder %s392, %s406
      %p408 = scmp.eq.s32.totalorder %s40, 0
      %p409 = por %p407, %p408
      %s410 = ssub.s32 %s42, %s49
      %p411 = scmp.eq.s32.totalorder %s410, 0
      %s413 = sadd.s32 %s412, 1
      %s414 = scalar_select %p411, %s412, %s413
      %p417 = pneg %p411
      %p418 = scmp.eq.s32.totalorder %s34, 3
      %p419 = por %p417, %p418
      %p420 = scmp.ne.s32.totalorder %s412, %s415
      %p421 = scmp.eq.s32.totalorder %s34, 0
      %p422 = por %p420, %p421
      %p423 = scmp.ne.s32.totalorder %s412, %s415
      %p424 = scmp.eq.s32.totalorder %s39, 3
      %p425 = por %p423, %p424
      %p426 = scmp.ne.s32.totalorder %s415, %s416
      %p427 = scmp.eq.s32.totalorder %s39, 0
      %p428 = por %p426, %p427
      %p429 = scmp.ne.s32.totalorder %s415, %s416
      %p430 = scmp.eq.s32.totalorder %s40, 3
      %p431 = por %p429, %p430
      %p433 = scmp.ne.s32.totalorder %s416, %s432
      %p434 = scmp.eq.s32.totalorder %s40, 0
      %p435 = por %p433, %p434
      %s436 = ssub.s32 %s42, %s49
      %p437 = scmp.eq.s32.totalorder %s436, 0
      %s439 = sadd.s32 %s438, 1
      %s440 = scalar_select %p437, %s438, %s439
      %p443 = pneg %p437
      %p444 = scmp.eq.s32.totalorder %s34, 3
      %p445 = por %p443, %p444
      %p446 = scmp.ne.s32.totalorder %s438, %s441
      %p447 = scmp.eq.s32.totalorder %s34, 0
      %p448 = por %p446, %p447
      %p449 = scmp.ne.s32.totalorder %s438, %s441
      %p450 = scmp.eq.s32.totalorder %s39, 3
      %p451 = por %p449, %p450
      %p452 = scmp.ne.s32.totalorder %s441, %s442
      %p453 = scmp.eq.s32.totalorder %s39, 0
      %p454 = por %p452, %p453
      %p455 = scmp.ne.s32.totalorder %s441, %s442
      %p456 = scmp.eq.s32.totalorder %s40, 3
      %p457 = por %p455, %p456
      %p459 = scmp.ne.s32.totalorder %s442, %s458
      %p460 = scmp.eq.s32.totalorder %s40, 0
      %p461 = por %p459, %p460
      %s462 = ssub.s32 %s42, %s49
      %p463 = scmp.eq.s32.totalorder %s462, 0
      %s465 = sadd.s32 %s464, 1
      %s466 = scalar_select %p463, %s464, %s465
      %p469 = pneg %p463
      %p470 = scmp.eq.s32.totalorder %s34, 3
      %p471 = por %p469, %p470
      %p472 = scmp.ne.s32.totalorder %s464, %s467
      %p473 = scmp.eq.s32.totalorder %s34, 0
      %p474 = por %p472, %p473
      %p475 = scmp.ne.s32.totalorder %s464, %s467
      %p476 = scmp.eq.s32.totalorder %s39, 3
      %p477 = por %p475, %p476
      %p478 = scmp.ne.s32.totalorder %s467, %s468
      %p479 = scmp.eq.s32.totalorder %s39, 0
      %p480 = por %p478, %p479
      %p481 = scmp.ne.s32.totalorder %s467, %s468
      %p482 = scmp.eq.s32.totalorder %s40, 3
      %p483 = por %p481, %p482
      %p485 = scmp.ne.s32.totalorder %s468, %s484
      %p486 = scmp.eq.s32.totalorder %s40, 0
      %p487 = por %p485, %p486
      %s488 = ssub.s32 %s41, %s53
      %p489 = scmp.eq.s32.totalorder %s488, 0
      %s491 = sadd.s32 %s490, 1
      %s492 = scalar_select %p489, %s490, %s491
      %p495 = pneg %p489
      %p496 = scmp.eq.s32.totalorder %s34, 3
      %p497 = por %p495, %p496
      %p498 = scmp.ne.s32.totalorder %s490, %s493
      %p499 = scmp.eq.s32.totalorder %s34, 0
      %p500 = por %p498, %p499
      %p501 = scmp.ne.s32.totalorder %s490, %s493
      %p502 = scmp.eq.s32.totalorder %s39, 3
      %p503 = por %p501, %p502
      %p504 = scmp.ne.s32.totalorder %s493, %s494
      %p505 = scmp.eq.s32.totalorder %s39, 0
      %p506 = por %p504, %p505
      %p507 = scmp.ne.s32.totalorder %s493, %s494
      %p508 = scmp.eq.s32.totalorder %s40, 3
      %p509 = por %p507, %p508
      %p511 = scmp.ne.s32.totalorder %s494, %s510
      %p512 = scmp.eq.s32.totalorder %s40, 0
      %p513 = por %p511, %p512
      %p514 = scmp.le.s32.totalorder 1, %s34
      %p515 = scmp.lt.s32.totalorder %s34, 5
      %p516 = pnand %p514, %p515
      %p517 = pneg %p516
      // Predicated region
      $region9: #{tpu_custom_call.1} parent=5 // pred_check
        _
      $region10: #{tpu_custom_call.1} parent=5 // pred_check_branch
        %519 = sbr.rel (%p516) target = $region12
      $region11: #{tpu_custom_call.1} parent=5 // pred_region
        %s520 = ssub.s32 %s34, 1
        // Predicated region
        $region13: #{tpu_custom_call.1} parent=11 // pred_check
          %p521 = pneg %p67
        $region14: #{tpu_custom_call.1} parent=11 // pred_check_branch
          %523 = sbr.rel (%p521) target = $region16
        $region15: #{tpu_custom_call.1} parent=11 // pred_region
          _
        $region16: #{tpu_custom_call.1} parent=11 // pred_fallthru
          _
        // Predicated region
        $region17: #{tpu_custom_call.1} parent=11 // pred_check
          %p524 = pneg %p88
        $region18: #{tpu_custom_call.1} parent=11 // pred_check_branch
          %526 = sbr.rel (%p524) target = $region20
        $region19: #{tpu_custom_call.1} parent=11 // pred_region
          _
        $region20: #{tpu_custom_call.1} parent=11 // pred_fallthru
          _
        // Predicated region
        $region21: #{tpu_custom_call.1} parent=11 // pred_check
          %p527 = pneg %p109
        $region22: #{tpu_custom_call.1} parent=11 // pred_check_branch
          %529 = sbr.rel (%p527) target = $region24
        $region23: #{tpu_custom_call.1} parent=11 // pred_region
          %s531 = ssub.s32 64, 64
          %532 = vsyncadd [#allocation10], %s531
          %s533 = sshll.u32 [#allocation9], 4
          %s534 = int_to_ptr.vmem [resolvable:$true] %s533
          %539 = dma.hbm_to_vmem [thread:$0]  %s2, 64, %s534, [#allocation10], 32, 32, 2
        $region24: #{tpu_custom_call.1} parent=11 // pred_fallthru
          _
        // Predicated region
        $region25: #{tpu_custom_call.1} parent=11 // pred_check
          %p540 = pneg %p130
        $region26: #{tpu_custom_call.1} parent=11 // pred_check_branch
          %542 = sbr.rel (%p540) target = $region28
        $region27: #{tpu_custom_call.1} parent=11 // pred_region
          %s544 = ssub.s32 64, 64
          %545 = vsyncadd [#allocation13], %s544
          %s546 = sshll.u32 [#allocation12], 4
          %s547 = int_to_ptr.vmem [resolvable:$true] %s546
          %552 = dma.hbm_to_vmem [thread:$0]  %s3, 64, %s547, [#allocation13], 32, 32, 2
        $region28: #{tpu_custom_call.1} parent=11 // pred_fallthru
          _
        // Predicated region
        $region29: #{tpu_custom_call.1} parent=11 // pred_check
          %p553 = pneg %p255
        $region30: #{tpu_custom_call.1} parent=11 // pred_check_branch
          %555 = sbr.rel (%p553) target = $region32
        $region31: #{tpu_custom_call.1} parent=11 // pred_region
          %s557 = ssub.s32 256, 256
          %558 = vsyncadd [#allocation13], %s557
          %s559 = sshll.u32 [#allocation18], 4
          %s560 = int_to_ptr.vmem [resolvable:$true] %s559
          %565 = dma.hbm_to_vmem [thread:$0]  %s8, 256, %s560, [#allocation13], 128, 128, 8
        $region32: #{tpu_custom_call.1} parent=11 // pred_fallthru
          _
        // Predicated region
        $region33: #{tpu_custom_call.1} parent=11 // pred_check
          %p566 = pneg %p276
        $region34: #{tpu_custom_call.1} parent=11 // pred_check_branch
          %568 = sbr.rel (%p566) target = $region36
        $region35: #{tpu_custom_call.1} parent=11 // pred_region
          %s570 = ssub.s32 16, 16
          %571 = vsyncadd [#allocation20], %s570
          %s573 = sshll.u32 [#allocation19], 4
          %s574 = int_to_ptr.vmem [resolvable:$true] %s573
          %576 = dma.hbm_to_vmem [thread:$0]  %s9, 16, %s574, [#allocation20]
        $region36: #{tpu_custom_call.1} parent=11 // pred_fallthru
          _
        // Predicated region
        $region37: #{tpu_custom_call.1} parent=11 // pred_check
          %p577 = pneg %p297
        $region38: #{tpu_custom_call.1} parent=11 // pred_check_branch
          %579 = sbr.rel (%p577) target = $region40
        $region39: #{tpu_custom_call.1} parent=11 // pred_region
          %s581 = ssub.s32 16, 16
          %582 = vsyncadd [#allocation20], %s581
          %s584 = sshll.u32 [#allocation21], 4
          %s585 = int_to_ptr.vmem [resolvable:$true] %s584
          %587 = dma.hbm_to_vmem [thread:$0]  %s10, 16, %s585, [#allocation20]
        $region40: #{tpu_custom_call.1} parent=11 // pred_fallthru
          _
        // Predicated region
        $region41: #{tpu_custom_call.1} parent=11 // pred_check
          %p588 = pneg %p318
        $region42: #{tpu_custom_call.1} parent=11 // pred_check_branch
          %590 = sbr.rel (%p588) target = $region44
        $region43: #{tpu_custom_call.1} parent=11 // pred_region
          _
        $region44: #{tpu_custom_call.1} parent=11 // pred_fallthru
          _
        // Predicated region
        $region45: #{tpu_custom_call.1} parent=11 // pred_check
          %p591 = pneg %p339
        $region46: #{tpu_custom_call.1} parent=11 // pred_check_branch
          %593 = sbr.rel (%p591) target = $region48
        $region47: #{tpu_custom_call.1} parent=11 // pred_region
          _
        $region48: #{tpu_custom_call.1} parent=11 // pred_fallthru
          _
        // Predicated region
        $region49: #{tpu_custom_call.1} parent=11 // pred_check
          %p594 = pneg %p360
        $region50: #{tpu_custom_call.1} parent=11 // pred_check_branch
          %596 = sbr.rel (%p594) target = $region52
        $region51: #{tpu_custom_call.1} parent=11 // pred_region
          _
        $region52: #{tpu_custom_call.1} parent=11 // pred_fallthru
          _
        // Predicated region
        $region53: #{tpu_custom_call.1} parent=11 // pred_check
          %p597 = pneg %p381
        $region54: #{tpu_custom_call.1} parent=11 // pred_check_branch
          %599 = sbr.rel (%p597) target = $region56
        $region55: #{tpu_custom_call.1} parent=11 // pred_region
          _
        $region56: #{tpu_custom_call.1} parent=11 // pred_fallthru
          _
        // Predicated region
        $region57: #{tpu_custom_call.1} parent=11 // pred_check
          %p600 = pneg %p402
        $region58: #{tpu_custom_call.1} parent=11 // pred_check_branch
          %602 = sbr.rel (%p600) target = $region60
        $region59: #{tpu_custom_call.1} parent=11 // pred_region
          %s604 = ssub.s32 32, 32
          %605 = vsyncadd [#allocation23], %s604
          %s607 = sshll.u32 [#allocation22], 4
          %s608 = int_to_ptr.vmem [resolvable:$true] %s607
          %610 = dma.hbm_to_vmem [thread:$0]  %s15, 32, %s608, [#allocation23]
        $region60: #{tpu_custom_call.1} parent=11 // pred_fallthru
          _
      $region12: #{tpu_custom_call.1} parent=5 // pred_fallthru
        _
      %p611 = scmp.lt.s32.totalorder %s34, 4
      // Predicated region
      $region61: #{tpu_custom_call.1} parent=5 // pred_check
        %p612 = pneg %p611
      $region62: #{tpu_custom_call.1} parent=5 // pred_check_branch
        %614 = sbr.rel (%p612) target = $region64
      $region63: #{tpu_custom_call.1} parent=5 // pred_region
        // Predicated region
        $region65: #{tpu_custom_call.1} parent=63 // pred_check
          %p615 = pneg %p150
        $region66: #{tpu_custom_call.1} parent=63 // pred_check_branch
          %617 = sbr.rel (%p615) target = $region68
        $region67: #{tpu_custom_call.1} parent=63 // pred_region
          %s618 = sand.u32 %s34, 1
          %s619 = scalar_lea.sflag [#allocation10], %s618
          %s620 = sand.u32 %s140, 1
          %s621 = smul.addr %s620, 16
          %s622 = scalar_lea.vmem [#allocation14], %s621
          %s624 = ssub.s32 256, 256
          %625 = vsyncadd %s619, %s624
          %s626 = smul.addr %s41, 2
          %s627 = smul.addr %s626, 128
          %s628 = scalar_lea.hbm %s4, %s627
          %s629 = sshll.u32 %s622, 4
          %s630 = int_to_ptr.vmem [resolvable:$true] %s629
          %635 = dma.hbm_to_vmem [thread:$0]  %s628, 256, %s630, %s619, 128, 128, 8
        $region68: #{tpu_custom_call.1} parent=63 // pred_fallthru
          _
        // Predicated region
        $region69: #{tpu_custom_call.1} parent=63 // pred_check
          %p636 = pneg %p176
        $region70: #{tpu_custom_call.1} parent=63 // pred_check_branch
          %638 = sbr.rel (%p636) target = $region72
        $region71: #{tpu_custom_call.1} parent=63 // pred_region
          %s639 = sand.u32 %s34, 1
          %s640 = scalar_lea.sflag [#allocation10], %s639
          %s641 = sand.u32 %s166, 1
          %s642 = smul.addr %s641, 16
          %s643 = scalar_lea.vmem [#allocation15], %s642
          %s645 = ssub.s32 256, 256
          %646 = vsyncadd %s640, %s645
          %s647 = smul.addr %s41, 2
          %s648 = smul.addr %s647, 128
          %s649 = scalar_lea.hbm %s5, %s648
          %s650 = sshll.u32 %s643, 4
          %s651 = int_to_ptr.vmem [resolvable:$true] %s650
          %656 = dma.hbm_to_vmem [thread:$0]  %s649, 256, %s651, %s640, 128, 128, 8
        $region72: #{tpu_custom_call.1} parent=63 // pred_fallthru
          _
        // Predicated region
        $region73: #{tpu_custom_call.1} parent=63 // pred_check
          %p657 = pneg %p202
        $region74: #{tpu_custom_call.1} parent=63 // pred_check_branch
          %659 = sbr.rel (%p657) target = $region76
        $region75: #{tpu_custom_call.1} parent=63 // pred_region
          %s660 = sand.u32 %s34, 1
          %s661 = scalar_lea.sflag [#allocation10], %s660
          %s662 = sand.u32 %s192, 1
          %s663 = smul.addr %s662, 2
          %s664 = scalar_lea.vmem [#allocation16], %s663
          %s666 = ssub.s32 32, 32
          %667 = vsyncadd %s661, %s666
          %s668 = smul.addr %s41, 32
          %s669 = scalar_lea.hbm %s6, %s668
          %s671 = sshll.u32 %s664, 4
          %s672 = int_to_ptr.vmem [resolvable:$true] %s671
          %674 = dma.hbm_to_vmem [thread:$0]  %s669, 32, %s672, %s661
        $region76: #{tpu_custom_call.1} parent=63 // pred_fallthru
          _
        // Predicated region
        $region77: #{tpu_custom_call.1} parent=63 // pred_check
          %p675 = pneg %p228
        $region78: #{tpu_custom_call.1} parent=63 // pred_check_branch
          %677 = sbr.rel (%p675) target = $region80
        $region79: #{tpu_custom_call.1} parent=63 // pred_region
          %s678 = sand.u32 %s34, 1
          %s679 = scalar_lea.sflag [#allocation10], %s678
          %s680 = sand.u32 %s218, 1
          %s681 = smul.addr %s680, 2
          %s682 = scalar_lea.vmem [#allocation17], %s681
          %s684 = ssub.s32 32, 32
          %685 = vsyncadd %s679, %s684
          %s686 = smul.addr %s41, 32
          %s687 = scalar_lea.hbm %s7, %s686
          %s689 = sshll.u32 %s682, 4
          %s690 = int_to_ptr.vmem [resolvable:$true] %s689
          %692 = dma.hbm_to_vmem [thread:$0]  %s687, 32, %s690, %s679
        $region80: #{tpu_custom_call.1} parent=63 // pred_fallthru
          _
        // Predicated region
        $region81: #{tpu_custom_call.1} parent=63 // pred_check
          %p693 = pneg %p422
        $region82: #{tpu_custom_call.1} parent=63 // pred_check_branch
          %695 = sbr.rel (%p693) target = $region84
        $region83: #{tpu_custom_call.1} parent=63 // pred_region
          %s696 = sand.u32 %s34, 1
          %s697 = scalar_lea.sflag [#allocation10], %s696
          %s698 = sand.u32 %s412, 1
          %s699 = smul.addr %s698, 16
          %s700 = scalar_lea.vmem [#allocation24], %s699
          %s702 = ssub.s32 256, 256
          %703 = vsyncadd %s697, %s702
          %s704 = smul.addr %s42, 128
          %s705 = scalar_lea.hbm %s16, %s704
          %s706 = sshll.u32 %s700, 4
          %s707 = int_to_ptr.vmem [resolvable:$true] %s706
          %712 = dma.hbm_to_vmem [thread:$0]  %s705, 256, %s707, %s697, 256, 128, 8
        $region84: #{tpu_custom_call.1} parent=63 // pred_fallthru
          _
        // Predicated region
        $region85: #{tpu_custom_call.1} parent=63 // pred_check
          %p713 = pneg %p448
        $region86: #{tpu_custom_call.1} parent=63 // pred_check_branch
          %715 = sbr.rel (%p713) target = $region88
        $region87: #{tpu_custom_call.1} parent=63 // pred_region
          %s716 = sand.u32 %s438, 1
          %s717 = sand.u32 %s438, 1
          %s718 = smul.addr %s717, 32
          %s719 = scalar_lea.vmem [#allocation25], %s718
          %s720 = smul.addr %s42, 8
          %s721 = scalar_lea.vmem %s17, %s720
          // Predicated region
          $region89: #{tpu_custom_call.1} parent=87 // pred_check
            _
          $region90: #{tpu_custom_call.1} parent=87 // pred_check_branch
            %723 = sbr.rel (0) target = $region92
          $region91: #{tpu_custom_call.1} parent=87 // pred_region
            // Predicated region
            $region93: #{tpu_custom_call.1} parent=91 // pred_check
              _
            $region94: #{tpu_custom_call.1} parent=91 // pred_check_branch
              %725 = sbr.rel (0) target = $region96
            $region95: #{tpu_custom_call.1} parent=91 // pred_region
              // Predicated region
              $region108: #{tpu_custom_call.1} parent=95 // pred_check
                _
              $region109: #{tpu_custom_call.1} parent=95 // pred_check_branch
                %746 = sbr.rel (0) target = $region111
              $region110: #{tpu_custom_call.1} parent=95 // pred_region
                loop: start=0, step=1, limit=1
                $region112: #{tpu_custom_call.1} parent=110 // loop_pre_header
                  _
                $region113: #{tpu_custom_call.1} parent=110 // loop_header
                  %s748 = sphi 0, %s752
                  %p749 = scmp.ge.s32.totalorder %s748, 1
                  %s753 = sphi %s721, %s721
                  %s754 = sphi %s719, %s719
                $region114: #{tpu_custom_call.1} parent=110 // loop_header_branch
                  %751 = sbr.rel (%p749) target = $region118
                $region115: #{tpu_custom_call.1} parent=110 // loop_body
                  %v755 = vld [vmem:[%s753] sm:$0xff]
                  %756 = vst [vmem:[%s754] sm:$0xff] %v755
                  %v757 = vld [vmem:[%s753 + $0x10] sm:$0xff]
                  %758 = vst [vmem:[%s754 + $0x8] sm:$0xff] %v757
                  %v759 = vld [vmem:[%s753 + $0x20] sm:$0xff]
                  %760 = vst [vmem:[%s754 + $0x10] sm:$0xff] %v759
                  %v761 = vld [vmem:[%s753 + $0x30] sm:$0xff]
                  %762 = vst [vmem:[%s754 + $0x18] sm:$0xff] %v761
                $region116: #{tpu_custom_call.1} parent=110 // loop_footer
                  %s752 = sadd.s32 1, %s748
                $region117: #{tpu_custom_call.1} parent=110 // loop_footer_branch
                  %747 = sbr.rel target = $region113
                $region118: #{tpu_custom_call.1} parent=110 // loop_exit
                  _
              $region111: #{tpu_custom_call.1} parent=95 // pred_fallthru
                _
              // Predicated region
              $region119: #{tpu_custom_call.1} parent=95 // pred_check
                _
              $region120: #{tpu_custom_call.1} parent=95 // pred_check_branch
                %764 = sbr.rel target = $region122
              $region121: #{tpu_custom_call.1} parent=95 // pred_region
                _
              $region122: #{tpu_custom_call.1} parent=95 // pred_fallthru
                _
            $region96: #{tpu_custom_call.1} parent=91 // pred_fallthru
              _
            // Predicated region
            $region97: #{tpu_custom_call.1} parent=91 // pred_check
              _
            $region98: #{tpu_custom_call.1} parent=91 // pred_check_branch
              %727 = sbr.rel target = $region100
            $region99: #{tpu_custom_call.1} parent=91 // pred_region
              loop: start=0, step=1, limit=1
              $region101: #{tpu_custom_call.1} parent=99 // loop_pre_header
                _
              $region102: #{tpu_custom_call.1} parent=99 // loop_header
                %s730 = sphi 0, %s734
                %p731 = scmp.ge.s32.totalorder %s730, 1
                %s735 = sphi %s721, %s721
                %s736 = sphi %s719, %s719
              $region103: #{tpu_custom_call.1} parent=99 // loop_header_branch
                %733 = sbr.rel (%p731) target = $region107
              $region104: #{tpu_custom_call.1} parent=99 // loop_body
                %v737 = vld [vmem:[%s735] sm:$0xff]
                %738 = vst [vmem:[%s736] sm:$0xff] %v737
                %v739 = vld [vmem:[%s735 + $0x10] sm:$0xff]
                %740 = vst [vmem:[%s736 + $0x8] sm:$0xff] %v739
                %v741 = vld [vmem:[%s735 + $0x20] sm:$0xff]
                %742 = vst [vmem:[%s736 + $0x10] sm:$0xff] %v741
                %v743 = vld [vmem:[%s735 + $0x30] sm:$0xff]
                %744 = vst [vmem:[%s736 + $0x18] sm:$0xff] %v743
              $region105: #{tpu_custom_call.1} parent=99 // loop_footer
                %s734 = sadd.s32 1, %s730
              $region106: #{tpu_custom_call.1} parent=99 // loop_footer_branch
                %729 = sbr.rel target = $region102
              $region107: #{tpu_custom_call.1} parent=99 // loop_exit
                _
            $region100: #{tpu_custom_call.1} parent=91 // pred_fallthru
              _
          $region92: #{tpu_custom_call.1} parent=87 // pred_fallthru
            _
          %765 = vnop
        $region88: #{tpu_custom_call.1} parent=63 // pred_fallthru
          _
        // Predicated region
        $region123: #{tpu_custom_call.1} parent=63 // pred_check
          %p766 = pneg %p474
        $region124: #{tpu_custom_call.1} parent=63 // pred_check_branch
          %768 = sbr.rel (%p766) target = $region126
        $region125: #{tpu_custom_call.1} parent=63 // pred_region
          %p769 = scmp.lt.s32.totalorder %s42, 1
          %s770 = scalar_select %p769, %s42, 1
          %s771 = scalar_lea.vmem %s18, %s770
        $region126: #{tpu_custom_call.1} parent=63 // pred_fallthru
          _
      $region64: #{tpu_custom_call.1} parent=5 // pred_fallthru
        _
      %p772 = scmp.le.s32.totalorder 1, %s34
      %p773 = scmp.lt.s32.totalorder %s34, 5
      %p774 = pnand %p772, %p773
      %p775 = pneg %p774
      // Predicated region
      $region127: #{tpu_custom_call.1} parent=5 // pred_check
        _
      $region128: #{tpu_custom_call.1} parent=5 // pred_check_branch
        %777 = sbr.rel (%p774) target = $region130
      $region129: #{tpu_custom_call.1} parent=5 // pred_region
        %s778 = ssub.s32 %s34, 1
        // Predicated region
        $region131: #{tpu_custom_call.1} parent=129 // pred_check
          %p779 = pneg %p109
        $region132: #{tpu_custom_call.1} parent=129 // pred_check_branch
          %781 = sbr.rel (%p779) target = $region134
        $region133: #{tpu_custom_call.1} parent=129 // pred_region
          %782 = dma.done [#allocation10], 64
        $region134: #{tpu_custom_call.1} parent=129 // pred_fallthru
          _
        // Predicated region
        $region135: #{tpu_custom_call.1} parent=129 // pred_check
          %p783 = pneg %p130
        $region136: #{tpu_custom_call.1} parent=129 // pred_check_branch
          %785 = sbr.rel (%p783) target = $region138
        $region137: #{tpu_custom_call.1} parent=129 // pred_region
          %786 = dma.done [#allocation13], 64
        $region138: #{tpu_custom_call.1} parent=129 // pred_fallthru
          _
        %s787 = sand.u32 %s39, 1
        %s788 = scalar_lea.sflag [#allocation10], %s787
        %s789 = sand.u32 %s143, 1
        %s790 = smul.addr %s789, 16
        %s791 = scalar_lea.vmem [#allocation14], %s790
        // Predicated region
        $region139: #{tpu_custom_call.1} parent=129 // pred_check
          %p792 = pneg %p156
        $region140: #{tpu_custom_call.1} parent=129 // pred_check_branch
          %794 = sbr.rel (%p792) target = $region142
        $region141: #{tpu_custom_call.1} parent=129 // pred_region
          %795 = dma.done %s788, 256
        $region142: #{tpu_custom_call.1} parent=129 // pred_fallthru
          _
        %s796 = sand.u32 %s39, 1
        %s797 = scalar_lea.sflag [#allocation10], %s796
        %s798 = sand.u32 %s169, 1
        %s799 = smul.addr %s798, 16
        %s800 = scalar_lea.vmem [#allocation15], %s799
        // Predicated region
        $region143: #{tpu_custom_call.1} parent=129 // pred_check
          %p801 = pneg %p182
        $region144: #{tpu_custom_call.1} parent=129 // pred_check_branch
          %803 = sbr.rel (%p801) target = $region146
        $region145: #{tpu_custom_call.1} parent=129 // pred_region
          %804 = dma.done %s797, 256
        $region146: #{tpu_custom_call.1} parent=129 // pred_fallthru
          _
        %s805 = sand.u32 %s39, 1
        %s806 = scalar_lea.sflag [#allocation10], %s805
        %s807 = sand.u32 %s195, 1
        %s808 = smul.addr %s807, 2
        %s809 = scalar_lea.vmem [#allocation16], %s808
        // Predicated region
        $region147: #{tpu_custom_call.1} parent=129 // pred_check
          %p810 = pneg %p208
        $region148: #{tpu_custom_call.1} parent=129 // pred_check_branch
          %812 = sbr.rel (%p810) target = $region150
        $region149: #{tpu_custom_call.1} parent=129 // pred_region
          %813 = dma.done %s806, 32
        $region150: #{tpu_custom_call.1} parent=129 // pred_fallthru
          _
        %s814 = sand.u32 %s39, 1
        %s815 = scalar_lea.sflag [#allocation10], %s814
        %s816 = sand.u32 %s221, 1
        %s817 = smul.addr %s816, 2
        %s818 = scalar_lea.vmem [#allocation17], %s817
        // Predicated region
        $region151: #{tpu_custom_call.1} parent=129 // pred_check
          %p819 = pneg %p234
        $region152: #{tpu_custom_call.1} parent=129 // pred_check_branch
          %821 = sbr.rel (%p819) target = $region154
        $region153: #{tpu_custom_call.1} parent=129 // pred_region
          %822 = dma.done %s815, 32
        $region154: #{tpu_custom_call.1} parent=129 // pred_fallthru
          _
        // Predicated region
        $region155: #{tpu_custom_call.1} parent=129 // pred_check
          %p823 = pneg %p255
        $region156: #{tpu_custom_call.1} parent=129 // pred_check_branch
          %825 = sbr.rel (%p823) target = $region158
        $region157: #{tpu_custom_call.1} parent=129 // pred_region
          %826 = dma.done [#allocation13], 256
        $region158: #{tpu_custom_call.1} parent=129 // pred_fallthru
          _
        // Predicated region
        $region159: #{tpu_custom_call.1} parent=129 // pred_check
          %p827 = pneg %p276
        $region160: #{tpu_custom_call.1} parent=129 // pred_check_branch
          %829 = sbr.rel (%p827) target = $region162
        $region161: #{tpu_custom_call.1} parent=129 // pred_region
          %830 = dma.done [#allocation20], 16
        $region162: #{tpu_custom_call.1} parent=129 // pred_fallthru
          _
        // Predicated region
        $region163: #{tpu_custom_call.1} parent=129 // pred_check
          %p831 = pneg %p297
        $region164: #{tpu_custom_call.1} parent=129 // pred_check_branch
          %833 = sbr.rel (%p831) target = $region166
        $region165: #{tpu_custom_call.1} parent=129 // pred_region
          %834 = dma.done [#allocation20], 16
        $region166: #{tpu_custom_call.1} parent=129 // pred_fallthru
          _
        // Predicated region
        $region167: #{tpu_custom_call.1} parent=129 // pred_check
          %p835 = pneg %p402
        $region168: #{tpu_custom_call.1} parent=129 // pred_check_branch
          %837 = sbr.rel (%p835) target = $region170
        $region169: #{tpu_custom_call.1} parent=129 // pred_region
          %838 = dma.done [#allocation23], 32
        $region170: #{tpu_custom_call.1} parent=129 // pred_fallthru
          _
        %s839 = sand.u32 %s39, 1
        %s840 = scalar_lea.sflag [#allocation10], %s839
        %s841 = sand.u32 %s415, 1
        %s842 = smul.addr %s841, 16
        %s843 = scalar_lea.vmem [#allocation24], %s842
        // Predicated region
        $region171: #{tpu_custom_call.1} parent=129 // pred_check
          %p844 = pneg %p428
        $region172: #{tpu_custom_call.1} parent=129 // pred_check_branch
          %846 = sbr.rel (%p844) target = $region174
        $region173: #{tpu_custom_call.1} parent=129 // pred_region
          %847 = dma.done %s840, 256
        $region174: #{tpu_custom_call.1} parent=129 // pred_fallthru
          _
        %s848 = sand.u32 %s441, 1
        %s849 = sand.u32 %s441, 1
        %s850 = smul.addr %s849, 32
        %s851 = scalar_lea.vmem [#allocation25], %s850
        // Predicated region
        $region175: #{tpu_custom_call.1} parent=129 // pred_check
          %p852 = pneg %p454
        $region176: #{tpu_custom_call.1} parent=129 // pred_check_branch
          %854 = sbr.rel (%p852) target = $region178
        $region177: #{tpu_custom_call.1} parent=129 // pred_region
          _
        $region178: #{tpu_custom_call.1} parent=129 // pred_fallthru
          _
        %p855 = pneg %p67
        %p856 = pneg %p64
        %p857 = pneg %p88
        %p858 = pneg %p85
        %p859 = pneg %p109
        %p860 = pneg %p106
        %p861 = pneg %p130
        %p862 = pneg %p127
        %s863 = sand.u32 %s39, 1
        %s864 = scalar_lea.sflag [#allocation10], %s863
        %s865 = sand.u32 %s143, 1
        %s866 = smul.addr %s865, 16
        %s867 = scalar_lea.vmem [#allocation14], %s866
        %p868 = pneg %p156
        %p869 = pneg %p153
        %s870 = sand.u32 %s39, 1
        %s871 = scalar_lea.sflag [#allocation10], %s870
        %s872 = sand.u32 %s169, 1
        %s873 = smul.addr %s872, 16
        %s874 = scalar_lea.vmem [#allocation15], %s873
        %p875 = pneg %p182
        %p876 = pneg %p179
        %s877 = sand.u32 %s39, 1
        %s878 = scalar_lea.sflag [#allocation10], %s877
        %s879 = sand.u32 %s195, 1
        %s880 = smul.addr %s879, 2
        %s881 = scalar_lea.vmem [#allocation16], %s880
        %p882 = pneg %p208
        %p883 = pneg %p205
        %s884 = sand.u32 %s39, 1
        %s885 = scalar_lea.sflag [#allocation10], %s884
        %s886 = sand.u32 %s221, 1
        %s887 = smul.addr %s886, 2
        %s888 = scalar_lea.vmem [#allocation17], %s887
        %p889 = pneg %p234
        %p890 = pneg %p231
        %p891 = pneg %p255
        %p892 = pneg %p252
        %p893 = pneg %p276
        %p894 = pneg %p273
        %p895 = pneg %p297
        %p896 = pneg %p294
        %p897 = pneg %p318
        %p898 = pneg %p315
        %p899 = pneg %p339
        %p900 = pneg %p336
        %p901 = pneg %p360
        %p902 = pneg %p357
        %p903 = pneg %p381
        %p904 = pneg %p378
        %p905 = pneg %p402
        %p906 = pneg %p399
        %s907 = sand.u32 %s39, 1
        %s908 = scalar_lea.sflag [#allocation10], %s907
        %s909 = sand.u32 %s415, 1
        %s910 = smul.addr %s909, 16
        %s911 = scalar_lea.vmem [#allocation24], %s910
        %p912 = pneg %p428
        %p913 = pneg %p425
        %s914 = sand.u32 %s441, 1
        %s915 = sand.u32 %s441, 1
        %s916 = smul.addr %s915, 32
        %s917 = scalar_lea.vmem [#allocation25], %s916
        %p918 = pneg %p454
        %p919 = pneg %p451
        %p920 = scmp.lt.s32.totalorder %s44, 1
        %s921 = scalar_select %p920, %s44, 1
        %s922 = scalar_lea.vmem %s18, %s921
        %p923 = pneg %p480
        %p924 = pneg %p477
        %p925 = pneg %p506
        %p926 = pneg %p503
        %s927 = sand.u32 %s493, 1
        %s928 = scalar_lea.sflag [#allocation11], %s927
        %s929 = sand.u32 %s493, 1
        %s930 = scalar_lea.vmem [#allocation26], %s929
        %p931 = scmp.lt.s32.totalorder %s44, 1
        %s932 = scalar_select %p931, %s44, 1
        %s933 = scalar_lea.vmem %s18, %s932
        %v934 = vld [vmem:[%s791] sm:$0xff]
        %v935 = vld [vmem:[%s791 + $0x8] sm:$0xff]
        %v936 = vld [vmem:[%s809] sm:$0x3]
        %p937 = scmp.eq.s32.totalorder %s44, 0
        // Predicated region
        $region179: #{tpu_custom_call.1} parent=129 // pred_check
          %p938 = pneg %p937
        $region180: #{tpu_custom_call.1} parent=129 // pred_check_branch
          %940 = sbr.rel (%p938) target = $region182
        $region181: #{tpu_custom_call.1} parent=129 // pred_region
          %v941 = vld [vmem:[%s800] sm:$0xff]
          %v942 = vld [vmem:[%s800 + $0x8] sm:$0xff]
          %v943 = vld [vmem:[#allocation18] sm:$0xff]
          %v944 = vld [vmem:[#allocation18 + $0x8] sm:$0xff]
          %v945 = vld [vmem:[#allocation19] sm:$0x1]
          %v947 = vlaneseq
          %v948 = vshrl.u32 %v947, 7
          %v949 = vsub.s32 0, %v948
          %v950 = vrot.slane %v945, %v949
          %vm952 = vcmask 130048
          %v954 = vsel %vm952, %v934, 0
          %v957 = vsel %vm952, %v935, 0
          %959 = vmatprep.subr.mxu0 0.0
          %960 = vmatpush1.msra.mxu0 %v943
          %961 = vmatprep.subr.mxu0 0.0
          %962 = vmatpush1.msra.mxu0 %v944
          %963 = vmatprep.subr.mxu0 0.0
          %964 = vmatpush1.msra.mxu0 0.0
          %965 = vmatprep.subr.mxu0 0.0
          %966 = vmatpush1.msra.mxu0 0.0
          %967 = vmatprep.subr.mxu0 0.0
          %968 = vmatpush1.msra.mxu0 0.0
          %969 = vmatprep.subr.mxu0 0.0
          %970 = vmatpush1.msra.mxu0 0.0
          %971 = vmatprep.subr.mxu0 0.0
          %972 = vmatpush1.msra.mxu0 0.0
          %973 = vmatprep.subr.mxu0 0.0
          %974 = vmatpush1.msra.mxu0 0.0
          %975 = vmatprep.subr.mxu0 0.0
          %976 = vmatpush1.msra.mxu0 0.0
          %977 = vmatprep.subr.mxu0 0.0
          %978 = vmatpush1.msra.mxu0 0.0
          %979 = vmatprep.subr.mxu0 0.0
          %980 = vmatpush1.msra.mxu0 0.0
          %981 = vmatprep.subr.mxu0 0.0
          %982 = vmatpush1.msra.mxu0 0.0
          %983 = vmatprep.subr.mxu0 0.0
          %984 = vmatpush1.msra.mxu0 0.0
          %985 = vmatprep.subr.mxu0 0.0
          %986 = vmatpush1.msra.mxu0 0.0
          %987 = vmatprep.subr.mxu0 0.0
          %988 = vmatpush1.msra.mxu0 0.0
          %989 = vmatprep.subr.mxu0 0.0
          %990 = vmatpush1.msra.mxu0 0.0
          %991 = vmatprep.subr.mxu0 0.0
          %992 = vmatpush1.msra.mxu0 0.0
          %993 = vmatprep.subr.mxu0 0.0
          %994 = vmatpush1.msra.mxu0 0.0
          %995 = vmatprep.subr.mxu0 0.0
          %996 = vmatpush1.msra.mxu0 0.0
          %997 = vmatprep.subr.mxu0 0.0
          %998 = vmatpush1.msra.mxu0 0.0
          %999 = vmatprep.subr.mxu0 0.0
          %1000 = vmatpush1.msra.mxu0 0.0
          %1001 = vmatprep.subr.mxu0 0.0
          %1002 = vmatpush1.msra.mxu0 0.0
          %1003 = vmatprep.subr.mxu0 0.0
          %1004 = vmatpush1.msra.mxu0 0.0
          %1005 = vmatprep.subr.mxu0 0.0
          %1006 = vmatpush1.msra.mxu0 0.0
          %1007 = vmatprep.subr.mxu0 0.0
          %1008 = vmatpush1.msra.mxu0 0.0
          %1009 = vmatprep.subr.mxu0 0.0
          %1010 = vmatpush1.msra.mxu0 0.0
          %1011 = vmatprep.subr.mxu0 0.0
          %1012 = vmatpush1.msra.mxu0 0.0
          %1013 = vmatprep.subr.mxu0 0.0
          %1014 = vmatpush1.msra.mxu0 0.0
          %1015 = vmatprep.subr.mxu0 0.0
          %1016 = vmatpush1.msra.mxu0 0.0
          %1017 = vmatprep.subr.mxu0 0.0
          %1018 = vmatpush1.msra.mxu0 0.0
          %1019 = vmatprep.subr.mxu0 0.0
          %1020 = vmatpush1.msra.mxu0 0.0
          %1021 = vmatprep.subr.mxu0 0.0
          %1022 = vmatpush1.msra.mxu0 0.0
          %1023 = vmatprep.mubr.f32.mxu0 0.0
          %1024 = vmatmul.mubr.f32.gmra.mrb[0].mxu0 %v954
          %v1025 = vpop.f32.mrb[0].mxu0
          %v1026 = vadd.f32 %v950, %v1025
          %v1027 = vpop.f32.mrb[0].mxu0
          %1028 = vmatprep.mubr.f32.mxu0 0.0
          %1029 = vmatmul.mubr.f32.gmra.mrb[0].mxu0 %v957
          %v1030 = vpop.f32.mrb[0].mxu0
          %v1031 = vadd.f32 %v950, %v1030
          %v1032 = vpop.f32.mrb[0].mxu0
          %1033 = vdwg.mxu0
          loop: start=0, step=1, limit=2
          $region183: #{tpu_custom_call.1} parent=181 // loop_pre_header
            _
          $region184: #{tpu_custom_call.1} parent=181 // loop_header
            %s1035 = sphi 0, %s1039
            %p1036 = scmp.ge.s32.totalorder %s1035, 2
            %v1040 = vphi -1e+30, %v1585
            %v1041 = vphi -1e+30, %v1586
            %v1042 = vphi 0.0, %v1875
            %v1043 = vphi 0.0, %v1876
            %v1044 = vphi 0.0, %v2023
            %v1045 = vphi 0.0, %v2024
            %v1046 = vphi 0.0, %v2081
            %v1047 = vphi 0.0, %v2082
          $region185: #{tpu_custom_call.1} parent=181 // loop_header_branch
            %1038 = sbr.rel (%p1036) target = $region189
          $region186: #{tpu_custom_call.1} parent=181 // loop_body
            %s1048 = smul.u32 %s1035, 16
            %s1049 = scalar_lea.vmem %s1, %s1048
            %v1050 = vld [vmem:[%s1049] sm:$0xff]
            %v1051 = vld [vmem:[%s1049 + $0x8] sm:$0xff]
            %s1052 = scalar_lea.vmem %s0, %s1048
            %v1053 = vld [vmem:[%s1052] sm:$0xff]
            %v1054 = vld [vmem:[%s1052 + $0x8] sm:$0xff]
            %s1055 = smul.u32 %s1035, 2
            %s1056 = scalar_lea.vmem [#allocation9], %s1055
            %v1057 = vld [vmem:[%s1056] sm:$0x3]
            %s1058 = scalar_lea.vmem [#allocation12], %s1055
            %v1059 = vld [vmem:[%s1058] sm:$0x3]
            %v1062 = vcombine.high %v1026, %v1026
            %v1064 = vunpack.c.l.s4 1966171168
            %v1065 = vunpack.c.0.s8 %v1064
            %v1066 = vlaneseq
            %v1067 = vshrl.u32 %v1066, 7
            %v1068 = vsub.s32 %v1065, %v1067
            %v1069 = vrot.slane %v1026, %v1068
            %v1071 = vunpack.c.l.s4 1966171168
            %v1072 = vunpack.c.0.s8 %v1071
            %v1073 = vlaneseq
            %v1074 = vshrl.u32 %v1073, 7
            %v1075 = vsub.s32 %v1072, %v1074
            %v1076 = vrot.slane %v1062, %v1075
            %v1077 = vcombine.high %v1069, %v1069
            %v1078 = vcombine.high %v1076, %v1076
            %v1080 = vunpack.c.l.s4 1966171168
            %v1081 = vunpack.c.0.s8 %v1080
            %v1082 = vlaneseq
            %v1083 = vshrl.u32 %v1082, 7
            %v1084 = vsub.s32 %v1081, %v1083
            %v1085 = vrot.slane %v1069, %v1084
            %v1087 = vunpack.c.l.s4 1966171168
            %v1088 = vunpack.c.0.s8 %v1087
            %v1089 = vlaneseq
            %v1090 = vshrl.u32 %v1089, 7
            %v1091 = vsub.s32 %v1088, %v1090
            %v1092 = vrot.slane %v1076, %v1091
            %v1094 = vunpack.c.l.s4 1966171168
            %v1095 = vunpack.c.0.s8 %v1094
            %v1096 = vlaneseq
            %v1097 = vshrl.u32 %v1096, 7
            %v1098 = vsub.s32 %v1095, %v1097
            %v1099 = vrot.slane %v1077, %v1098
            %v1101 = vunpack.c.l.s4 1966171168
            %v1102 = vunpack.c.0.s8 %v1101
            %v1103 = vlaneseq
            %v1104 = vshrl.u32 %v1103, 7
            %v1105 = vsub.s32 %v1102, %v1104
            %v1106 = vrot.slane %v1078, %v1105
            %v1107 = vcombine.high %v1085, %v1085
            %v1108 = vcombine.high %v1092, %v1092
            %v1109 = vcombine.high %v1099, %v1099
            %v1110 = vcombine.high %v1106, %v1106
            %v1111 = vcombine.high %v1031, %v1031
            %v1113 = vunpack.c.l.s4 1966171168
            %v1114 = vunpack.c.0.s8 %v1113
            %v1115 = vlaneseq
            %v1116 = vshrl.u32 %v1115, 7
            %v1117 = vsub.s32 %v1114, %v1116
            %v1118 = vrot.slane %v1031, %v1117
            %v1120 = vunpack.c.l.s4 1966171168
            %v1121 = vunpack.c.0.s8 %v1120
            %v1122 = vlaneseq
            %v1123 = vshrl.u32 %v1122, 7
            %v1124 = vsub.s32 %v1121, %v1123
            %v1125 = vrot.slane %v1111, %v1124
            %v1126 = vcombine.high %v1118, %v1118
            %v1127 = vcombine.high %v1125, %v1125
            %v1129 = vunpack.c.l.s4 1966171168
            %v1130 = vunpack.c.0.s8 %v1129
            %v1131 = vlaneseq
            %v1132 = vshrl.u32 %v1131, 7
            %v1133 = vsub.s32 %v1130, %v1132
            %v1134 = vrot.slane %v1118, %v1133
            %v1136 = vunpack.c.l.s4 1966171168
            %v1137 = vunpack.c.0.s8 %v1136
            %v1138 = vlaneseq
            %v1139 = vshrl.u32 %v1138, 7
            %v1140 = vsub.s32 %v1137, %v1139
            %v1141 = vrot.slane %v1125, %v1140
            %v1143 = vunpack.c.l.s4 1966171168
            %v1144 = vunpack.c.0.s8 %v1143
            %v1145 = vlaneseq
            %v1146 = vshrl.u32 %v1145, 7
            %v1147 = vsub.s32 %v1144, %v1146
            %v1148 = vrot.slane %v1126, %v1147
            %v1150 = vunpack.c.l.s4 1966171168
            %v1151 = vunpack.c.0.s8 %v1150
            %v1152 = vlaneseq
            %v1153 = vshrl.u32 %v1152, 7
            %v1154 = vsub.s32 %v1151, %v1153
            %v1155 = vrot.slane %v1127, %v1154
            %v1156 = vcombine.high %v1134, %v1134
            %v1157 = vcombine.high %v1141, %v1141
            %v1158 = vcombine.high %v1148, %v1148
            %v1159 = vcombine.high %v1155, %v1155
            %v1160 = vlaneseq
            %v1161 = vshrl.u32 %v1160, 7
            %v1162 = vsub.s32 0, %v1161
            %v1163 = vrot.slane %v1085, %v1162
            %v1164 = vlaneseq
            %v1165 = vshrl.u32 %v1164, 7
            %v1166 = vsub.s32 0, %v1165
            %v1167 = vrot.slane %v1099, %v1166
            %v1168 = vlaneseq
            %v1169 = vshrl.u32 %v1168, 7
            %v1170 = vsub.s32 0, %v1169
            %v1171 = vrot.slane %v1107, %v1170
            %v1172 = vlaneseq
            %v1173 = vshrl.u32 %v1172, 7
            %v1174 = vsub.s32 0, %v1173
            %v1175 = vrot.slane %v1109, %v1174
            %v1176 = vlaneseq
            %v1177 = vshrl.u32 %v1176, 7
            %v1178 = vsub.s32 0, %v1177
            %v1179 = vrot.slane %v1092, %v1178
            %v1180 = vlaneseq
            %v1181 = vshrl.u32 %v1180, 7
            %v1182 = vsub.s32 0, %v1181
            %v1183 = vrot.slane %v1106, %v1182
            %v1184 = vlaneseq
            %v1185 = vshrl.u32 %v1184, 7
            %v1186 = vsub.s32 0, %v1185
            %v1187 = vrot.slane %v1108, %v1186
            %v1188 = vlaneseq
            %v1189 = vshrl.u32 %v1188, 7
            %v1190 = vsub.s32 0, %v1189
            %v1191 = vrot.slane %v1110, %v1190
            %v1192 = vlaneseq
            %v1193 = vshrl.u32 %v1192, 7
            %v1194 = vsub.s32 0, %v1193
            %v1195 = vrot.slane %v1134, %v1194
            %v1196 = vlaneseq
            %v1197 = vshrl.u32 %v1196, 7
            %v1198 = vsub.s32 0, %v1197
            %v1199 = vrot.slane %v1148, %v1198
            %v1200 = vlaneseq
            %v1201 = vshrl.u32 %v1200, 7
            %v1202 = vsub.s32 0, %v1201
            %v1203 = vrot.slane %v1156, %v1202
            %v1204 = vlaneseq
            %v1205 = vshrl.u32 %v1204, 7
            %v1206 = vsub.s32 0, %v1205
            %v1207 = vrot.slane %v1158, %v1206
            %v1208 = vlaneseq
            %v1209 = vshrl.u32 %v1208, 7
            %v1210 = vsub.s32 0, %v1209
            %v1211 = vrot.slane %v1141, %v1210
            %v1212 = vlaneseq
            %v1213 = vshrl.u32 %v1212, 7
            %v1214 = vsub.s32 0, %v1213
            %v1215 = vrot.slane %v1155, %v1214
            %v1216 = vlaneseq
            %v1217 = vshrl.u32 %v1216, 7
            %v1218 = vsub.s32 0, %v1217
            %v1219 = vrot.slane %v1157, %v1218
            %v1220 = vlaneseq
            %v1221 = vshrl.u32 %v1220, 7
            %v1222 = vsub.s32 0, %v1221
            %v1223 = vrot.slane %v1159, %v1222
            %v1240 = vadd.f32 %v1050, %v1163
            %v1241 = vadd.f32 %v1050, %v1167
            %v1242 = vadd.f32 %v1050, %v1171
            %v1243 = vadd.f32 %v1050, %v1175
            %v1244 = vadd.f32 %v1050, %v1179
            %v1245 = vadd.f32 %v1050, %v1183
            %v1246 = vadd.f32 %v1050, %v1187
            %v1247 = vadd.f32 %v1050, %v1191
            %v1248 = vadd.f32 %v1051, %v1195
            %v1249 = vadd.f32 %v1051, %v1199
            %v1250 = vadd.f32 %v1051, %v1203
            %v1251 = vadd.f32 %v1051, %v1207
            %v1252 = vadd.f32 %v1051, %v1211
            %v1253 = vadd.f32 %v1051, %v1215
            %v1254 = vadd.f32 %v1051, %v1219
            %v1255 = vadd.f32 %v1051, %v1223
            %v1256 = vtanh.pop %v1240
            %v1257 = vtanh.pop %v1241
            %v1258 = vtanh.pop %v1242
            %v1259 = vtanh.pop %v1243
            %v1260 = vtanh.pop %v1244
            %v1261 = vtanh.pop %v1245
            %v1262 = vtanh.pop %v1246
            %v1263 = vtanh.pop %v1247
            %v1264 = vtanh.pop %v1248
            %v1265 = vtanh.pop %v1249
            %v1266 = vtanh.pop %v1250
            %v1267 = vtanh.pop %v1251
            %v1268 = vtanh.pop %v1252
            %v1269 = vtanh.pop %v1253
            %v1270 = vtanh.pop %v1254
            %v1271 = vtanh.pop %v1255
            %v1272 = vld [vmem:[#allocation21] sm:$0x1]
            %v1274 = vlaneseq
            %v1275 = vshrl.u32 %v1274, 7
            %v1276 = vsub.s32 0, %v1275
            %v1277 = vrot.slane %v1272, %v1276
            %v1279 = vmul.f32 %v1256, %v1277
            %v1280 = vmul.f32 %v1257, %v1277
            %v1281 = vmul.f32 %v1258, %v1277
            %v1282 = vmul.f32 %v1259, %v1277
            %v1283 = vmul.f32 %v1260, %v1277
            %v1284 = vmul.f32 %v1261, %v1277
            %v1285 = vmul.f32 %v1262, %v1277
            %v1286 = vmul.f32 %v1263, %v1277
            %v1287 = vmul.f32 %v1264, %v1277
            %v1288 = vmul.f32 %v1265, %v1277
            %v1289 = vmul.f32 %v1266, %v1277
            %v1290 = vmul.f32 %v1267, %v1277
            %v1291 = vmul.f32 %v1268, %v1277
            %v1292 = vmul.f32 %v1269, %v1277
            %v1293 = vmul.f32 %v1270, %v1277
            %v1294 = vmul.f32 %v1271, %v1277
            %vm1295 = vcmask 261120
            %v1296 = vsel %vm1295, %v1279, 0.0
            %1297 = vadd.xlane.f32.xlu0 %v1296
            %v1298 = vpop.xlane.xlu0 %1297
            %v1299 = vsel %vm1295, %v1280, 0.0
            %1300 = vadd.xlane.f32.xlu0 %v1299
            %v1301 = vpop.xlane.xlu0 %1300
            %v1302 = vsel %vm1295, %v1281, 0.0
            %1303 = vadd.xlane.f32.xlu0 %v1302
            %v1304 = vpop.xlane.xlu0 %1303
            %v1305 = vsel %vm1295, %v1282, 0.0
            %1306 = vadd.xlane.f32.xlu0 %v1305
            %v1307 = vpop.xlane.xlu0 %1306
            %v1308 = vsel %vm1295, %v1283, 0.0
            %1309 = vadd.xlane.f32.xlu0 %v1308
            %v1310 = vpop.xlane.xlu0 %1309
            %v1311 = vsel %vm1295, %v1284, 0.0
            %1312 = vadd.xlane.f32.xlu0 %v1311
            %v1313 = vpop.xlane.xlu0 %1312
            %v1314 = vsel %vm1295, %v1285, 0.0
            %1315 = vadd.xlane.f32.xlu0 %v1314
            %v1316 = vpop.xlane.xlu0 %1315
            %v1317 = vsel %vm1295, %v1286, 0.0
            %1318 = vadd.xlane.f32.xlu0 %v1317
            %v1319 = vpop.xlane.xlu0 %1318
            %v1320 = vsel %vm1295, %v1287, 0.0
            %1321 = vadd.xlane.f32.xlu0 %v1320
            %v1322 = vpop.xlane.xlu0 %1321
            %v1323 = vsel %vm1295, %v1288, 0.0
            %1324 = vadd.xlane.f32.xlu0 %v1323
            %v1325 = vpop.xlane.xlu0 %1324
            %v1326 = vsel %vm1295, %v1289, 0.0
            %1327 = vadd.xlane.f32.xlu0 %v1326
            %v1328 = vpop.xlane.xlu0 %1327
            %v1329 = vsel %vm1295, %v1290, 0.0
            %1330 = vadd.xlane.f32.xlu0 %v1329
            %v1331 = vpop.xlane.xlu0 %1330
            %v1332 = vsel %vm1295, %v1291, 0.0
            %1333 = vadd.xlane.f32.xlu0 %v1332
            %v1334 = vpop.xlane.xlu0 %1333
            %v1335 = vsel %vm1295, %v1292, 0.0
            %1336 = vadd.xlane.f32.xlu0 %v1335
            %v1337 = vpop.xlane.xlu0 %1336
            %v1338 = vsel %vm1295, %v1293, 0.0
            %1339 = vadd.xlane.f32.xlu0 %v1338
            %v1340 = vpop.xlane.xlu0 %1339
            %v1341 = vsel %vm1295, %v1294, 0.0
            %1342 = vadd.xlane.f32.xlu0 %v1341
            %v1343 = vpop.xlane.xlu0 %1342
            %v1344 = vld [vmem:[#allocation8] sm:$0x1]
            %v1346 = vlaneseq
            %v1347 = vshrl.u32 %v1346, 7
            %v1348 = vsub.s32 0, %v1347
            %v1349 = vrot.slane %v1344, %v1348
            %1350 = vset.pattern.permute.xlu0 0
            %1351 = vperm.xlu0 %1350, %v1349
            %v1352 = vpop.permute.xlu0 %1351
            %v1354 = vadd.f32 %v1298, %v1352
            %v1355 = vadd.f32 %v1301, %v1352
            %v1356 = vadd.f32 %v1304, %v1352
            %v1357 = vadd.f32 %v1307, %v1352
            %v1358 = vadd.f32 %v1310, %v1352
            %v1359 = vadd.f32 %v1313, %v1352
            %v1360 = vadd.f32 %v1316, %v1352
            %v1361 = vadd.f32 %v1319, %v1352
            %v1362 = vadd.f32 %v1322, %v1352
            %v1363 = vadd.f32 %v1325, %v1352
            %v1364 = vadd.f32 %v1328, %v1352
            %v1365 = vadd.f32 %v1331, %v1352
            %v1366 = vadd.f32 %v1334, %v1352
            %v1367 = vadd.f32 %v1337, %v1352
            %v1368 = vadd.f32 %v1340, %v1352
            %v1369 = vadd.f32 %v1343, %v1352
            %v1372 = vunpack.c.l.s4 1966171168
            %v1373 = vunpack.c.0.s8 %v1372
            %v1374 = vlaneseq
            %v1375 = vshrl.u32 %v1374, 7
            %v1376 = vsub.s32 %v1373, %v1375
            %v1377 = vrot.slane %v1057, %v1376
            %v1378 = vcombine.high %v1377, %v1377
            %v1380 = vunpack.c.l.s4 1966171168
            %v1381 = vunpack.c.0.s8 %v1380
            %v1382 = vlaneseq
            %v1383 = vshrl.u32 %v1382, 7
            %v1384 = vsub.s32 %v1381, %v1383
            %v1385 = vrot.slane %v1377, %v1384
            %v1387 = vunpack.c.l.s4 1966171168
            %v1388 = vunpack.c.0.s8 %v1387
            %v1389 = vlaneseq
            %v1390 = vshrl.u32 %v1389, 7
            %v1391 = vsub.s32 %v1388, %v1390
            %v1392 = vrot.slane %v1378, %v1391
            %v1393 = vlaneseq
            %v1394 = vshrl.u32 %v1393, 7
            %v1395 = vsub.s32 0, %v1394
            %v1396 = vrot.slane %v1385, %v1395
            %v1397 = vlaneseq
            %v1398 = vshrl.u32 %v1397, 7
            %v1399 = vsub.s32 0, %v1398
            %v1400 = vrot.slane %v1392, %v1399
            %1402 = vbcast.lane.b32.xlu0 %v1396, 256
            %v1403 = vpop.permute.xlu0 %1402
            %1405 = vbcast.lane.b32.xlu0 %v1400, 256
            %v1406 = vpop.permute.xlu0 %1405
            %v1409 = vadd.f32 %v1354, %v1403
            %v1410 = vadd.f32 %v1355, %v1403
            %v1411 = vadd.f32 %v1356, %v1403
            %v1412 = vadd.f32 %v1357, %v1403
            %v1413 = vadd.f32 %v1358, %v1403
            %v1414 = vadd.f32 %v1359, %v1403
            %v1415 = vadd.f32 %v1360, %v1403
            %v1416 = vadd.f32 %v1361, %v1403
            %v1417 = vadd.f32 %v1362, %v1406
            %v1418 = vadd.f32 %v1363, %v1406
            %v1419 = vadd.f32 %v1364, %v1406
            %v1420 = vadd.f32 %v1365, %v1406
            %v1421 = vadd.f32 %v1366, %v1406
            %v1422 = vadd.f32 %v1367, %v1406
            %v1423 = vadd.f32 %v1368, %v1406
            %v1424 = vadd.f32 %v1369, %v1406
            %1441 = vset.pattern.permute.xlu0 0
            %1442 = vperm.xlu0 %1441, %v1409
            %v1443 = vpop.permute.xlu0 %1442
            %1444 = vset.pattern.permute.xlu0 0
            %1445 = vperm.xlu0 %1444, %v1410
            %v1446 = vpop.permute.xlu0 %1445
            %1447 = vset.pattern.permute.xlu0 0
            %1448 = vperm.xlu0 %1447, %v1411
            %v1449 = vpop.permute.xlu0 %1448
            %1450 = vset.pattern.permute.xlu0 0
            %1451 = vperm.xlu0 %1450, %v1412
            %v1452 = vpop.permute.xlu0 %1451
            %1453 = vset.pattern.permute.xlu0 0
            %1454 = vperm.xlu0 %1453, %v1413
            %v1455 = vpop.permute.xlu0 %1454
            %1456 = vset.pattern.permute.xlu0 0
            %1457 = vperm.xlu0 %1456, %v1414
            %v1458 = vpop.permute.xlu0 %1457
            %1459 = vset.pattern.permute.xlu0 0
            %1460 = vperm.xlu0 %1459, %v1415
            %v1461 = vpop.permute.xlu0 %1460
            %1462 = vset.pattern.permute.xlu0 0
            %1463 = vperm.xlu0 %1462, %v1416
            %v1464 = vpop.permute.xlu0 %1463
            %1465 = vset.pattern.permute.xlu0 0
            %1466 = vperm.xlu0 %1465, %v1417
            %v1467 = vpop.permute.xlu0 %1466
            %1468 = vset.pattern.permute.xlu0 0
            %1469 = vperm.xlu0 %1468, %v1418
            %v1470 = vpop.permute.xlu0 %1469
            %1471 = vset.pattern.permute.xlu0 0
            %1472 = vperm.xlu0 %1471, %v1419
            %v1473 = vpop.permute.xlu0 %1472
            %1474 = vset.pattern.permute.xlu0 0
            %1475 = vperm.xlu0 %1474, %v1420
            %v1476 = vpop.permute.xlu0 %1475
            %1477 = vset.pattern.permute.xlu0 0
            %1478 = vperm.xlu0 %1477, %v1421
            %v1479 = vpop.permute.xlu0 %1478
            %1480 = vset.pattern.permute.xlu0 0
            %1481 = vperm.xlu0 %1480, %v1422
            %v1482 = vpop.permute.xlu0 %1481
            %1483 = vset.pattern.permute.xlu0 0
            %1484 = vperm.xlu0 %1483, %v1423
            %v1485 = vpop.permute.xlu0 %1484
            %1486 = vset.pattern.permute.xlu0 0
            %1487 = vperm.xlu0 %1486, %v1424
            %v1488 = vpop.permute.xlu0 %1487
            %v1489 = vlaneseq
            %v1490 = vand.u32 %v1489, 127
            %v1491 = vlaneseq
            %v1492 = vshrl.u32 %v1491, 7
            %v1493 = vsub.s32 %v1490, %v1492
            %v1494 = vrot.slane %v1443, %v1493
            %v1495 = vlaneseq
            %v1496 = vshrl.u32 %v1495, 7
            %v1497 = vsub.s32 %v1490, %v1496
            %v1498 = vrot.slane %v1446, %v1497
            %v1499 = vlaneseq
            %v1500 = vshrl.u32 %v1499, 7
            %v1501 = vsub.s32 %v1490, %v1500
            %v1502 = vrot.slane %v1449, %v1501
            %v1503 = vlaneseq
            %v1504 = vshrl.u32 %v1503, 7
            %v1505 = vsub.s32 %v1490, %v1504
            %v1506 = vrot.slane %v1452, %v1505
            %v1507 = vlaneseq
            %v1508 = vshrl.u32 %v1507, 7
            %v1509 = vsub.s32 %v1490, %v1508
            %v1510 = vrot.slane %v1455, %v1509
            %v1511 = vlaneseq
            %v1512 = vshrl.u32 %v1511, 7
            %v1513 = vsub.s32 %v1490, %v1512
            %v1514 = vrot.slane %v1458, %v1513
            %v1515 = vlaneseq
            %v1516 = vshrl.u32 %v1515, 7
            %v1517 = vsub.s32 %v1490, %v1516
            %v1518 = vrot.slane %v1461, %v1517
            %v1519 = vlaneseq
            %v1520 = vshrl.u32 %v1519, 7
            %v1521 = vsub.s32 %v1490, %v1520
            %v1522 = vrot.slane %v1464, %v1521
            %v1523 = vlaneseq
            %v1524 = vshrl.u32 %v1523, 7
            %v1525 = vsub.s32 %v1490, %v1524
            %v1526 = vrot.slane %v1467, %v1525
            %v1527 = vlaneseq
            %v1528 = vshrl.u32 %v1527, 7
            %v1529 = vsub.s32 %v1490, %v1528
            %v1530 = vrot.slane %v1470, %v1529
            %v1531 = vlaneseq
            %v1532 = vshrl.u32 %v1531, 7
            %v1533 = vsub.s32 %v1490, %v1532
            %v1534 = vrot.slane %v1473, %v1533
            %v1535 = vlaneseq
            %v1536 = vshrl.u32 %v1535, 7
            %v1537 = vsub.s32 %v1490, %v1536
            %v1538 = vrot.slane %v1476, %v1537
            %v1539 = vlaneseq
            %v1540 = vshrl.u32 %v1539, 7
            %v1541 = vsub.s32 %v1490, %v1540
            %v1542 = vrot.slane %v1479, %v1541
            %v1543 = vlaneseq
            %v1544 = vshrl.u32 %v1543, 7
            %v1545 = vsub.s32 %v1490, %v1544
            %v1546 = vrot.slane %v1482, %v1545
            %v1547 = vlaneseq
            %v1548 = vshrl.u32 %v1547, 7
            %v1549 = vsub.s32 %v1490, %v1548
            %v1550 = vrot.slane %v1485, %v1549
            %v1551 = vlaneseq
            %v1552 = vshrl.u32 %v1551, 7
            %v1553 = vsub.s32 %v1490, %v1552
            %v1554 = vrot.slane %v1488, %v1553
            %vm1555 = vcmask 1041409
            %v1556 = vsel %vm1555, %v1498, %v1494
            %vm1557 = vcmask 1042434
            %v1558 = vsel %vm1557, %v1502, %v1556
            %vm1559 = vcmask 1043459
            %v1560 = vsel %vm1559, %v1506, %v1558
            %vm1561 = vcmask 1044484
            %v1562 = vsel %vm1561, %v1510, %v1560
            %vm1563 = vcmask 1045509
            %v1564 = vsel %vm1563, %v1514, %v1562
            %vm1565 = vcmask 1046534
            %v1566 = vsel %vm1565, %v1518, %v1564
            %vm1567 = vcmask 1047559
            %v1568 = vsel %vm1567, %v1522, %v1566
            %v1569 = vsel %vm1555, %v1530, %v1526
            %v1570 = vsel %vm1557, %v1534, %v1569
            %v1571 = vsel %vm1559, %v1538, %v1570
            %v1572 = vsel %vm1561, %v1542, %v1571
            %v1573 = vsel %vm1563, %v1546, %v1572
            %v1574 = vsel %vm1565, %v1550, %v1573
            %v1575 = vsel %vm1567, %v1554, %v1574
            %vm1578 = vcmask 64512
            %v1579 = vsel %vm1578, %v1568, -inf
            %1580 = vmax.xlane.f32.xlu0 %v1579
            %v1581 = vpop.xlane.xlu0 %1580
            %v1582 = vsel %vm1578, %v1575, -inf
            %1583 = vmax.xlane.f32.xlu0 %v1582
            %v1584 = vpop.xlane.xlu0 %1583
            %v1585 = vmax.f32 %v1040, %v1581
            %v1586 = vmax.f32 %v1041, %v1584
            %v1587 = vsub.f32 %v1040, %v1585
            %v1588 = vsub.f32 %v1041, %v1586
            %v1589 = vmul.f32 %v1587, 1.442695
            %v1590 = vpow.pop %v1589
            %v1591 = vmul.f32 %v1588, 1.442695
            %v1592 = vpow.pop %v1591
            %v1595 = vlaneseq
            %v1596 = vshrl.u32 %v1595, 7
            %v1597 = vsub.s32 0, %v1596
            %v1598 = vrot.slane %v1585, %v1597
            %v1599 = vlaneseq
            %v1600 = vshrl.u32 %v1599, 7
            %v1601 = vsub.s32 1, %v1600
            %v1602 = vrot.slane %v1585, %v1601
            %v1603 = vlaneseq
            %v1604 = vshrl.u32 %v1603, 7
            %v1605 = vsub.s32 2, %v1604
            %v1606 = vrot.slane %v1585, %v1605
            %v1607 = vlaneseq
            %v1608 = vshrl.u32 %v1607, 7
            %v1609 = vsub.s32 3, %v1608
            %v1610 = vrot.slane %v1585, %v1609
            %v1611 = vlaneseq
            %v1612 = vshrl.u32 %v1611, 7
            %v1613 = vsub.s32 4, %v1612
            %v1614 = vrot.slane %v1585, %v1613
            %v1615 = vlaneseq
            %v1616 = vshrl.u32 %v1615, 7
            %v1617 = vsub.s32 5, %v1616
            %v1618 = vrot.slane %v1585, %v1617
            %v1619 = vlaneseq
            %v1620 = vshrl.u32 %v1619, 7
            %v1621 = vsub.s32 6, %v1620
            %v1622 = vrot.slane %v1585, %v1621
            %v1623 = vlaneseq
            %v1624 = vshrl.u32 %v1623, 7
            %v1625 = vsub.s32 7, %v1624
            %v1626 = vrot.slane %v1585, %v1625
            %v1627 = vlaneseq
            %v1628 = vshrl.u32 %v1627, 7
            %v1629 = vsub.s32 0, %v1628
            %v1630 = vrot.slane %v1586, %v1629
            %v1631 = vlaneseq
            %v1632 = vshrl.u32 %v1631, 7
            %v1633 = vsub.s32 1, %v1632
            %v1634 = vrot.slane %v1586, %v1633
            %v1635 = vlaneseq
            %v1636 = vshrl.u32 %v1635, 7
            %v1637 = vsub.s32 2, %v1636
            %v1638 = vrot.slane %v1586, %v1637
            %v1639 = vlaneseq
            %v1640 = vshrl.u32 %v1639, 7
            %v1641 = vsub.s32 3, %v1640
            %v1642 = vrot.slane %v1586, %v1641
            %v1643 = vlaneseq
            %v1644 = vshrl.u32 %v1643, 7
            %v1645 = vsub.s32 4, %v1644
            %v1646 = vrot.slane %v1586, %v1645
            %v1647 = vlaneseq
            %v1648 = vshrl.u32 %v1647, 7
            %v1649 = vsub.s32 5, %v1648
            %v1650 = vrot.slane %v1586, %v1649
            %v1651 = vlaneseq
            %v1652 = vshrl.u32 %v1651, 7
            %v1653 = vsub.s32 6, %v1652
            %v1654 = vrot.slane %v1586, %v1653
            %v1655 = vlaneseq
            %v1656 = vshrl.u32 %v1655, 7
            %v1657 = vsub.s32 7, %v1656
            %v1658 = vrot.slane %v1586, %v1657
            %v1675 = vsub.f32 %v1409, %v1598
            %v1676 = vsub.f32 %v1410, %v1602
            %v1677 = vsub.f32 %v1411, %v1606
            %v1678 = vsub.f32 %v1412, %v1610
            %v1679 = vsub.f32 %v1413, %v1614
            %v1680 = vsub.f32 %v1414, %v1618
            %v1681 = vsub.f32 %v1415, %v1622
            %v1682 = vsub.f32 %v1416, %v1626
            %v1683 = vsub.f32 %v1417, %v1630
            %v1684 = vsub.f32 %v1418, %v1634
            %v1685 = vsub.f32 %v1419, %v1638
            %v1686 = vsub.f32 %v1420, %v1642
            %v1687 = vsub.f32 %v1421, %v1646
            %v1688 = vsub.f32 %v1422, %v1650
            %v1689 = vsub.f32 %v1423, %v1654
            %v1690 = vsub.f32 %v1424, %v1658
            %v1691 = vmul.f32 %v1675, 1.442695
            %v1692 = vpow.pop %v1691
            %v1693 = vmul.f32 %v1676, 1.442695
            %v1694 = vpow.pop %v1693
            %v1695 = vmul.f32 %v1677, 1.442695
            %v1696 = vpow.pop %v1695
            %v1697 = vmul.f32 %v1678, 1.442695
            %v1698 = vpow.pop %v1697
            %v1699 = vmul.f32 %v1679, 1.442695
            %v1700 = vpow.pop %v1699
            %v1701 = vmul.f32 %v1680, 1.442695
            %v1702 = vpow.pop %v1701
            %v1703 = vmul.f32 %v1681, 1.442695
            %v1704 = vpow.pop %v1703
            %v1705 = vmul.f32 %v1682, 1.442695
            %v1706 = vpow.pop %v1705
            %v1707 = vmul.f32 %v1683, 1.442695
            %v1708 = vpow.pop %v1707
            %v1709 = vmul.f32 %v1684, 1.442695
            %v1710 = vpow.pop %v1709
            %v1711 = vmul.f32 %v1685, 1.442695
            %v1712 = vpow.pop %v1711
            %v1713 = vmul.f32 %v1686, 1.442695
            %v1714 = vpow.pop %v1713
            %v1715 = vmul.f32 %v1687, 1.442695
            %v1716 = vpow.pop %v1715
            %v1717 = vmul.f32 %v1688, 1.442695
            %v1718 = vpow.pop %v1717
            %v1719 = vmul.f32 %v1689, 1.442695
            %v1720 = vpow.pop %v1719
            %v1721 = vmul.f32 %v1690, 1.442695
            %v1722 = vpow.pop %v1721
            %v1723 = vmul.f32 %v1590, %v1042
            %v1724 = vmul.f32 %v1592, %v1043
            %1741 = vset.pattern.permute.xlu0 0
            %1742 = vperm.xlu0 %1741, %v1692
            %v1743 = vpop.permute.xlu0 %1742
            %1744 = vset.pattern.permute.xlu0 0
            %1745 = vperm.xlu0 %1744, %v1694
            %v1746 = vpop.permute.xlu0 %1745
            %1747 = vset.pattern.permute.xlu0 0
            %1748 = vperm.xlu0 %1747, %v1696
            %v1749 = vpop.permute.xlu0 %1748
            %1750 = vset.pattern.permute.xlu0 0
            %1751 = vperm.xlu0 %1750, %v1698
            %v1752 = vpop.permute.xlu0 %1751
            %1753 = vset.pattern.permute.xlu0 0
            %1754 = vperm.xlu0 %1753, %v1700
            %v1755 = vpop.permute.xlu0 %1754
            %1756 = vset.pattern.permute.xlu0 0
            %1757 = vperm.xlu0 %1756, %v1702
            %v1758 = vpop.permute.xlu0 %1757
            %1759 = vset.pattern.permute.xlu0 0
            %1760 = vperm.xlu0 %1759, %v1704
            %v1761 = vpop.permute.xlu0 %1760
            %1762 = vset.pattern.permute.xlu0 0
            %1763 = vperm.xlu0 %1762, %v1706
            %v1764 = vpop.permute.xlu0 %1763
            %1765 = vset.pattern.permute.xlu0 0
            %1766 = vperm.xlu0 %1765, %v1708
            %v1767 = vpop.permute.xlu0 %1766
            %1768 = vset.pattern.permute.xlu0 0
            %1769 = vperm.xlu0 %1768, %v1710
            %v1770 = vpop.permute.xlu0 %1769
            %1771 = vset.pattern.permute.xlu0 0
            %1772 = vperm.xlu0 %1771, %v1712
            %v1773 = vpop.permute.xlu0 %1772
            %1774 = vset.pattern.permute.xlu0 0
            %1775 = vperm.xlu0 %1774, %v1714
            %v1776 = vpop.permute.xlu0 %1775
            %1777 = vset.pattern.permute.xlu0 0
            %1778 = vperm.xlu0 %1777, %v1716
            %v1779 = vpop.permute.xlu0 %1778
            %1780 = vset.pattern.permute.xlu0 0
            %1781 = vperm.xlu0 %1780, %v1718
            %v1782 = vpop.permute.xlu0 %1781
            %1783 = vset.pattern.permute.xlu0 0
            %1784 = vperm.xlu0 %1783, %v1720
            %v1785 = vpop.permute.xlu0 %1784
            %1786 = vset.pattern.permute.xlu0 0
            %1787 = vperm.xlu0 %1786, %v1722
            %v1788 = vpop.permute.xlu0 %1787
            %v1789 = vlaneseq
            %v1790 = vshrl.u32 %v1789, 7
            %v1791 = vsub.s32 %v1490, %v1790
            %v1792 = vrot.slane %v1743, %v1791
            %v1793 = vlaneseq
            %v1794 = vshrl.u32 %v1793, 7
            %v1795 = vsub.s32 %v1490, %v1794
            %v1796 = vrot.slane %v1746, %v1795
            %v1797 = vlaneseq
            %v1798 = vshrl.u32 %v1797, 7
            %v1799 = vsub.s32 %v1490, %v1798
            %v1800 = vrot.slane %v1749, %v1799
            %v1801 = vlaneseq
            %v1802 = vshrl.u32 %v1801, 7
            %v1803 = vsub.s32 %v1490, %v1802
            %v1804 = vrot.slane %v1752, %v1803
            %v1805 = vlaneseq
            %v1806 = vshrl.u32 %v1805, 7
            %v1807 = vsub.s32 %v1490, %v1806
            %v1808 = vrot.slane %v1755, %v1807
            %v1809 = vlaneseq
            %v1810 = vshrl.u32 %v1809, 7
            %v1811 = vsub.s32 %v1490, %v1810
            %v1812 = vrot.slane %v1758, %v1811
            %v1813 = vlaneseq
            %v1814 = vshrl.u32 %v1813, 7
            %v1815 = vsub.s32 %v1490, %v1814
            %v1816 = vrot.slane %v1761, %v1815
            %v1817 = vlaneseq
            %v1818 = vshrl.u32 %v1817, 7
            %v1819 = vsub.s32 %v1490, %v1818
            %v1820 = vrot.slane %v1764, %v1819
            %v1821 = vlaneseq
            %v1822 = vshrl.u32 %v1821, 7
            %v1823 = vsub.s32 %v1490, %v1822
            %v1824 = vrot.slane %v1767, %v1823
            %v1825 = vlaneseq
            %v1826 = vshrl.u32 %v1825, 7
            %v1827 = vsub.s32 %v1490, %v1826
            %v1828 = vrot.slane %v1770, %v1827
            %v1829 = vlaneseq
            %v1830 = vshrl.u32 %v1829, 7
            %v1831 = vsub.s32 %v1490, %v1830
            %v1832 = vrot.slane %v1773, %v1831
            %v1833 = vlaneseq
            %v1834 = vshrl.u32 %v1833, 7
            %v1835 = vsub.s32 %v1490, %v1834
            %v1836 = vrot.slane %v1776, %v1835
            %v1837 = vlaneseq
            %v1838 = vshrl.u32 %v1837, 7
            %v1839 = vsub.s32 %v1490, %v1838
            %v1840 = vrot.slane %v1779, %v1839
            %v1841 = vlaneseq
            %v1842 = vshrl.u32 %v1841, 7
            %v1843 = vsub.s32 %v1490, %v1842
            %v1844 = vrot.slane %v1782, %v1843
            %v1845 = vlaneseq
            %v1846 = vshrl.u32 %v1845, 7
            %v1847 = vsub.s32 %v1490, %v1846
            %v1848 = vrot.slane %v1785, %v1847
            %v1849 = vlaneseq
            %v1850 = vshrl.u32 %v1849, 7
            %v1851 = vsub.s32 %v1490, %v1850
            %v1852 = vrot.slane %v1788, %v1851
            %v1853 = vsel %vm1555, %v1796, %v1792
            %v1854 = vsel %vm1557, %v1800, %v1853
            %v1855 = vsel %vm1559, %v1804, %v1854
            %v1856 = vsel %vm1561, %v1808, %v1855
            %v1857 = vsel %vm1563, %v1812, %v1856
            %v1858 = vsel %vm1565, %v1816, %v1857
            %v1859 = vsel %vm1567, %v1820, %v1858
            %v1860 = vsel %vm1555, %v1828, %v1824
            %v1861 = vsel %vm1557, %v1832, %v1860
            %v1862 = vsel %vm1559, %v1836, %v1861
            %v1863 = vsel %vm1561, %v1840, %v1862
            %v1864 = vsel %vm1563, %v1844, %v1863
            %v1865 = vsel %vm1565, %v1848, %v1864
            %v1866 = vsel %vm1567, %v1852, %v1865
            %v1869 = vsel %vm1578, %v1859, 0.0
            %1870 = vadd.xlane.f32.xlu0 %v1869
            %v1871 = vpop.xlane.xlu0 %1870
            %v1872 = vsel %vm1578, %v1866, 0.0
            %1873 = vadd.xlane.f32.xlu0 %v1872
            %v1874 = vpop.xlane.xlu0 %1873
            %v1875 = vadd.f32 %v1723, %v1871
            %v1876 = vadd.f32 %v1724, %v1874
            %v1877 = vmul.f32 %v1590, %v1044
            %v1878 = vmul.f32 %v1592, %v1045
            %v1879 = vsel %vm1578, %v1859, 0
            %1881 = vmatprep.subr.mxu0 0.0
            %1882 = vmatpush1.msra.mxu0 %v1053
            %1883 = vmatprep.subr.mxu0 0.0
            %1884 = vmatpush1.msra.mxu0 0.0
            %1885 = vmatprep.subr.mxu0 0.0
            %1886 = vmatpush1.msra.mxu0 0.0
            %1887 = vmatprep.subr.mxu0 0.0
            %1888 = vmatpush1.msra.mxu0 0.0
            %1889 = vmatprep.subr.mxu0 0.0
            %1890 = vmatpush1.msra.mxu0 0.0
            %1891 = vmatprep.subr.mxu0 0.0
            %1892 = vmatpush1.msra.mxu0 0.0
            %1893 = vmatprep.subr.mxu0 0.0
            %1894 = vmatpush1.msra.mxu0 0.0
            %1895 = vmatprep.subr.mxu0 0.0
            %1896 = vmatpush1.msra.mxu0 0.0
            %1897 = vmatprep.subr.mxu0 0.0
            %1898 = vmatpush1.msra.mxu0 0.0
            %1899 = vmatprep.subr.mxu0 0.0
            %1900 = vmatpush1.msra.mxu0 0.0
            %1901 = vmatprep.subr.mxu0 0.0
            %1902 = vmatpush1.msra.mxu0 0.0
            %1903 = vmatprep.subr.mxu0 0.0
            %1904 = vmatpush1.msra.mxu0 0.0
            %1905 = vmatprep.subr.mxu0 0.0
            %1906 = vmatpush1.msra.mxu0 0.0
            %1907 = vmatprep.subr.mxu0 0.0
            %1908 = vmatpush1.msra.mxu0 0.0
            %1909 = vmatprep.subr.mxu0 0.0
            %1910 = vmatpush1.msra.mxu0 0.0
            %1911 = vmatprep.subr.mxu0 0.0
            %1912 = vmatpush1.msra.mxu0 0.0
            %1913 = vmatprep.subr.mxu0 0.0
            %1914 = vmatpush1.msra.mxu0 0.0
            %1915 = vmatprep.subr.mxu0 0.0
            %1916 = vmatpush1.msra.mxu0 0.0
            %1917 = vmatprep.subr.mxu0 0.0
            %1918 = vmatpush1.msra.mxu0 0.0
            %1919 = vmatprep.subr.mxu0 0.0
            %1920 = vmatpush1.msra.mxu0 0.0
            %1921 = vmatprep.subr.mxu0 0.0
            %1922 = vmatpush1.msra.mxu0 0.0
            %1923 = vmatprep.subr.mxu0 0.0
            %1924 = vmatpush1.msra.mxu0 0.0
            %1925 = vmatprep.subr.mxu0 0.0
            %1926 = vmatpush1.msra.mxu0 0.0
            %1927 = vmatprep.subr.mxu0 0.0
            %1928 = vmatpush1.msra.mxu0 0.0
            %1929 = vmatprep.subr.mxu0 0.0
            %1930 = vmatpush1.msra.mxu0 0.0
            %1931 = vmatprep.subr.mxu0 0.0
            %1932 = vmatpush1.msra.mxu0 0.0
            %1933 = vmatprep.subr.mxu0 0.0
            %1934 = vmatpush1.msra.mxu0 0.0
            %1935 = vmatprep.subr.mxu0 0.0
            %1936 = vmatpush1.msra.mxu0 0.0
            %1937 = vmatprep.subr.mxu0 0.0
            %1938 = vmatpush1.msra.mxu0 0.0
            %1939 = vmatprep.subr.mxu0 0.0
            %1940 = vmatpush1.msra.mxu0 0.0
            %1941 = vmatprep.subr.mxu0 0.0
            %1942 = vmatpush1.msra.mxu0 0.0
            %1943 = vmatprep.subr.mxu0 0.0
            %1944 = vmatpush1.msra.mxu0 0.0
            %1945 = vmatprep.mubr.f32.mxu0 0.0
            %1946 = vmatmul.mubr.f32.gmra.mrb[0].mxu0 %v1879
            %v1947 = vpop.f32.mrb[0].mxu0
            %v1948 = vadd.f32 0.0, %v1947
            %v1949 = vpop.f32.mrb[0].mxu0
            %1950 = vdwg.mxu0
            %v1951 = vsel %vm1578, %v1866, 0
            %1953 = vmatprep.subr.mxu0 0.0
            %1954 = vmatpush1.msra.mxu0 %v1054
            %1955 = vmatprep.subr.mxu0 0.0
            %1956 = vmatpush1.msra.mxu0 0.0
            %1957 = vmatprep.subr.mxu0 0.0
            %1958 = vmatpush1.msra.mxu0 0.0
            %1959 = vmatprep.subr.mxu0 0.0
            %1960 = vmatpush1.msra.mxu0 0.0
            %1961 = vmatprep.subr.mxu0 0.0
            %1962 = vmatpush1.msra.mxu0 0.0
            %1963 = vmatprep.subr.mxu0 0.0
            %1964 = vmatpush1.msra.mxu0 0.0
            %1965 = vmatprep.subr.mxu0 0.0
            %1966 = vmatpush1.msra.mxu0 0.0
            %1967 = vmatprep.subr.mxu0 0.0
            %1968 = vmatpush1.msra.mxu0 0.0
            %1969 = vmatprep.subr.mxu0 0.0
            %1970 = vmatpush1.msra.mxu0 0.0
            %1971 = vmatprep.subr.mxu0 0.0
            %1972 = vmatpush1.msra.mxu0 0.0
            %1973 = vmatprep.subr.mxu0 0.0
            %1974 = vmatpush1.msra.mxu0 0.0
            %1975 = vmatprep.subr.mxu0 0.0
            %1976 = vmatpush1.msra.mxu0 0.0
            %1977 = vmatprep.subr.mxu0 0.0
            %1978 = vmatpush1.msra.mxu0 0.0
            %1979 = vmatprep.subr.mxu0 0.0
            %1980 = vmatpush1.msra.mxu0 0.0
            %1981 = vmatprep.subr.mxu0 0.0
            %1982 = vmatpush1.msra.mxu0 0.0
            %1983 = vmatprep.subr.mxu0 0.0
            %1984 = vmatpush1.msra.mxu0 0.0
            %1985 = vmatprep.subr.mxu0 0.0
            %1986 = vmatpush1.msra.mxu0 0.0
            %1987 = vmatprep.subr.mxu0 0.0
            %1988 = vmatpush1.msra.mxu0 0.0
            %1989 = vmatprep.subr.mxu0 0.0
            %1990 = vmatpush1.msra.mxu0 0.0
            %1991 = vmatprep.subr.mxu0 0.0
            %1992 = vmatpush1.msra.mxu0 0.0
            %1993 = vmatprep.subr.mxu0 0.0
            %1994 = vmatpush1.msra.mxu0 0.0
            %1995 = vmatprep.subr.mxu0 0.0
            %1996 = vmatpush1.msra.mxu0 0.0
            %1997 = vmatprep.subr.mxu0 0.0
            %1998 = vmatpush1.msra.mxu0 0.0
            %1999 = vmatprep.subr.mxu0 0.0
            %2000 = vmatpush1.msra.mxu0 0.0
            %2001 = vmatprep.subr.mxu0 0.0
            %2002 = vmatpush1.msra.mxu0 0.0
            %2003 = vmatprep.subr.mxu0 0.0
            %2004 = vmatpush1.msra.mxu0 0.0
            %2005 = vmatprep.subr.mxu0 0.0
            %2006 = vmatpush1.msra.mxu0 0.0
            %2007 = vmatprep.subr.mxu0 0.0
            %2008 = vmatpush1.msra.mxu0 0.0
            %2009 = vmatprep.subr.mxu0 0.0
            %2010 = vmatpush1.msra.mxu0 0.0
            %2011 = vmatprep.subr.mxu0 0.0
            %2012 = vmatpush1.msra.mxu0 0.0
            %2013 = vmatprep.subr.mxu0 0.0
            %2014 = vmatpush1.msra.mxu0 0.0
            %2015 = vmatprep.subr.mxu0 0.0
            %2016 = vmatpush1.msra.mxu0 0.0
            %2017 = vmatprep.mubr.f32.mxu0 0.0
            %2018 = vmatmul.mubr.f32.gmra.mrb[0].mxu0 %v1951
            %v2019 = vpop.f32.mrb[0].mxu0
            %v2020 = vadd.f32 0.0, %v2019
            %v2021 = vpop.f32.mrb[0].mxu0
            %2022 = vdwg.mxu0
            %v2023 = vadd.f32 %v1877, %v1948
            %v2024 = vadd.f32 %v1878, %v2020
            %v2025 = vmul.f32 %v1590, %v1046
            %v2026 = vmul.f32 %v1592, %v1047
            %v2028 = vunpack.c.l.s4 1966171168
            %v2029 = vunpack.c.0.s8 %v2028
            %v2030 = vlaneseq
            %v2031 = vshrl.u32 %v2030, 7
            %v2032 = vsub.s32 %v2029, %v2031
            %v2033 = vrot.slane %v1059, %v2032
            %v2034 = vcombine.high %v2033, %v2033
            %v2036 = vunpack.c.l.s4 1966171168
            %v2037 = vunpack.c.0.s8 %v2036
            %v2038 = vlaneseq
            %v2039 = vshrl.u32 %v2038, 7
            %v2040 = vsub.s32 %v2037, %v2039
            %v2041 = vrot.slane %v2033, %v2040
            %v2043 = vunpack.c.l.s4 1966171168
            %v2044 = vunpack.c.0.s8 %v2043
            %v2045 = vlaneseq
            %v2046 = vshrl.u32 %v2045, 7
            %v2047 = vsub.s32 %v2044, %v2046
            %v2048 = vrot.slane %v2034, %v2047
            %v2049 = vlaneseq
            %v2050 = vshrl.u32 %v2049, 7
            %v2051 = vsub.s32 0, %v2050
            %v2052 = vrot.slane %v936, %v2051
            %2054 = vbcast.lane.b32.xlu0 %v2052, 256
            %v2055 = vpop.permute.xlu0 %2054
            %v2056 = vlaneseq
            %v2057 = vshrl.u32 %v2056, 7
            %v2058 = vsub.s32 1, %v2057
            %v2059 = vrot.slane %v936, %v2058
            %2061 = vbcast.lane.b32.xlu0 %v2059, 256
            %v2062 = vpop.permute.xlu0 %2061
            %v2063 = vlaneseq
            %v2064 = vshrl.u32 %v2063, 7
            %v2065 = vsub.s32 0, %v2064
            %v2066 = vrot.slane %v2041, %v2065
            %v2067 = vlaneseq
            %v2068 = vshrl.u32 %v2067, 7
            %v2069 = vsub.s32 0, %v2068
            %v2070 = vrot.slane %v2048, %v2069
            %vm2071 = vcmp.eq.s32.totalorder %v2066, %v2055
            %vm2072 = vcmp.eq.s32.totalorder %v2070, %v2062
            %v2073 = vsel %vm2071, %v1859, 0.0
            %v2074 = vsel %vm2072, %v1866, 0.0
            %v2075 = vsel %vm1578, %v2073, 0.0
            %2076 = vadd.xlane.f32.xlu0 %v2075
            %v2077 = vpop.xlane.xlu0 %2076
            %v2078 = vsel %vm1578, %v2074, 0.0
            %2079 = vadd.xlane.f32.xlu0 %v2078
            %v2080 = vpop.xlane.xlu0 %2079
            %v2081 = vadd.f32 %v2025, %v2077
            %v2082 = vadd.f32 %v2026, %v2080
          $region187: #{tpu_custom_call.1} parent=181 // loop_footer
            %s1039 = sadd.s32 1, %s1035
          $region188: #{tpu_custom_call.1} parent=181 // loop_footer_branch
            %1034 = sbr.rel target = $region184
          $region189: #{tpu_custom_call.1} parent=181 // loop_exit
            _
          %v2083 = vrcp.pop %v1042
          %v2084 = vmul.f32 1.0, %v2083
          %v2085 = vrcp.pop %v1043
          %v2086 = vmul.f32 1.0, %v2085
          %v2087 = vmul.f32 %v1044, %v2084
          %v2088 = vmul.f32 %v1045, %v2086
          %vm2089 = vcmask 261120
          %2090 = vst.msk [vmem:[#allocation2] sm:$0xff] %vm2089, %v2087
          %2091 = vst.msk [vmem:[#allocation2 + $0x8] sm:$0xff] %vm2089, %v2088
          %v2092 = vmul.f32 %v1046, %v2084
          %v2093 = vmul.f32 %v1047, %v2086
          %v2094 = vld [vmem:[%s12] sm:$0xff]
          %v2095 = vld [vmem:[%s12 + $0x8] sm:$0xff]
          %v2096 = vld [vmem:[%s12 + $0x10] sm:$0xff]
          %v2097 = vld [vmem:[%s12 + $0x18] sm:$0xff]
          %v2098 = vld [vmem:[%s13] sm:$0xff]
          %v2099 = vld [vmem:[%s13 + $0x8] sm:$0xff]
          %2100 = vmatprep.subr.mxu0 0.0
          %2101 = vmatpush1.msra.mxu0 %v2098
          %2102 = vmatprep.subr.mxu0 0.0
          %2103 = vmatpush1.msra.mxu0 %v2099
          %2104 = vmatprep.subr.mxu0 0.0
          %2105 = vmatpush1.msra.mxu0 0.0
          %2106 = vmatprep.subr.mxu0 0.0
          %2107 = vmatpush1.msra.mxu0 0.0
          %2108 = vmatprep.subr.mxu0 0.0
          %2109 = vmatpush1.msra.mxu0 0.0
          %2110 = vmatprep.subr.mxu0 0.0
          %2111 = vmatpush1.msra.mxu0 0.0
          %2112 = vmatprep.subr.mxu0 0.0
          %2113 = vmatpush1.msra.mxu0 0.0
          %2114 = vmatprep.subr.mxu0 0.0
          %2115 = vmatpush1.msra.mxu0 0.0
          %2116 = vmatprep.subr.mxu0 0.0
          %2117 = vmatpush1.msra.mxu0 0.0
          %2118 = vmatprep.subr.mxu0 0.0
          %2119 = vmatpush1.msra.mxu0 0.0
          %2120 = vmatprep.subr.mxu0 0.0
          %2121 = vmatpush1.msra.mxu0 0.0
          %2122 = vmatprep.subr.mxu0 0.0
          %2123 = vmatpush1.msra.mxu0 0.0
          %2124 = vmatprep.subr.mxu0 0.0
          %2125 = vmatpush1.msra.mxu0 0.0
          %2126 = vmatprep.subr.mxu0 0.0
          %2127 = vmatpush1.msra.mxu0 0.0
          %2128 = vmatprep.subr.mxu0 0.0
          %2129 = vmatpush1.msra.mxu0 0.0
          %2130 = vmatprep.subr.mxu0 0.0
          %2131 = vmatpush1.msra.mxu0 0.0
          %2132 = vmatprep.subr.mxu0 0.0
          %2133 = vmatpush1.msra.mxu0 0.0
          %2134 = vmatprep.subr.mxu0 0.0
          %2135 = vmatpush1.msra.mxu0 0.0
          %2136 = vmatprep.subr.mxu0 0.0
          %2137 = vmatpush1.msra.mxu0 0.0
          %2138 = vmatprep.subr.mxu0 0.0
          %2139 = vmatpush1.msra.mxu0 0.0
          %2140 = vmatprep.subr.mxu0 0.0
          %2141 = vmatpush1.msra.mxu0 0.0
          %2142 = vmatprep.subr.mxu0 0.0
          %2143 = vmatpush1.msra.mxu0 0.0
          %2144 = vmatprep.subr.mxu0 0.0
          %2145 = vmatpush1.msra.mxu0 0.0
          %2146 = vmatprep.subr.mxu0 0.0
          %2147 = vmatpush1.msra.mxu0 0.0
          %2148 = vmatprep.subr.mxu0 0.0
          %2149 = vmatpush1.msra.mxu0 0.0
          %2150 = vmatprep.subr.mxu0 0.0
          %2151 = vmatpush1.msra.mxu0 0.0
          %2152 = vmatprep.subr.mxu0 0.0
          %2153 = vmatpush1.msra.mxu0 0.0
          %2154 = vmatprep.subr.mxu0 0.0
          %2155 = vmatpush1.msra.mxu0 0.0
          %2156 = vmatprep.subr.mxu0 0.0
          %2157 = vmatpush1.msra.mxu0 0.0
          %2158 = vmatprep.subr.mxu0 0.0
          %2159 = vmatpush1.msra.mxu0 0.0
          %2160 = vmatprep.subr.mxu0 0.0
          %2161 = vmatpush1.msra.mxu0 0.0
          %2162 = vmatprep.subr.mxu0 0.0
          %2163 = vmatpush1.msra.mxu0 0.0
          %2164 = vmatprep.mubr.f32.mxu0 0.0
          %2165 = vmatmul.mubr.f32.gmra.mrb[0].mxu0 %v954
          %v2166 = vpop.f32.mrb[0].mxu0
          %v2167 = vadd.f32 0.0, %v2166
          %v2168 = vpop.f32.mrb[0].mxu0
          %2169 = vmatprep.mubr.f32.mxu0 0.0
          %2170 = vmatmul.mubr.f32.gmra.mrb[0].mxu0 %v957
          %v2171 = vpop.f32.mrb[0].mxu0
          %v2172 = vadd.f32 0.0, %v2171
          %v2173 = vpop.f32.mrb[0].mxu0
          %2174 = vdwg.mxu0
          %v2176 = vsel %vm2089, %v2087, 0
          %v2179 = vsel %vm2089, %v2088, 0
          %2181 = vmatprep.subr.mxu0 0.0
          %2182 = vmatpush1.msra.mxu0 %v2094
          %2183 = vmatprep.subr.mxu0 0.0
          %2184 = vmatpush1.msra.mxu0 %v2095
          %2185 = vmatprep.subr.mxu0 0.0
          %2186 = vmatpush1.msra.mxu0 %v2096
          %2187 = vmatprep.subr.mxu0 0.0
          %2188 = vmatpush1.msra.mxu0 %v2097
          %2189 = vmatprep.subr.mxu0 0.0
          %2190 = vmatpush1.msra.mxu0 0.0
          %2191 = vmatprep.subr.mxu0 0.0
          %2192 = vmatpush1.msra.mxu0 0.0
          %2193 = vmatprep.subr.mxu0 0.0
          %2194 = vmatpush1.msra.mxu0 0.0
          %2195 = vmatprep.subr.mxu0 0.0
          %2196 = vmatpush1.msra.mxu0 0.0
          %2197 = vmatprep.subr.mxu0 0.0
          %2198 = vmatpush1.msra.mxu0 0.0
          %2199 = vmatprep.subr.mxu0 0.0
          %2200 = vmatpush1.msra.mxu0 0.0
          %2201 = vmatprep.subr.mxu0 0.0
          %2202 = vmatpush1.msra.mxu0 0.0
          %2203 = vmatprep.subr.mxu0 0.0
          %2204 = vmatpush1.msra.mxu0 0.0
          %2205 = vmatprep.subr.mxu0 0.0
          %2206 = vmatpush1.msra.mxu0 0.0
          %2207 = vmatprep.subr.mxu0 0.0
          %2208 = vmatpush1.msra.mxu0 0.0
          %2209 = vmatprep.subr.mxu0 0.0
          %2210 = vmatpush1.msra.mxu0 0.0
          %2211 = vmatprep.subr.mxu0 0.0
          %2212 = vmatpush1.msra.mxu0 0.0
          %2213 = vmatprep.subr.mxu0 0.0
          %2214 = vmatpush1.msra.mxu0 0.0
          %2215 = vmatprep.subr.mxu0 0.0
          %2216 = vmatpush1.msra.mxu0 0.0
          %2217 = vmatprep.subr.mxu0 0.0
          %2218 = vmatpush1.msra.mxu0 0.0
          %2219 = vmatprep.subr.mxu0 0.0
          %2220 = vmatpush1.msra.mxu0 0.0
          %2221 = vmatprep.subr.mxu0 0.0
          %2222 = vmatpush1.msra.mxu0 0.0
          %2223 = vmatprep.subr.mxu0 0.0
          %2224 = vmatpush1.msra.mxu0 0.0
          %2225 = vmatprep.subr.mxu0 0.0
          %2226 = vmatpush1.msra.mxu0 0.0
          %2227 = vmatprep.subr.mxu0 0.0
          %2228 = vmatpush1.msra.mxu0 0.0
          %2229 = vmatprep.subr.mxu0 0.0
          %2230 = vmatpush1.msra.mxu0 0.0
          %2231 = vmatprep.subr.mxu0 0.0
          %2232 = vmatpush1.msra.mxu0 0.0
          %2233 = vmatprep.subr.mxu0 0.0
          %2234 = vmatpush1.msra.mxu0 0.0
          %2235 = vmatprep.subr.mxu0 0.0
          %2236 = vmatpush1.msra.mxu0 0.0
          %2237 = vmatprep.subr.mxu0 0.0
          %2238 = vmatpush1.msra.mxu0 0.0
          %2239 = vmatprep.subr.mxu0 0.0
          %2240 = vmatpush1.msra.mxu0 0.0
          %2241 = vmatprep.subr.mxu0 0.0
          %2242 = vmatpush1.msra.mxu0 0.0
          %2243 = vmatprep.subr.mxu0 0.0
          %2244 = vmatpush1.msra.mxu0 0.0
          %2245 = vmatprep.mubr.f32.mxu0 0.0
          %2246 = vmatmul.mubr.f32.gmra.mrb[0].mxu0 %v2176
          %v2247 = vpop.f32.mrb[0].mxu0
          %v2248 = vadd.f32 %v2167, %v2247
          %v2249 = vpop.f32.mrb[0].mxu0
          %2250 = vmatprep.mubr.f32.mxu0 0.0
          %2251 = vmatmul.mubr.f32.gmra.mrb[0].mxu0 %v2179
          %v2252 = vpop.f32.mrb[0].mxu0
          %v2253 = vadd.f32 %v2172, %v2252
          %v2254 = vpop.f32.mrb[0].mxu0
          %2255 = vdwg.mxu0
          %v2256 = vld [vmem:[%s14] sm:$0xff]
          %vm2257 = vcmask 64512
          %v2259 = vsel %vm2257, %v941, 0
          %v2262 = vsel %vm2257, %v942, 0
          %2264 = vmatprep.subr.mxu0 0.0
          %2265 = vmatpush1.msra.mxu0 %v2256
          %2266 = vmatprep.subr.mxu0 0.0
          %2267 = vmatpush1.msra.mxu0 0.0
          %2268 = vmatprep.subr.mxu0 0.0
          %2269 = vmatpush1.msra.mxu0 0.0
          %2270 = vmatprep.subr.mxu0 0.0
          %2271 = vmatpush1.msra.mxu0 0.0
          %2272 = vmatprep.subr.mxu0 0.0
          %2273 = vmatpush1.msra.mxu0 0.0
          %2274 = vmatprep.subr.mxu0 0.0
          %2275 = vmatpush1.msra.mxu0 0.0
          %2276 = vmatprep.subr.mxu0 0.0
          %2277 = vmatpush1.msra.mxu0 0.0
          %2278 = vmatprep.subr.mxu0 0.0
          %2279 = vmatpush1.msra.mxu0 0.0
          %2280 = vmatprep.subr.mxu0 0.0
          %2281 = vmatpush1.msra.mxu0 0.0
          %2282 = vmatprep.subr.mxu0 0.0
          %2283 = vmatpush1.msra.mxu0 0.0
          %2284 = vmatprep.subr.mxu0 0.0
          %2285 = vmatpush1.msra.mxu0 0.0
          %2286 = vmatprep.subr.mxu0 0.0
          %2287 = vmatpush1.msra.mxu0 0.0
          %2288 = vmatprep.subr.mxu0 0.0
          %2289 = vmatpush1.msra.mxu0 0.0
          %2290 = vmatprep.subr.mxu0 0.0
          %2291 = vmatpush1.msra.mxu0 0.0
          %2292 = vmatprep.subr.mxu0 0.0
          %2293 = vmatpush1.msra.mxu0 0.0
          %2294 = vmatprep.subr.mxu0 0.0
          %2295 = vmatpush1.msra.mxu0 0.0
          %2296 = vmatprep.subr.mxu0 0.0
          %2297 = vmatpush1.msra.mxu0 0.0
          %2298 = vmatprep.subr.mxu0 0.0
          %2299 = vmatpush1.msra.mxu0 0.0
          %2300 = vmatprep.subr.mxu0 0.0
          %2301 = vmatpush1.msra.mxu0 0.0
          %2302 = vmatprep.subr.mxu0 0.0
          %2303 = vmatpush1.msra.mxu0 0.0
          %2304 = vmatprep.subr.mxu0 0.0
          %2305 = vmatpush1.msra.mxu0 0.0
          %2306 = vmatprep.subr.mxu0 0.0
          %2307 = vmatpush1.msra.mxu0 0.0
          %2308 = vmatprep.subr.mxu0 0.0
          %2309 = vmatpush1.msra.mxu0 0.0
          %2310 = vmatprep.subr.mxu0 0.0
          %2311 = vmatpush1.msra.mxu0 0.0
          %2312 = vmatprep.subr.mxu0 0.0
          %2313 = vmatpush1.msra.mxu0 0.0
          %2314 = vmatprep.subr.mxu0 0.0
          %2315 = vmatpush1.msra.mxu0 0.0
          %2316 = vmatprep.subr.mxu0 0.0
          %2317 = vmatpush1.msra.mxu0 0.0
          %2318 = vmatprep.subr.mxu0 0.0
          %2319 = vmatpush1.msra.mxu0 0.0
          %2320 = vmatprep.subr.mxu0 0.0
          %2321 = vmatpush1.msra.mxu0 0.0
          %2322 = vmatprep.subr.mxu0 0.0
          %2323 = vmatpush1.msra.mxu0 0.0
          %2324 = vmatprep.subr.mxu0 0.0
          %2325 = vmatpush1.msra.mxu0 0.0
          %2326 = vmatprep.subr.mxu0 0.0
          %2327 = vmatpush1.msra.mxu0 0.0
          %2328 = vmatprep.mubr.f32.mxu0 0.0
          %2329 = vmatmul.mubr.f32.gmra.mrb[0].mxu0 %v2259
          %v2330 = vpop.f32.mrb[0].mxu0
          %v2331 = vadd.f32 0.0, %v2330
          %v2332 = vpop.f32.mrb[0].mxu0
          %2333 = vmatprep.mubr.f32.mxu0 0.0
          %2334 = vmatmul.mubr.f32.gmra.mrb[0].mxu0 %v2262
          %v2335 = vpop.f32.mrb[0].mxu0
          %v2336 = vadd.f32 0.0, %v2335
          %v2337 = vpop.f32.mrb[0].mxu0
          %2338 = vdwg.mxu0
          %v2339 = vadd.f32 %v2248, %v2331
          %v2340 = vadd.f32 %v2253, %v2336
          %v2341 = vld [vmem:[#allocation22] sm:$0x3]
          %v2344 = vunpack.c.l.s4 1966171168
          %v2345 = vunpack.c.0.s8 %v2344
          %v2346 = vlaneseq
          %v2347 = vshrl.u32 %v2346, 7
          %v2348 = vsub.s32 %v2345, %v2347
          %v2349 = vrot.slane %v2341, %v2348
          %v2350 = vcombine.high %v2349, %v2349
          %v2352 = vunpack.c.l.s4 1966171168
          %v2353 = vunpack.c.0.s8 %v2352
          %v2354 = vlaneseq
          %v2355 = vshrl.u32 %v2354, 7
          %v2356 = vsub.s32 %v2353, %v2355
          %v2357 = vrot.slane %v2349, %v2356
          %v2359 = vunpack.c.l.s4 1966171168
          %v2360 = vunpack.c.0.s8 %v2359
          %v2361 = vlaneseq
          %v2362 = vshrl.u32 %v2361, 7
          %v2363 = vsub.s32 %v2360, %v2362
          %v2364 = vrot.slane %v2350, %v2363
          %v2365 = vlaneseq
          %v2366 = vshrl.u32 %v2365, 7
          %v2367 = vsub.s32 0, %v2366
          %v2368 = vrot.slane %v2357, %v2367
          %v2369 = vlaneseq
          %v2370 = vshrl.u32 %v2369, 7
          %v2371 = vsub.s32 0, %v2370
          %v2372 = vrot.slane %v2364, %v2371
          %v2375 = vadd.f32 %v2339, %v2368
          %v2376 = vadd.f32 %v2340, %v2372
          %vm2377 = vcmask 23552
          %v2378 = vsel %vm2377, %v2375, -inf
          %2379 = vmax.xlane.f32.xlu0 %v2378
          %v2380 = vpop.xlane.xlu0 %2379
          %v2381 = vsel %vm2377, %v2376, -inf
          %2382 = vmax.xlane.f32.xlu0 %v2381
          %v2383 = vpop.xlane.xlu0 %2382
          %v2384 = vsub.f32 %v2375, %v2380
          %v2385 = vsub.f32 %v2376, %v2383
          %v2386 = vmul.f32 %v2384, 1.442695
          %v2387 = vpow.pop %v2386
          %v2388 = vmul.f32 %v2385, 1.442695
          %v2389 = vpow.pop %v2388
          %v2390 = vsel %vm2377, %v2387, 0.0
          %2391 = vadd.xlane.f32.xlu0 %v2390
          %v2392 = vpop.xlane.xlu0 %2391
          %v2393 = vsel %vm2377, %v2389, 0.0
          %2394 = vadd.xlane.f32.xlu0 %v2393
          %v2395 = vpop.xlane.xlu0 %2394
          %v2396 = vrcp.pop %v2392
          %v2397 = vmul.f32 %v2387, %v2396
          %v2398 = vrcp.pop %v2395
          %v2399 = vmul.f32 %v2389, %v2398
          %vm2400 = vcmp.lt.s32.totalorder %v936, 188
          %2403 = vset.pattern.permute.xlu0 0
          %2404 = vperm.xlu0 %2403, %v2397
          %v2405 = vpop.permute.xlu0 %2404
          %2406 = vset.pattern.permute.xlu0 0
          %2407 = vperm.xlu0 %2406, %v2399
          %v2408 = vpop.permute.xlu0 %2407
          %v2409 = vlaneseq
          %v2410 = vand.u32 %v2409, 127
          %v2411 = vlaneseq
          %v2412 = vshrl.u32 %v2411, 7
          %v2413 = vsub.s32 %v2410, %v2412
          %v2414 = vrot.slane %v2405, %v2413
          %v2415 = vlaneseq
          %v2416 = vshrl.u32 %v2415, 7
          %v2417 = vsub.s32 %v2410, %v2416
          %v2418 = vrot.slane %v2408, %v2417
          %vm2419 = vcmask 1041409
          %v2420 = vsel %vm2419, %v2418, %v2414
          %2422 = vset.pattern.permute.xlu0 1
          %2423 = vperm.xlu0 %2422, %v2397
          %v2424 = vpop.permute.xlu0 %2423
          %2425 = vset.pattern.permute.xlu0 1
          %2426 = vperm.xlu0 %2425, %v2399
          %v2427 = vpop.permute.xlu0 %2426
          %v2428 = vlaneseq
          %v2429 = vshrl.u32 %v2428, 7
          %v2430 = vsub.s32 %v2410, %v2429
          %v2431 = vrot.slane %v2424, %v2430
          %v2432 = vlaneseq
          %v2433 = vshrl.u32 %v2432, 7
          %v2434 = vsub.s32 %v2410, %v2433
          %v2435 = vrot.slane %v2427, %v2434
          %v2436 = vsel %vm2419, %v2435, %v2431
          %v2438 = vsel %vm2400, %v2420, %v2436
          %vm2439 = vcmask 58368
          %2440 = vst.msk [vmem:[#allocation3] sm:$0x3] %vm2439, %v2438
          %v2441 = vmul.f32 %v2397, %v2092
          %v2442 = vmul.f32 %v2399, %v2093
          %2445 = vset.pattern.permute.xlu0 2
          %2446 = vperm.xlu0 %2445, %v2441
          %v2447 = vpop.permute.xlu0 %2446
          %2448 = vset.pattern.permute.xlu0 2
          %2449 = vperm.xlu0 %2448, %v2442
          %v2450 = vpop.permute.xlu0 %2449
          %v2451 = vlaneseq
          %v2452 = vshrl.u32 %v2451, 7
          %v2453 = vsub.s32 %v2410, %v2452
          %v2454 = vrot.slane %v2447, %v2453
          %v2455 = vlaneseq
          %v2456 = vshrl.u32 %v2455, 7
          %v2457 = vsub.s32 %v2410, %v2456
          %v2458 = vrot.slane %v2450, %v2457
          %v2459 = vsel %vm2419, %v2458, %v2454
          %2461 = vst.msk [vmem:[#allocation4] sm:$0x3] %vm2439, %v2459
          %2462 = vst.msk [vmem:[#allocation5] sm:$0x3] %vm2439, -1e+30
          %2463 = vst.msk [vmem:[#allocation6] sm:$0x3] %vm2439, 0.0
          %2464 = vst.msk [vmem:[#allocation7] sm:$0x3] %vm2439, -1e+30
        $region182: #{tpu_custom_call.1} parent=129 // pred_fallthru
          _
        %v2465 = vld [vmem:[#allocation2] sm:$0xff]
        %v2466 = vld [vmem:[#allocation2 + $0x8] sm:$0xff]
        %v2467 = vld [vmem:[%s843] sm:$0xff]
        %v2468 = vld [vmem:[%s843 + $0x8] sm:$0xff]
        %v2469 = vld [vmem:[%s851] sm:$0xff]
        %v2470 = vld [vmem:[%s851 + $0x8] sm:$0xff]
        %v2471 = vld [vmem:[%s851 + $0x10] sm:$0xff]
        %v2472 = vld [vmem:[%s851 + $0x18] sm:$0xff]
        %vm2473 = vcmask 261120
        %v2475 = vsel %vm2473, %v2465, 0
        %v2478 = vsel %vm2473, %v2466, 0
        %2480 = vmatprep.subr.mxu0 0.0
        %2481 = vmatpush1.msra.mxu0 %v2469
        %2482 = vmatprep.subr.mxu0 0.0
        %2483 = vmatpush1.msra.mxu0 %v2470
        %2484 = vmatprep.subr.mxu0 0.0
        %2485 = vmatpush1.msra.mxu0 %v2471
        %2486 = vmatprep.subr.mxu0 0.0
        %2487 = vmatpush1.msra.mxu0 %v2472
        %2488 = vmatprep.subr.mxu0 0.0
        %2489 = vmatpush1.msra.mxu0 0.0
        %2490 = vmatprep.subr.mxu0 0.0
        %2491 = vmatpush1.msra.mxu0 0.0
        %2492 = vmatprep.subr.mxu0 0.0
        %2493 = vmatpush1.msra.mxu0 0.0
        %2494 = vmatprep.subr.mxu0 0.0
        %2495 = vmatpush1.msra.mxu0 0.0
        %2496 = vmatprep.subr.mxu0 0.0
        %2497 = vmatpush1.msra.mxu0 0.0
        %2498 = vmatprep.subr.mxu0 0.0
        %2499 = vmatpush1.msra.mxu0 0.0
        %2500 = vmatprep.subr.mxu0 0.0
        %2501 = vmatpush1.msra.mxu0 0.0
        %2502 = vmatprep.subr.mxu0 0.0
        %2503 = vmatpush1.msra.mxu0 0.0
        %2504 = vmatprep.subr.mxu0 0.0
        %2505 = vmatpush1.msra.mxu0 0.0
        %2506 = vmatprep.subr.mxu0 0.0
        %2507 = vmatpush1.msra.mxu0 0.0
        %2508 = vmatprep.subr.mxu0 0.0
        %2509 = vmatpush1.msra.mxu0 0.0
        %2510 = vmatprep.subr.mxu0 0.0
        %2511 = vmatpush1.msra.mxu0 0.0
        %2512 = vmatprep.subr.mxu0 0.0
        %2513 = vmatpush1.msra.mxu0 0.0
        %2514 = vmatprep.subr.mxu0 0.0
        %2515 = vmatpush1.msra.mxu0 0.0
        %2516 = vmatprep.subr.mxu0 0.0
        %2517 = vmatpush1.msra.mxu0 0.0
        %2518 = vmatprep.subr.mxu0 0.0
        %2519 = vmatpush1.msra.mxu0 0.0
        %2520 = vmatprep.subr.mxu0 0.0
        %2521 = vmatpush1.msra.mxu0 0.0
        %2522 = vmatprep.subr.mxu0 0.0
        %2523 = vmatpush1.msra.mxu0 0.0
        %2524 = vmatprep.subr.mxu0 0.0
        %2525 = vmatpush1.msra.mxu0 0.0
        %2526 = vmatprep.subr.mxu0 0.0
        %2527 = vmatpush1.msra.mxu0 0.0
        %2528 = vmatprep.subr.mxu0 0.0
        %2529 = vmatpush1.msra.mxu0 0.0
        %2530 = vmatprep.subr.mxu0 0.0
        %2531 = vmatpush1.msra.mxu0 0.0
        %2532 = vmatprep.subr.mxu0 0.0
        %2533 = vmatpush1.msra.mxu0 0.0
        %2534 = vmatprep.subr.mxu0 0.0
        %2535 = vmatpush1.msra.mxu0 0.0
        %2536 = vmatprep.subr.mxu0 0.0
        %2537 = vmatpush1.msra.mxu0 0.0
        %2538 = vmatprep.subr.mxu0 0.0
        %2539 = vmatpush1.msra.mxu0 0.0
        %2540 = vmatprep.subr.mxu0 0.0
        %2541 = vmatpush1.msra.mxu0 0.0
        %2542 = vmatprep.subr.mxu0 0.0
        %2543 = vmatpush1.msra.mxu0 0.0
        %2544 = vmatprep.mubr.f32.mxu0 0.0
        %2545 = vmatmul.mubr.f32.gmra.mrb[0].mxu0 %v2475
        %v2546 = vpop.f32.mrb[0].mxu0
        %v2547 = vadd.f32 0.0, %v2546
        %v2548 = vpop.f32.mrb[0].mxu0
        %2549 = vmatprep.mubr.f32.mxu0 0.0
        %2550 = vmatmul.mubr.f32.gmra.mrb[0].mxu0 %v2478
        %v2551 = vpop.f32.mrb[0].mxu0
        %v2552 = vadd.f32 0.0, %v2551
        %v2553 = vpop.f32.mrb[0].mxu0
        %2554 = vdwg.mxu0
        %vm2555 = vcmask 130048
        %v2557 = vsel %vm2555, %v934, 0
        %v2560 = vsel %vm2555, %v935, 0
        %2562 = vmatprep.subr.mxu0 0.0
        %2563 = vmatpush1.msra.mxu0 %v2467
        %2564 = vmatprep.subr.mxu0 0.0
        %2565 = vmatpush1.msra.mxu0 %v2468
        %2566 = vmatprep.subr.mxu0 0.0
        %2567 = vmatpush1.msra.mxu0 0.0
        %2568 = vmatprep.subr.mxu0 0.0
        %2569 = vmatpush1.msra.mxu0 0.0
        %2570 = vmatprep.subr.mxu0 0.0
        %2571 = vmatpush1.msra.mxu0 0.0
        %2572 = vmatprep.subr.mxu0 0.0
        %2573 = vmatpush1.msra.mxu0 0.0
        %2574 = vmatprep.subr.mxu0 0.0
        %2575 = vmatpush1.msra.mxu0 0.0
        %2576 = vmatprep.subr.mxu0 0.0
        %2577 = vmatpush1.msra.mxu0 0.0
        %2578 = vmatprep.subr.mxu0 0.0
        %2579 = vmatpush1.msra.mxu0 0.0
        %2580 = vmatprep.subr.mxu0 0.0
        %2581 = vmatpush1.msra.mxu0 0.0
        %2582 = vmatprep.subr.mxu0 0.0
        %2583 = vmatpush1.msra.mxu0 0.0
        %2584 = vmatprep.subr.mxu0 0.0
        %2585 = vmatpush1.msra.mxu0 0.0
        %2586 = vmatprep.subr.mxu0 0.0
        %2587 = vmatpush1.msra.mxu0 0.0
        %2588 = vmatprep.subr.mxu0 0.0
        %2589 = vmatpush1.msra.mxu0 0.0
        %2590 = vmatprep.subr.mxu0 0.0
        %2591 = vmatpush1.msra.mxu0 0.0
        %2592 = vmatprep.subr.mxu0 0.0
        %2593 = vmatpush1.msra.mxu0 0.0
        %2594 = vmatprep.subr.mxu0 0.0
        %2595 = vmatpush1.msra.mxu0 0.0
        %2596 = vmatprep.subr.mxu0 0.0
        %2597 = vmatpush1.msra.mxu0 0.0
        %2598 = vmatprep.subr.mxu0 0.0
        %2599 = vmatpush1.msra.mxu0 0.0
        %2600 = vmatprep.subr.mxu0 0.0
        %2601 = vmatpush1.msra.mxu0 0.0
        %2602 = vmatprep.subr.mxu0 0.0
        %2603 = vmatpush1.msra.mxu0 0.0
        %2604 = vmatprep.subr.mxu0 0.0
        %2605 = vmatpush1.msra.mxu0 0.0
        %2606 = vmatprep.subr.mxu0 0.0
        %2607 = vmatpush1.msra.mxu0 0.0
        %2608 = vmatprep.subr.mxu0 0.0
        %2609 = vmatpush1.msra.mxu0 0.0
        %2610 = vmatprep.subr.mxu0 0.0
        %2611 = vmatpush1.msra.mxu0 0.0
        %2612 = vmatprep.subr.mxu0 0.0
        %2613 = vmatpush1.msra.mxu0 0.0
        %2614 = vmatprep.subr.mxu0 0.0
        %2615 = vmatpush1.msra.mxu0 0.0
        %2616 = vmatprep.subr.mxu0 0.0
        %2617 = vmatpush1.msra.mxu0 0.0
        %2618 = vmatprep.subr.mxu0 0.0
        %2619 = vmatpush1.msra.mxu0 0.0
        %2620 = vmatprep.subr.mxu0 0.0
        %2621 = vmatpush1.msra.mxu0 0.0
        %2622 = vmatprep.subr.mxu0 0.0
        %2623 = vmatpush1.msra.mxu0 0.0
        %2624 = vmatprep.subr.mxu0 0.0
        %2625 = vmatpush1.msra.mxu0 0.0
        %2626 = vmatprep.mubr.f32.mxu0 0.0
        %2627 = vmatmul.mubr.f32.gmra.mrb[0].mxu0 %v2557
        %v2628 = vpop.f32.mrb[0].mxu0
        %v2629 = vadd.f32 %v2547, %v2628
        %v2630 = vpop.f32.mrb[0].mxu0
        %2631 = vmatprep.mubr.f32.mxu0 0.0
        %2632 = vmatmul.mubr.f32.gmra.mrb[0].mxu0 %v2560
        %v2633 = vpop.f32.mrb[0].mxu0
        %v2634 = vadd.f32 %v2552, %v2633
        %v2635 = vpop.f32.mrb[0].mxu0
        %2636 = vdwg.mxu0
        %v2637 = vld [vmem:[%s933] sm:$0x1]
        %v2639 = vlaneseq
        %v2640 = vshrl.u32 %v2639, 7
        %v2641 = vsub.s32 0, %v2640
        %v2642 = vrot.slane %v2637, %v2641
        %v2644 = vadd.f32 %v2629, %v2642
        %v2645 = vadd.f32 %v2634, %v2642
        %s2646 = smul.u32 %s44, 128
        %v2647 = vlaneseq
        %v2648 = vand.u32 %v2647, 127
        %v2649 = vstv %s2646
        %v2650 = vadd.s32 %v2649, %v2648
        %v2651 = vld [vmem:[#allocation5] sm:$0x3]
        %2652 = vmax.xlane.f32.xlu0 %v2644
        %v2653 = vpop.xlane.xlu0 %2652
        %2654 = vmax.xlane.f32.xlu0 %v2645
        %v2655 = vpop.xlane.xlu0 %2654
        %v2658 = vlaneseq
        %v2659 = vshrl.u32 %v2658, 7
        %v2660 = vsub.s32 %v2648, %v2659
        %v2661 = vrot.slane %v2653, %v2660
        %v2662 = vlaneseq
        %v2663 = vshrl.u32 %v2662, 7
        %v2664 = vsub.s32 %v2648, %v2663
        %v2665 = vrot.slane %v2655, %v2664
        %vm2666 = vcmask 1041409
        %v2667 = vsel %vm2666, %v2665, %v2661
        %v2669 = vmax.f32 %v2651, %v2667
        %v2670 = vsub.f32 %v2651, %v2669
        %v2671 = vmul.f32 %v2670, 1.442695
        %v2672 = vpow.pop %v2671
        %v2673 = vld [vmem:[#allocation6] sm:$0x3]
        %v2674 = vmul.f32 %v2672, %v2673
        %v2675 = vlaneseq
        %v2676 = vshrl.u32 %v2675, 7
        %v2677 = vsub.s32 0, %v2676
        %v2678 = vrot.slane %v2669, %v2677
        %2680 = vbcast.lane.b32.xlu0 %v2678, 256
        %v2681 = vpop.permute.xlu0 %2680
        %v2682 = vlaneseq
        %v2683 = vshrl.u32 %v2682, 7
        %v2684 = vsub.s32 1, %v2683
        %v2685 = vrot.slane %v2669, %v2684
        %2687 = vbcast.lane.b32.xlu0 %v2685, 256
        %v2688 = vpop.permute.xlu0 %2687
        %v2689 = vsub.f32 %v2644, %v2681
        %v2690 = vsub.f32 %v2645, %v2688
        %v2691 = vmul.f32 %v2689, 1.442695
        %v2692 = vpow.pop %v2691
        %v2693 = vmul.f32 %v2690, 1.442695
        %v2694 = vpow.pop %v2693
        %2695 = vadd.xlane.f32.xlu0 %v2692
        %v2696 = vpop.xlane.xlu0 %2695
        %2697 = vadd.xlane.f32.xlu0 %v2694
        %v2698 = vpop.xlane.xlu0 %2697
        %v2701 = vlaneseq
        %v2702 = vshrl.u32 %v2701, 7
        %v2703 = vsub.s32 %v2648, %v2702
        %v2704 = vrot.slane %v2696, %v2703
        %v2705 = vlaneseq
        %v2706 = vshrl.u32 %v2705, 7
        %v2707 = vsub.s32 %v2648, %v2706
        %v2708 = vrot.slane %v2698, %v2707
        %v2709 = vsel %vm2666, %v2708, %v2704
        %v2711 = vadd.f32 %v2674, %v2709
        %vm2712 = vcmask 58368
        %2713 = vst.msk [vmem:[#allocation6] sm:$0x3] %vm2712, %v2711
        %2714 = vst.msk [vmem:[#allocation5] sm:$0x3] %vm2712, %v2669
        %v2715 = vlaneseq
        %v2716 = vshrl.u32 %v2715, 7
        %v2717 = vsub.s32 0, %v2716
        %v2718 = vrot.slane %v936, %v2717
        %2720 = vbcast.lane.b32.xlu0 %v2718, 256
        %v2721 = vpop.permute.xlu0 %2720
        %v2722 = vlaneseq
        %v2723 = vshrl.u32 %v2722, 7
        %v2724 = vsub.s32 1, %v2723
        %v2725 = vrot.slane %v936, %v2724
        %2727 = vbcast.lane.b32.xlu0 %v2725, 256
        %v2728 = vpop.permute.xlu0 %2727
        %vm2729 = vcmp.eq.s32.totalorder %v2650, %v2721
        %vm2730 = vcmp.eq.s32.totalorder %v2650, %v2728
        %vm2731 = vcmp.lt.s32.totalorder %v2650, 192
        %vm2732 = vmand %vm2729, %vm2731
        %vm2733 = vmand %vm2730, %vm2731
        %v2734 = vsel %vm2732, %v2644, -1e+30
        %v2735 = vsel %vm2733, %v2645, -1e+30
        %2736 = vmax.xlane.f32.xlu0 %v2734
        %v2737 = vpop.xlane.xlu0 %2736
        %2738 = vmax.xlane.f32.xlu0 %v2735
        %v2739 = vpop.xlane.xlu0 %2738
        %v2740 = vld [vmem:[#allocation7] sm:$0x3]
        %v2743 = vlaneseq
        %v2744 = vshrl.u32 %v2743, 7
        %v2745 = vsub.s32 %v2648, %v2744
        %v2746 = vrot.slane %v2737, %v2745
        %v2747 = vlaneseq
        %v2748 = vshrl.u32 %v2747, 7
        %v2749 = vsub.s32 %v2648, %v2748
        %v2750 = vrot.slane %v2739, %v2749
        %v2751 = vsel %vm2666, %v2750, %v2746
        %v2753 = vmax.f32 %v2740, %v2751
        %2754 = vst.msk [vmem:[#allocation7] sm:$0x3] %vm2712, %v2753
        %p2755 = scmp.eq.s32.totalorder %s44, 1
        // Predicated region
        $region190: #{tpu_custom_call.1} parent=129 // pred_check
          %p2756 = pneg %p2755
        $region191: #{tpu_custom_call.1} parent=129 // pred_check_branch
          %2758 = sbr.rel (%p2756) target = $region193
        $region192: #{tpu_custom_call.1} parent=129 // pred_region
          %v2759 = vld [vmem:[%s818] sm:$0x3]
          %v2760 = vld [vmem:[#allocation5] sm:$0x3]
          %v2761 = vld [vmem:[#allocation6] sm:$0x3]
          %v2762 = vlog2.pop %v2761
          %v2763 = vmul.f32 %v2762, 0.6931472
          %v2764 = vadd.f32 %v2760, %v2763
          %v2765 = vld [vmem:[#allocation3] sm:$0x3]
          %v2766 = vld [vmem:[#allocation7] sm:$0x3]
          %v2767 = vsub.f32 %v2766, %v2764
          %v2768 = vmul.f32 %v2767, 1.442695
          %v2769 = vpow.pop %v2768
          %v2770 = vmul.f32 %v2765, %v2769
          %v2771 = vld [vmem:[#allocation4] sm:$0x3]
          %v2772 = vadd.f32 %v2770, %v2771
          %vm2773 = vcmp.eq.s32.totalorder %v936, 1
          %v2774 = vsel %vm2773, 1.0, %v2772
          %v2775 = vlog2.pop %v2774
          %v2776 = vmul.f32 %v2775, 0.6931472
          %v2777 = vsub.f32 0.0, %v2776
          %v2778 = vmul.f32 %v2777, %v2759
          %v2779 = vsel %vm2712, %v2778, 0.0
          %2780 = vadd.xlane.f32.xlu0 %v2779
          %v2781 = vpop.xlane.xlu0 %2780
          %v2783 = vlaneseq
          %v2784 = vshrl.u32 %v2783, 7
          %v2785 = vsub.s32 %v2648, %v2784
          %v2786 = vrot.slane %v2781, %v2785
          %vm2788 = vcmask 8192
          %2789 = vst.msk [vmem:[%s930] sm:$0x1] %vm2788, %v2786
        $region193: #{tpu_custom_call.1} parent=129 // pred_fallthru
          _
        %s2790 = sand.u32 %s493, 1
        %s2791 = scalar_lea.sflag [#allocation11], %s2790
        %s2792 = sand.u32 %s493, 1
        %s2793 = scalar_lea.vmem [#allocation26], %s2792
        // Predicated region
        $region194: #{tpu_custom_call.1} parent=129 // pred_check
          %p2794 = pneg %p503
        $region195: #{tpu_custom_call.1} parent=129 // pred_check_branch
          %2796 = sbr.rel (%p2794) target = $region197
        $region196: #{tpu_custom_call.1} parent=129 // pred_region
          %s2798 = ssub.s32 16, 16
          %2799 = vsyncadd %s2791, %s2798
          %s2800 = smul.addr %s43, 16
          %s2801 = scalar_lea.hbm %s19, %s2800
          %s2803 = sshll.u32 %s2793, 4
          %s2804 = int_to_ptr.vmem [resolvable:$true] %s2803
          %2806 = dma.vmem_to_hbm [thread:$0]  %s2804, 16, %s2801, %s2791
        $region197: #{tpu_custom_call.1} parent=129 // pred_fallthru
          _
      $region130: #{tpu_custom_call.1} parent=5 // pred_fallthru
        _
      %p2807 = scmp.le.s32.totalorder 2, %s34
      // Predicated region
      $region198: #{tpu_custom_call.1} parent=5 // pred_check
        %p2808 = pneg %p2807
      $region199: #{tpu_custom_call.1} parent=5 // pred_check_branch
        %2810 = sbr.rel (%p2808) target = $region201
      $region200: #{tpu_custom_call.1} parent=5 // pred_region
        %s2811 = ssub.s32 %s34, 2
        // Predicated region
        $region202: #{tpu_custom_call.1} parent=200 // pred_check
          %p2812 = pneg %p509
        $region203: #{tpu_custom_call.1} parent=200 // pred_check_branch
          %2814 = sbr.rel (%p2812) target = $region205
        $region204: #{tpu_custom_call.1} parent=200 // pred_region
          %s2815 = sand.u32 %s494, 1
          %s2816 = scalar_lea.sflag [#allocation11], %s2815
          %s2817 = sand.u32 %s494, 1
          %s2818 = scalar_lea.vmem [#allocation26], %s2817
          %2819 = dma.done %s2816, 16
        $region205: #{tpu_custom_call.1} parent=200 // pred_fallthru
          _
      $region201: #{tpu_custom_call.1} parent=5 // pred_fallthru
        _
    $region6: #{tpu_custom_call.1} parent=1 // loop_footer
      %s38 = sadd.s32 1, %s34
    $region7: #{tpu_custom_call.1} parent=1 // loop_footer_branch
      %33 = sbr.rel target = $region3
    $region8: #{tpu_custom_call.1} parent=1 // loop_exit
      _
    %2820 = vsyncpa [#allocation10], 1
    %s2821 = scalar_lea.sflag [#allocation10], 1
    %2822 = vsyncpa %s2821, 1
    %2823 = vsyncpa [#allocation13], 1
    %2824 = vsyncpa [#allocation20], 1
    %2825 = vsyncpa [#allocation23], 1
    %2826 = vsyncpa [#allocation11], 1
    %s2827 = scalar_lea.sflag [#allocation11], 1
    %2828 = vsyncpa %s2827, 1

</llo_original>
